<compile_context>
chip_gen: v5e
topology: v5e:2x2
jax: 0.10.0
libtpu: 0.0.40
codegen_flags: <defaults>
</compile_context>

<pallas_src>
import functools

import jax
import jax.numpy as jnp
from jax import lax
from jax.experimental import pallas as pl
from jax.experimental.pallas import tpu as pltpu

# ----------------------------- configuration --------------------------------
IMG = 16          # H = W
CHANNELS = 3      # conv1 in_channels (CLIP uses RGB)
PATCH = 4         # conv1 kernel = stride
WIDTH = 32        # D (hidden width)
NUM_HEADS = 4     # head_dim = 8
LAYERS = 2        # transformer_encoder depth
OUT_DIM = 16      # proj output dim
EPS = 1e-5

NUM_PATCHES = (IMG // PATCH) ** 2     # 16
SEQ = NUM_PATCHES + 1                 # 17 (CLS + patches)
CPP = CHANNELS * PATCH * PATCH        # 48

_VMEM = pl.BlockSpec(memory_space=pltpu.MemorySpace.VMEM)


# ------------------------------ kernel helpers -------------------------------
def _layernorm(x, g, b):
    # PyTorch LayerNorm semantics (biased variance, eps inside rsqrt),
    # one-pass sum / sum-of-squares statistics; max(var, 0) guards f32
    # cancellation for large-mean inputs.
    inv_d = 1.0 / x.shape[-1]
    s1 = jnp.sum(x, axis=-1, keepdims=True)
    s2 = jnp.sum(x * x, axis=-1, keepdims=True)
    mu = s1 * inv_d
    var = jnp.maximum(s2 * inv_d - mu * mu, 0.0)
    return (x - mu) * lax.rsqrt(var + EPS) * g + b


# ------------------------------ fused kernel ---------------------------------
def fused_vit_kernel(
        patches_ref, conv_w_ref, cls_ref, pos_cls_ref, pos_patch_ref,
        ln_pre_g_ref, ln_pre_b_ref,
        ln1_g_ref, ln1_b_ref, wqkv_ref, bqkv_ref, wo_ref, bo_ref,
        ln2_g_ref, ln2_b_ref, w1_ref, b1_ref, w2_ref, b2_ref,
        ln_post_g_ref, ln_post_b_ref, proj_ref,
        o_ref, x_scr,
        *, batch, num_patches, num_heads, num_layers, m_pad):
    B, NP, H = batch, num_patches, num_heads
    D = conv_w_ref.shape[1]
    dh = D // H
    M = B * (NP + 1)                       # real rows = B * (patches + CLS)
    Mp = m_pad                             # padded to a sublane multiple
    scale = 1.0 / float(dh) ** 0.5
    bf16, f32 = jnp.bfloat16, jnp.float32

    # ---- 1) patch embedding (Conv2d w/ stride == kernel == one matmul, f32) --
    tok = jnp.dot(patches_ref[...], conv_w_ref[...],
                  preferred_element_type=f32)                    # (B*NP, D)
    pos_p = pos_patch_ref[...]

    # Build the padded token matrix IN PLACE (no value-level concatenate):
    # rows [b0 patches | b1 patches | CLS_0..CLS_{B-1} | zero pad].
    x_scr[...] = jnp.zeros((Mp, D), f32)                        # pad rows := 0
    for b in range(B):                                          # 16-row aligned
        x_scr[pl.ds(b * NP, NP), :] = tok[b * NP:(b + 1) * NP, :] + pos_p
    x_scr[pl.ds(B * NP, B), :] = jnp.broadcast_to(
        cls_ref[...] + pos_cls_ref[...], (B, D))
    x = x_scr[...]                                               # (Mp, D)

    # ---- 2) ln_pre ----
    x = _layernorm(x, ln_pre_g_ref[...], ln_pre_b_ref[...])

    # ---- block-diagonal additive mask, generated in-kernel from iotas ----
    # Pad rows get their own group id (B) so they attend among themselves:
    # their softmax stays finite and real rows never see pad columns.
    ri = lax.broadcasted_iota(jnp.int32, (Mp, Mp), 0)
    ci = lax.broadcasted_iota(jnp.int32, (Mp, Mp), 1)

    def _bid(idx):
        out = jnp.full(idx.shape, B, jnp.int32)                  # default: pad
        for b in range(B):
            out = jnp.where((idx >= b * NP) & (idx < (b + 1) * NP), b, out)
            out = jnp.where(idx == B * NP + b, b, out)           # CLS of img b
        return out

    attn_bias = jnp.where(_bid(ri) == _bid(ci), 0.0, -1e30).astype(f32)

    # ---- 3) transformer encoder (unrolled; all weights VMEM-resident) ----
    for l in range(num_layers):
        # --- attention branch: x = x + MHA(ln_1(x)) ---
        xn = _layernorm(x, ln1_g_ref[l], ln1_b_ref[l])

        # Single merged qkv projection: (Mp, D) @ (D, 3D), 96-lane output.
        qkv = jnp.dot(xn.astype(bf16), wqkv_ref[l],
                      preferred_element_type=f32) + bqkv_ref[l]   # (Mp, 3D)

        ctx_heads = []
        for h in range(H):                                        # small static
            q_h = (qkv[:, h * dh:(h + 1) * dh] * scale).astype(bf16)
            k_h = qkv[:, D + h * dh:D + (h + 1) * dh].astype(bf16)
            v_h = qkv[:, 2 * D + h * dh:2 * D + (h + 1) * dh].astype(bf16)

            s = jnp.einsum('qd,kd->qk', q_h, k_h,
                           preferred_element_type=f32) + attn_bias
            # No max-subtraction: scores are O(1) here and the -1e30 masked
            # entries underflow exp to exactly 0.
            p = jnp.exp(s)
            p = p * pl.reciprocal(jnp.sum(p, axis=-1, keepdims=True),
                                  approx=True)
            ctx_heads.append(jnp.dot(p.astype(bf16), v_h,
                                     preferred_element_type=f32))  # (Mp, dh)

        # Merged output projection: reassemble heads lane-dense, one K=32 dot.
        ctx = jnp.concatenate(ctx_heads, axis=-1)                  # (Mp, D)
        x = x + (jnp.dot(ctx.astype(bf16), wo_ref[l],
                         preferred_element_type=f32) + bo_ref[l])

        # --- MLP branch: x = x + MLP(ln_2(x)) ; QuickGELU as in CLIP ---
        xn2 = _layernorm(x, ln2_g_ref[l], ln2_b_ref[l])
        h1 = jnp.dot(xn2.astype(bf16), w1_ref[l],
                     preferred_element_type=f32) + b1_ref[l]       # (Mp, 4D)
        h1 = h1 * jax.nn.sigmoid(1.702 * h1)
        x = x + (jnp.dot(h1.astype(bf16), w2_ref[l],
                         preferred_element_type=f32) + b2_ref[l])

    # ---- 4) ln_post on CLS rows (aligned trailing slice) + projection (f32) --
    cls_tok = x[B * NP:B * NP + B, :]                              # (B, D)
    cls_tok = _layernorm(cls_tok, ln_post_g_ref[...], ln_post_b_ref[...])
    o_ref[...] = jnp.dot(cls_tok, proj_ref[...], preferred_element_type=f32)


# ------------------------------ glue / wrapper --------------------------------
def _extract_patches(x):
    # Conv2d(stride==kernel) == non-overlapping patch extraction (im2col).
    # TODO(synk): the 6-D NCHW reshape/transpose stays as XLA glue; only the
    # matmul part of conv1 runs inside the Pallas kernel.
    B, C, Himg, Wimg = x.shape
    p = PATCH
    gh, gw = Himg // p, Wimg // p
    return (x.reshape(B, C, gh, p, gw, p)
             .transpose(0, 2, 4, 1, 3, 5)
             .reshape(B, gh * gw, C * p * p))


def partial_vit_forward(x, params):
    B = x.shape[0]
    NP = (x.shape[2] // PATCH) * (x.shape[3] // PATCH)
    M = B * (NP + 1)
    MP = ((M + 7) // 8) * 8                       # pad fused rows to 8-multiple
    patches = _extract_patches(x).reshape(B * NP, -1)              # (B*NP, CPP)

    # Per-layer matmul weights are shipped as bf16 (MXU operands); biases,
    # LN params, patch-embed and final proj stay f32.
    bf16 = jnp.bfloat16
    args = (patches, params["conv_w"], params["cls"], params["pos_cls"],
            params["pos_patch"],
            params["ln_pre_g"], params["ln_pre_b"],
            params["ln1_g"], params["ln1_b"],
            params["w_qkv"].astype(bf16), params["b_qkv"],
            params["w_o"].astype(bf16), params["b_o"],
            params["ln2_g"], params["ln2_b"],
            params["w_1"].astype(bf16), params["b_1"],
            params["w_2"].astype(bf16), params["b_2"],
            params["ln_post_g"], params["ln_post_b"], params["proj"])

    kernel = functools.partial(fused_vit_kernel, batch=B, num_patches=NP,
                               num_heads=NUM_HEADS, num_layers=LAYERS,
                               m_pad=MP)
    return pl.pallas_call(
        kernel,
        out_shape=jax.ShapeDtypeStruct((B, OUT_DIM), jnp.float32),
        in_specs=[_VMEM] * len(args),
        out_specs=_VMEM,
        scratch_shapes=[pltpu.VMEM((MP, WIDTH), jnp.float32)],
    )(*args)


# ------------------------------ parameter init --------------------------------
def init_params(key):
    D, L = WIDTH, LAYERS
    ks = iter(jax.random.split(key, 64))
    std = 0.02

    def gain(shape):
        return 1.0 + 0.1 * jax.random.normal(next(ks), shape, jnp.float32)

    def small(shape):
        return 0.02 * jax.random.normal(next(ks), shape, jnp.float32)

    # torch conv weight (D, C, p, p) -> matmul weight (C*p*p, D)
    conv_w_t = jax.random.normal(next(ks), (D, CHANNELS, PATCH, PATCH),
                                 jnp.float32) * std
    conv_w = conv_w_t.reshape(D, CPP).T

    cls = jax.random.normal(next(ks), (1, D), jnp.float32) * std
    pos = jax.random.normal(next(ks), (SEQ, D), jnp.float32) * std
    proj = jax.random.normal(next(ks), (D, OUT_DIM), jnp.float32) * std

    params = dict(
        conv_w=conv_w, cls=cls,
        pos_cls=pos[0:1], pos_patch=pos[1:],
        ln_pre_g=gain((1, D)), ln_pre_b=small((1, D)),
        ln_post_g=gain((1, D)), ln_post_b=small((1, D)),
        proj=proj,
    )

    per = {k: [] for k in ("ln1_g", "ln1_b", "w_qkv", "b_qkv", "w_o", "b_o",
                           "ln2_g", "ln2_b", "w_1", "b_1", "w_2", "b_2")}
    for _ in range(L):
        # torch MHA in_proj_weight (3D, D): q|k|v = x @ in_proj_weight.T
        w_in = jax.random.normal(next(ks), (3 * D, D), jnp.float32) * std
        per["w_qkv"].append(w_in.T)                       # (D, 3D)
        per["b_qkv"].append(small((1, 3 * D)))
        # torch out_proj.weight (D, D): y = ctx @ out_proj.weight.T
        w_out = jax.random.normal(next(ks), (D, D), jnp.float32) * std
        per["w_o"].append(w_out.T)                        # (D, D)
        per["b_o"].append(small((1, D)))
        per["ln1_g"].append(gain((1, D))); per["ln1_b"].append(small((1, D)))
        per["ln2_g"].append(gain((1, D))); per["ln2_b"].append(small((1, D)))
        per["w_1"].append((jax.random.normal(next(ks), (4 * D, D),
                                             jnp.float32) * std).T)
        per["b_1"].append(small((1, 4 * D)))
        per["w_2"].append((jax.random.normal(next(ks), (D, 4 * D),
                                             jnp.float32) * std).T)
        per["b_2"].append(small((1, D)))

    params.update({k: jnp.stack(v) for k, v in per.items()})
    return params


# --------------------------- plain-JAX reference ------------------------------
def reference_forward(x, params):
    B = x.shape[0]
    D, Hn, dh = WIDTH, NUM_HEADS, WIDTH // NUM_HEADS
    patches = _extract_patches(x)                                 # (B, NP, CPP)
    tok = patches @ params["conv_w"]                              # (B, NP, D)
    cls = jnp.broadcast_to(params["cls"][None], (B, 1, D))
    seq = jnp.concatenate([cls, tok], axis=1)                     # (B, S, D)
    pos = jnp.concatenate([params["pos_cls"], params["pos_patch"]], axis=0)
    seq = seq + pos[None]

    def ln(v, g, b):
        mu = v.mean(-1, keepdims=True)
        var = ((v - mu) ** 2).mean(-1, keepdims=True)
        return (v - mu) * jax.lax.rsqrt(var + EPS) * g + b

    seq = ln(seq, params["ln_pre_g"], params["ln_pre_b"])
    S = seq.shape[1]
    for l in range(LAYERS):
        xn = ln(seq, params["ln1_g"][l], params["ln1_b"][l])
        qkv = xn @ params["w_qkv"][l] + params["b_qkv"][l]        # (B, S, 3D)
        q, k, v = jnp.split(qkv, 3, axis=-1)

        def heads(t):
            return t.reshape(B, S, Hn, dh).transpose(0, 2, 1, 3)

        q, k, v = heads(q), heads(k), heads(v)
        s = jnp.einsum('bhqe,bhke->bhqk', q, k) / float(dh) ** 0.5
        p = jax.nn.softmax(s, axis=-1)
        ctx = jnp.einsum('bhqk,bhke->bhqe', p, v)
        ctx = ctx.transpose(0, 2, 1, 3).reshape(B, S, D)
        seq = seq + ctx @ params["w_o"][l] + params["b_o"][l]

        xn2 = ln(seq, params["ln2_g"][l], params["ln2_b"][l])
        h1 = xn2 @ params["w_1"][l] + params["b_1"][l]
        h1 = h1 * jax.nn.sigmoid(1.702 * h1)
        seq = seq + h1 @ params["w_2"][l] + params["b_2"][l]
    clsf = ln(seq[:, 0, :], params["ln_post_g"], params["ln_post_b"])
    return clsf @ params["proj"]


# ----------------------------------- main -------------------------------------
if __name__ == "__main__":
    key = jax.random.PRNGKey(0)
    k_params, k_x = jax.random.split(key)

    params = init_params(k_params)
    x = jax.random.normal(k_x, (2, CHANNELS, IMG, IMG), jnp.float32)  # NCHW

    out = jax.jit(partial_vit_forward)(x, params)
    out = jax.block_until_ready(out)

    assert out.shape == (2, OUT_DIM), out.shape
    assert bool(jnp.all(jnp.isfinite(out)))

    ref = jax.block_until_ready(jax.jit(reference_forward)(x, params))
    max_err = float(jnp.max(jnp.abs(out - ref)))
    assert max_err < 5e-3, f"mismatch vs plain-JAX reference: {max_err}"

    print("KERNEL_OK")
</pallas_src>

<mosaic_0001>
module attributes {stable_mosaic.version = 11 : i64} {
  func.func @fused_vit_kernel(%arg0: memref<32x48xf32, #tpu.memory_space<vmem>>, %arg1: memref<48x32xf32, #tpu.memory_space<vmem>>, %arg2: memref<1x32xf32, #tpu.memory_space<vmem>>, %arg3: memref<1x32xf32, #tpu.memory_space<vmem>>, %arg4: memref<16x32xf32, #tpu.memory_space<vmem>>, %arg5: memref<1x32xf32, #tpu.memory_space<vmem>>, %arg6: memref<1x32xf32, #tpu.memory_space<vmem>>, %arg7: memref<2x1x32xf32, #tpu.memory_space<vmem>>, %arg8: memref<2x1x32xf32, #tpu.memory_space<vmem>>, %arg9: memref<2x32x96xbf16, #tpu.memory_space<vmem>>, %arg10: memref<2x1x96xf32, #tpu.memory_space<vmem>>, %arg11: memref<2x32x32xbf16, #tpu.memory_space<vmem>>, %arg12: memref<2x1x32xf32, #tpu.memory_space<vmem>>, %arg13: memref<2x1x32xf32, #tpu.memory_space<vmem>>, %arg14: memref<2x1x32xf32, #tpu.memory_space<vmem>>, %arg15: memref<2x32x128xbf16, #tpu.memory_space<vmem>>, %arg16: memref<2x1x128xf32, #tpu.memory_space<vmem>>, %arg17: memref<2x128x32xbf16, #tpu.memory_space<vmem>>, %arg18: memref<2x1x32xf32, #tpu.memory_space<vmem>>, %arg19: memref<1x32xf32, #tpu.memory_space<vmem>>, %arg20: memref<1x32xf32, #tpu.memory_space<vmem>>, %arg21: memref<32x16xf32, #tpu.memory_space<vmem>>, %arg22: memref<2x16xf32, #tpu.memory_space<vmem>>, %arg23: memref<40x32xf32, #tpu.memory_space<vmem>>) attributes {dimension_semantics = [], scalar_prefetch = 0 : i64, scratch_operands = 1 : i64, tpu.core_type = #tpu.core_type<tc>} {
    %c0 = arith.constant 0 : index
    %c0_0 = arith.constant 0 : index
    %0 = vector.load %arg0[%c0, %c0_0] : memref<32x48xf32, #tpu.memory_space<vmem>>, vector<32x48xf32>
    %c0_1 = arith.constant 0 : index
    %c0_2 = arith.constant 0 : index
    %1 = vector.load %arg1[%c0_1, %c0_2] : memref<48x32xf32, #tpu.memory_space<vmem>>, vector<48x32xf32>
    %cst = arith.constant dense<0.000000e+00> : vector<32x32xf32>
    %2 = tpu.matmul %0, %1, %cst {dimension_numbers = #tpu.dot_dimension_numbers<[1], [0], [0], [1], [0, 0, 1, 1], [], []>} : vector<32x48xf32>, vector<48x32xf32>, vector<32x32xf32> -> vector<32x32xf32>
    %c0_3 = arith.constant 0 : index
    %c0_4 = arith.constant 0 : index
    %3 = vector.load %arg4[%c0_3, %c0_4] : memref<16x32xf32, #tpu.memory_space<vmem>>, vector<16x32xf32>
    %cst_5 = arith.constant 0.000000e+00 : f32
    %4 = vector.broadcast %cst_5 : f32 to vector<40x32xf32>
    %c0_6 = arith.constant 0 : index
    %c0_7 = arith.constant 0 : index
    %5 = vector.load %arg23[%c0_6, %c0_7] : memref<40x32xf32, #tpu.memory_space<vmem>>, vector<40x32xf32>
    tpu.vector_store %arg23[%c0_6, %c0_7], %4 {strides = array<i32>} : memref<40x32xf32, #tpu.memory_space<vmem>>, vector<40x32xf32>,
    %6 = vector.extract_strided_slice %2 {offsets = [0, 0], sizes = [16, 32], strides = [1, 1]} : vector<32x32xf32> to vector<16x32xf32>
    %7 = arith.addf %6, %3 : vector<16x32xf32>
    %c0_8 = arith.constant 0 : index
    %c0_9 = arith.constant 0 : index
    %8 = vector.load %arg23[%c0_8, %c0_9] : memref<40x32xf32, #tpu.memory_space<vmem>>, vector<16x32xf32>
    tpu.vector_store %arg23[%c0_8, %c0_9], %7 {strides = array<i32>} : memref<40x32xf32, #tpu.memory_space<vmem>>, vector<16x32xf32>,
    %9 = vector.extract_strided_slice %2 {offsets = [16, 0], sizes = [16, 32], strides = [1, 1]} : vector<32x32xf32> to vector<16x32xf32>
    %10 = arith.addf %9, %3 : vector<16x32xf32>
    %c16 = arith.constant 16 : index
    %c0_10 = arith.constant 0 : index
    %11 = vector.load %arg23[%c16, %c0_10] : memref<40x32xf32, #tpu.memory_space<vmem>>, vector<16x32xf32>
    tpu.vector_store %arg23[%c16, %c0_10], %10 {strides = array<i32>} : memref<40x32xf32, #tpu.memory_space<vmem>>, vector<16x32xf32>,
    %c0_11 = arith.constant 0 : index
    %c0_12 = arith.constant 0 : index
    %12 = vector.load %arg2[%c0_11, %c0_12] : memref<1x32xf32, #tpu.memory_space<vmem>>, vector<1x32xf32>
    %c0_13 = arith.constant 0 : index
    %c0_14 = arith.constant 0 : index
    %13 = vector.load %arg3[%c0_13, %c0_14] : memref<1x32xf32, #tpu.memory_space<vmem>>, vector<1x32xf32>
    %14 = arith.addf %12, %13 : vector<1x32xf32>
    %15 = vector.shape_cast %14 : vector<1x32xf32> to vector<1x32xf32>
    %16 = vector.broadcast %15 : vector<1x32xf32> to vector<2x32xf32>
    %c32 = arith.constant 32 : index
    %c0_15 = arith.constant 0 : index
    %17 = vector.load %arg23[%c32, %c0_15] : memref<40x32xf32, #tpu.memory_space<vmem>>, vector<2x32xf32>
    tpu.vector_store %arg23[%c32, %c0_15], %16 {strides = array<i32>} : memref<40x32xf32, #tpu.memory_space<vmem>>, vector<2x32xf32>,
    %c0_16 = arith.constant 0 : index
    %c0_17 = arith.constant 0 : index
    %18 = vector.load %arg23[%c0_16, %c0_17] : memref<40x32xf32, #tpu.memory_space<vmem>>, vector<40x32xf32>
    %c0_18 = arith.constant 0 : index
    %c0_19 = arith.constant 0 : index
    %19 = vector.load %arg5[%c0_18, %c0_19] : memref<1x32xf32, #tpu.memory_space<vmem>>, vector<1x32xf32>
    %c0_20 = arith.constant 0 : index
    %c0_21 = arith.constant 0 : index
    %20 = vector.load %arg6[%c0_20, %c0_21] : memref<1x32xf32, #tpu.memory_space<vmem>>, vector<1x32xf32>
    %cst_22 = arith.constant dense<0.000000e+00> : vector<40xf32>
    %21 = vector.multi_reduction <add>, %18, %cst_22 [1] : vector<40x32xf32> to vector<40xf32>
    %22 = vector.shape_cast %21 : vector<40xf32> to vector<40x1xf32>
    %23 = arith.mulf %18, %18 : vector<40x32xf32>
    %cst_23 = arith.constant dense<0.000000e+00> : vector<40xf32>
    %24 = vector.multi_reduction <add>, %23, %cst_23 [1] : vector<40x32xf32> to vector<40xf32>
    %25 = vector.shape_cast %24 : vector<40xf32> to vector<40x1xf32>
    %cst_24 = arith.constant 3.125000e-02 : f32
    %26 = vector.broadcast %cst_24 : f32 to vector<40x1xf32>
    %27 = arith.mulf %22, %26 : vector<40x1xf32>
    %cst_25 = arith.constant 3.125000e-02 : f32
    %28 = vector.broadcast %cst_25 : f32 to vector<40x1xf32>
    %29 = arith.mulf %25, %28 : vector<40x1xf32>
    %30 = arith.mulf %27, %27 : vector<40x1xf32>
    %31 = arith.subf %29, %30 : vector<40x1xf32>
    %cst_26 = arith.constant 0.000000e+00 : f32
    %32 = vector.broadcast %cst_26 : f32 to vector<40x1xf32>
    %33 = arith.maximumf %31, %32 : vector<40x1xf32>
    %34 = vector.broadcast %27 : vector<40x1xf32> to vector<40x32xf32>
    %35 = arith.subf %18, %34 : vector<40x32xf32>
    %cst_27 = arith.constant 9.99999974E-6 : f32
    %36 = vector.broadcast %cst_27 : f32 to vector<40x1xf32>
    %37 = arith.addf %33, %36 : vector<40x1xf32>
    %38 = math.rsqrt %37 : vector<40x1xf32>
    %39 = vector.broadcast %38 : vector<40x1xf32> to vector<40x32xf32>
    %40 = arith.mulf %35, %39 : vector<40x32xf32>
    %41 = vector.broadcast %19 : vector<1x32xf32> to vector<40x32xf32>
    %42 = arith.mulf %40, %41 : vector<40x32xf32>
    %43 = vector.broadcast %20 : vector<1x32xf32> to vector<40x32xf32>
    %44 = arith.addf %42, %43 : vector<40x32xf32>
    %45 = tpu.iota {dimensions = array<i32: 0>} : vector<40x40xi32>
    %46 = tpu.iota {dimensions = array<i32: 1>} : vector<40x40xi32>
    %c2_i32 = arith.constant 2 : i32
    %47 = vector.broadcast %c2_i32 : i32 to vector<40x40xi32>
    %c0_i32 = arith.constant 0 : i32
    %48 = vector.broadcast %c0_i32 : i32 to vector<40x40xi32>
    %49 = arith.cmpi sge, %45, %48 : vector<40x40xi32>
    %c16_i32 = arith.constant 16 : i32
    %50 = vector.broadcast %c16_i32 : i32 to vector<40x40xi32>
    %51 = arith.cmpi slt, %45, %50 : vector<40x40xi32>
    %52 = arith.andi %49, %51 : vector<40x40xi1>
    %c0_i32_28 = arith.constant 0 : i32
    %53 = vector.broadcast %c0_i32_28 : i32 to vector<40x40xi32>
    %54 = arith.select %52, %53, %47 : vector<40x40xi1>, vector<40x40xi32>
    %c32_i32 = arith.constant 32 : i32
    %55 = vector.broadcast %c32_i32 : i32 to vector<40x40xi32>
    %56 = arith.cmpi eq, %45, %55 : vector<40x40xi32>
    %c0_i32_29 = arith.constant 0 : i32
    %57 = vector.broadcast %c0_i32_29 : i32 to vector<40x40xi32>
    %58 = arith.select %56, %57, %54 : vector<40x40xi1>, vector<40x40xi32>
    %c16_i32_30 = arith.constant 16 : i32
    %59 = vector.broadcast %c16_i32_30 : i32 to vector<40x40xi32>
    %60 = arith.cmpi sge, %45, %59 : vector<40x40xi32>
    %c32_i32_31 = arith.constant 32 : i32
    %61 = vector.broadcast %c32_i32_31 : i32 to vector<40x40xi32>
    %62 = arith.cmpi slt, %45, %61 : vector<40x40xi32>
    %63 = arith.andi %60, %62 : vector<40x40xi1>
    %c1_i32 = arith.constant 1 : i32
    %64 = vector.broadcast %c1_i32 : i32 to vector<40x40xi32>
    %65 = arith.select %63, %64, %58 : vector<40x40xi1>, vector<40x40xi32>
    %c33_i32 = arith.constant 33 : i32
    %66 = vector.broadcast %c33_i32 : i32 to vector<40x40xi32>
    %67 = arith.cmpi eq, %45, %66 : vector<40x40xi32>
    %c1_i32_32 = arith.constant 1 : i32
    %68 = vector.broadcast %c1_i32_32 : i32 to vector<40x40xi32>
    %69 = arith.select %67, %68, %65 : vector<40x40xi1>, vector<40x40xi32>
    %c2_i32_33 = arith.constant 2 : i32
    %70 = vector.broadcast %c2_i32_33 : i32 to vector<40x40xi32>
    %c0_i32_34 = arith.constant 0 : i32
    %71 = vector.broadcast %c0_i32_34 : i32 to vector<40x40xi32>
    %72 = arith.cmpi sge, %46, %71 : vector<40x40xi32>
    %c16_i32_35 = arith.constant 16 : i32
    %73 = vector.broadcast %c16_i32_35 : i32 to vector<40x40xi32>
    %74 = arith.cmpi slt, %46, %73 : vector<40x40xi32>
    %75 = arith.andi %72, %74 : vector<40x40xi1>
    %c0_i32_36 = arith.constant 0 : i32
    %76 = vector.broadcast %c0_i32_36 : i32 to vector<40x40xi32>
    %77 = arith.select %75, %76, %70 : vector<40x40xi1>, vector<40x40xi32>
    %c32_i32_37 = arith.constant 32 : i32
    %78 = vector.broadcast %c32_i32_37 : i32 to vector<40x40xi32>
    %79 = arith.cmpi eq, %46, %78 : vector<40x40xi32>
    %c0_i32_38 = arith.constant 0 : i32
    %80 = vector.broadcast %c0_i32_38 : i32 to vector<40x40xi32>
    %81 = arith.select %79, %80, %77 : vector<40x40xi1>, vector<40x40xi32>
    %c16_i32_39 = arith.constant 16 : i32
    %82 = vector.broadcast %c16_i32_39 : i32 to vector<40x40xi32>
    %83 = arith.cmpi sge, %46, %82 : vector<40x40xi32>
    %c32_i32_40 = arith.constant 32 : i32
    %84 = vector.broadcast %c32_i32_40 : i32 to vector<40x40xi32>
    %85 = arith.cmpi slt, %46, %84 : vector<40x40xi32>
    %86 = arith.andi %83, %85 : vector<40x40xi1>
    %c1_i32_41 = arith.constant 1 : i32
    %87 = vector.broadcast %c1_i32_41 : i32 to vector<40x40xi32>
    %88 = arith.select %86, %87, %81 : vector<40x40xi1>, vector<40x40xi32>
    %c33_i32_42 = arith.constant 33 : i32
    %89 = vector.broadcast %c33_i32_42 : i32 to vector<40x40xi32>
    %90 = arith.cmpi eq, %46, %89 : vector<40x40xi32>
    %c1_i32_43 = arith.constant 1 : i32
    %91 = vector.broadcast %c1_i32_43 : i32 to vector<40x40xi32>
    %92 = arith.select %90, %91, %88 : vector<40x40xi1>, vector<40x40xi32>
    %93 = arith.cmpi eq, %69, %92 : vector<40x40xi32>
    %cst_44 = arith.constant 0.000000e+00 : f32
    %cst_45 = arith.constant -1.000000e+30 : f32
    %94 = vector.broadcast %cst_44 : f32 to vector<40x40xf32>
    %95 = vector.broadcast %cst_45 : f32 to vector<40x40xf32>
    %96 = arith.select %93, %94, %95 : vector<40x40xi1>, vector<40x40xf32>
    %c0_46 = arith.constant 0 : index
    %c0_47 = arith.constant 0 : index
    %c0_48 = arith.constant 0 : index
    %97 = vector.load %arg7[%c0_46, %c0_47, %c0_48] : memref<2x1x32xf32, #tpu.memory_space<vmem>>, vector<1x1x32xf32>
    %98 = vector.shape_cast %97 : vector<1x1x32xf32> to vector<1x32xf32>
    %c0_49 = arith.constant 0 : index
    %c0_50 = arith.constant 0 : index
    %c0_51 = arith.constant 0 : index
    %99 = vector.load %arg8[%c0_49, %c0_50, %c0_51] : memref<2x1x32xf32, #tpu.memory_space<vmem>>, vector<1x1x32xf32>
    %100 = vector.shape_cast %99 : vector<1x1x32xf32> to vector<1x32xf32>
    %cst_52 = arith.constant dense<0.000000e+00> : vector<40xf32>
    %101 = vector.multi_reduction <add>, %44, %cst_52 [1] : vector<40x32xf32> to vector<40xf32>
    %102 = vector.shape_cast %101 : vector<40xf32> to vector<40x1xf32>
    %103 = arith.mulf %44, %44 : vector<40x32xf32>
    %cst_53 = arith.constant dense<0.000000e+00> : vector<40xf32>
    %104 = vector.multi_reduction <add>, %103, %cst_53 [1] : vector<40x32xf32> to vector<40xf32>
    %105 = vector.shape_cast %104 : vector<40xf32> to vector<40x1xf32>
    %cst_54 = arith.constant 3.125000e-02 : f32
    %106 = vector.broadcast %cst_54 : f32 to vector<40x1xf32>
    %107 = arith.mulf %102, %106 : vector<40x1xf32>
    %cst_55 = arith.constant 3.125000e-02 : f32
    %108 = vector.broadcast %cst_55 : f32 to vector<40x1xf32>
    %109 = arith.mulf %105, %108 : vector<40x1xf32>
    %110 = arith.mulf %107, %107 : vector<40x1xf32>
    %111 = arith.subf %109, %110 : vector<40x1xf32>
    %cst_56 = arith.constant 0.000000e+00 : f32
    %112 = vector.broadcast %cst_56 : f32 to vector<40x1xf32>
    %113 = arith.maximumf %111, %112 : vector<40x1xf32>
    %114 = vector.broadcast %107 : vector<40x1xf32> to vector<40x32xf32>
    %115 = arith.subf %44, %114 : vector<40x32xf32>
    %cst_57 = arith.constant 9.99999974E-6 : f32
    %116 = vector.broadcast %cst_57 : f32 to vector<40x1xf32>
    %117 = arith.addf %113, %116 : vector<40x1xf32>
    %118 = math.rsqrt %117 : vector<40x1xf32>
    %119 = vector.broadcast %118 : vector<40x1xf32> to vector<40x32xf32>
    %120 = arith.mulf %115, %119 : vector<40x32xf32>
    %121 = vector.broadcast %98 : vector<1x32xf32> to vector<40x32xf32>
    %122 = arith.mulf %120, %121 : vector<40x32xf32>
    %123 = vector.broadcast %100 : vector<1x32xf32> to vector<40x32xf32>
    %124 = arith.addf %122, %123 : vector<40x32xf32>
    %125 = arith.truncf %124 : vector<40x32xf32> to vector<40x32xbf16>
    %c0_58 = arith.constant 0 : index
    %c0_59 = arith.constant 0 : index
    %c0_60 = arith.constant 0 : index
    %126 = vector.load %arg9[%c0_58, %c0_59, %c0_60] : memref<2x32x96xbf16, #tpu.memory_space<vmem>>, vector<1x32x96xbf16>
    %127 = vector.shape_cast %126 : vector<1x32x96xbf16> to vector<32x96xbf16>
    %cst_61 = arith.constant dense<0.000000e+00> : vector<40x96xf32>
    %128 = tpu.matmul %125, %127, %cst_61 {dimension_numbers = #tpu.dot_dimension_numbers<[1], [0], [0], [1], [0, 0, 1, 1], [], []>} : vector<40x32xbf16>, vector<32x96xbf16>, vector<40x96xf32> -> vector<40x96xf32>
    %c0_62 = arith.constant 0 : index
    %c0_63 = arith.constant 0 : index
    %c0_64 = arith.constant 0 : index
    %129 = vector.load %arg10[%c0_62, %c0_63, %c0_64] : memref<2x1x96xf32, #tpu.memory_space<vmem>>, vector<1x1x96xf32>
    %130 = vector.shape_cast %129 : vector<1x1x96xf32> to vector<1x96xf32>
    %131 = vector.broadcast %130 : vector<1x96xf32> to vector<40x96xf32>
    %132 = arith.addf %128, %131 : vector<40x96xf32>
    %133 = vector.extract_strided_slice %132 {offsets = [0, 0], sizes = [40, 8], strides = [1, 1]} : vector<40x96xf32> to vector<40x8xf32>
    %cst_65 = arith.constant 0.353553385 : f32
    %134 = vector.broadcast %cst_65 : f32 to vector<40x8xf32>
    %135 = arith.mulf %133, %134 : vector<40x8xf32>
    %136 = arith.truncf %135 : vector<40x8xf32> to vector<40x8xbf16>
    %137 = vector.extract_strided_slice %132 {offsets = [0, 32], sizes = [40, 8], strides = [1, 1]} : vector<40x96xf32> to vector<40x8xf32>
    %138 = arith.truncf %137 : vector<40x8xf32> to vector<40x8xbf16>
    %139 = vector.extract_strided_slice %132 {offsets = [0, 64], sizes = [40, 8], strides = [1, 1]} : vector<40x96xf32> to vector<40x8xf32>
    %140 = arith.truncf %139 : vector<40x8xf32> to vector<40x8xbf16>
    "tpu.trace_start"() <{level = 10 : i32, message = "qd,kd->qk"}> : () -> ()
    %cst_66 = arith.constant dense<0.000000e+00> : vector<40x40xf32>
    %141 = tpu.matmul %136, %138, %cst_66 {dimension_numbers = #tpu.dot_dimension_numbers<[1], [1], [0], [0], [0, 0, 1, 0], [], []>} : vector<40x8xbf16>, vector<40x8xbf16>, vector<40x40xf32> -> vector<40x40xf32>
    "tpu.trace_stop"() : () -> ()
    %142 = arith.addf %141, %96 : vector<40x40xf32>
    %143 = math.exp %142 : vector<40x40xf32>
    %cst_67 = arith.constant dense<0.000000e+00> : vector<40xf32>
    %144 = vector.multi_reduction <add>, %143, %cst_67 [1] : vector<40x40xf32> to vector<40xf32>
    %145 = vector.shape_cast %144 : vector<40xf32> to vector<40x1xf32>
    %146 = tpu.reciprocal %145 {approx = true} : vector<40x1xf32> -> vector<40x1xf32>
    %147 = vector.broadcast %146 : vector<40x1xf32> to vector<40x40xf32>
    %148 = arith.mulf %143, %147 : vector<40x40xf32>
    %149 = arith.truncf %148 : vector<40x40xf32> to vector<40x40xbf16>
    %cst_68 = arith.constant dense<0.000000e+00> : vector<40x8xf32>
    %150 = tpu.matmul %149, %140, %cst_68 {dimension_numbers = #tpu.dot_dimension_numbers<[1], [0], [0], [1], [0, 0, 1, 1], [], []>} : vector<40x40xbf16>, vector<40x8xbf16>, vector<40x8xf32> -> vector<40x8xf32>
    %151 = vector.extract_strided_slice %132 {offsets = [0, 8], sizes = [40, 8], strides = [1, 1]} : vector<40x96xf32> to vector<40x8xf32>
    %cst_69 = arith.constant 0.353553385 : f32
    %152 = vector.broadcast %cst_69 : f32 to vector<40x8xf32>
    %153 = arith.mulf %151, %152 : vector<40x8xf32>
    %154 = arith.truncf %153 : vector<40x8xf32> to vector<40x8xbf16>
    %155 = vector.extract_strided_slice %132 {offsets = [0, 40], sizes = [40, 8], strides = [1, 1]} : vector<40x96xf32> to vector<40x8xf32>
    %156 = arith.truncf %155 : vector<40x8xf32> to vector<40x8xbf16>
    %157 = vector.extract_strided_slice %132 {offsets = [0, 72], sizes = [40, 8], strides = [1, 1]} : vector<40x96xf32> to vector<40x8xf32>
    %158 = arith.truncf %157 : vector<40x8xf32> to vector<40x8xbf16>
    "tpu.trace_start"() <{level = 10 : i32, message = "qd,kd->qk"}> : () -> ()
    %cst_70 = arith.constant dense<0.000000e+00> : vector<40x40xf32>
    %159 = tpu.matmul %154, %156, %cst_70 {dimension_numbers = #tpu.dot_dimension_numbers<[1], [1], [0], [0], [0, 0, 1, 0], [], []>} : vector<40x8xbf16>, vector<40x8xbf16>, vector<40x40xf32> -> vector<40x40xf32>
    "tpu.trace_stop"() : () -> ()
    %160 = arith.addf %159, %96 : vector<40x40xf32>
    %161 = math.exp %160 : vector<40x40xf32>
    %cst_71 = arith.constant dense<0.000000e+00> : vector<40xf32>
    %162 = vector.multi_reduction <add>, %161, %cst_71 [1] : vector<40x40xf32> to vector<40xf32>
    %163 = vector.shape_cast %162 : vector<40xf32> to vector<40x1xf32>
    %164 = tpu.reciprocal %163 {approx = true} : vector<40x1xf32> -> vector<40x1xf32>
    %165 = vector.broadcast %164 : vector<40x1xf32> to vector<40x40xf32>
    %166 = arith.mulf %161, %165 : vector<40x40xf32>
    %167 = arith.truncf %166 : vector<40x40xf32> to vector<40x40xbf16>
    %cst_72 = arith.constant dense<0.000000e+00> : vector<40x8xf32>
    %168 = tpu.matmul %167, %158, %cst_72 {dimension_numbers = #tpu.dot_dimension_numbers<[1], [0], [0], [1], [0, 0, 1, 1], [], []>} : vector<40x40xbf16>, vector<40x8xbf16>, vector<40x8xf32> -> vector<40x8xf32>
    %169 = vector.extract_strided_slice %132 {offsets = [0, 16], sizes = [40, 8], strides = [1, 1]} : vector<40x96xf32> to vector<40x8xf32>
    %cst_73 = arith.constant 0.353553385 : f32
    %170 = vector.broadcast %cst_73 : f32 to vector<40x8xf32>
    %171 = arith.mulf %169, %170 : vector<40x8xf32>
    %172 = arith.truncf %171 : vector<40x8xf32> to vector<40x8xbf16>
    %173 = vector.extract_strided_slice %132 {offsets = [0, 48], sizes = [40, 8], strides = [1, 1]} : vector<40x96xf32> to vector<40x8xf32>
    %174 = arith.truncf %173 : vector<40x8xf32> to vector<40x8xbf16>
    %175 = vector.extract_strided_slice %132 {offsets = [0, 80], sizes = [40, 8], strides = [1, 1]} : vector<40x96xf32> to vector<40x8xf32>
    %176 = arith.truncf %175 : vector<40x8xf32> to vector<40x8xbf16>
    "tpu.trace_start"() <{level = 10 : i32, message = "qd,kd->qk"}> : () -> ()
    %cst_74 = arith.constant dense<0.000000e+00> : vector<40x40xf32>
    %177 = tpu.matmul %172, %174, %cst_74 {dimension_numbers = #tpu.dot_dimension_numbers<[1], [1], [0], [0], [0, 0, 1, 0], [], []>} : vector<40x8xbf16>, vector<40x8xbf16>, vector<40x40xf32> -> vector<40x40xf32>
    "tpu.trace_stop"() : () -> ()
    %178 = arith.addf %177, %96 : vector<40x40xf32>
    %179 = math.exp %178 : vector<40x40xf32>
    %cst_75 = arith.constant dense<0.000000e+00> : vector<40xf32>
    %180 = vector.multi_reduction <add>, %179, %cst_75 [1] : vector<40x40xf32> to vector<40xf32>
    %181 = vector.shape_cast %180 : vector<40xf32> to vector<40x1xf32>
    %182 = tpu.reciprocal %181 {approx = true} : vector<40x1xf32> -> vector<40x1xf32>
    %183 = vector.broadcast %182 : vector<40x1xf32> to vector<40x40xf32>
    %184 = arith.mulf %179, %183 : vector<40x40xf32>
    %185 = arith.truncf %184 : vector<40x40xf32> to vector<40x40xbf16>
    %cst_76 = arith.constant dense<0.000000e+00> : vector<40x8xf32>
    %186 = tpu.matmul %185, %176, %cst_76 {dimension_numbers = #tpu.dot_dimension_numbers<[1], [0], [0], [1], [0, 0, 1, 1], [], []>} : vector<40x40xbf16>, vector<40x8xbf16>, vector<40x8xf32> -> vector<40x8xf32>
    %187 = vector.extract_strided_slice %132 {offsets = [0, 24], sizes = [40, 8], strides = [1, 1]} : vector<40x96xf32> to vector<40x8xf32>
    %cst_77 = arith.constant 0.353553385 : f32
    %188 = vector.broadcast %cst_77 : f32 to vector<40x8xf32>
    %189 = arith.mulf %187, %188 : vector<40x8xf32>
    %190 = arith.truncf %189 : vector<40x8xf32> to vector<40x8xbf16>
    %191 = vector.extract_strided_slice %132 {offsets = [0, 56], sizes = [40, 8], strides = [1, 1]} : vector<40x96xf32> to vector<40x8xf32>
    %192 = arith.truncf %191 : vector<40x8xf32> to vector<40x8xbf16>
    %193 = vector.extract_strided_slice %132 {offsets = [0, 88], sizes = [40, 8], strides = [1, 1]} : vector<40x96xf32> to vector<40x8xf32>
    %194 = arith.truncf %193 : vector<40x8xf32> to vector<40x8xbf16>
    "tpu.trace_start"() <{level = 10 : i32, message = "qd,kd->qk"}> : () -> ()
    %cst_78 = arith.constant dense<0.000000e+00> : vector<40x40xf32>
    %195 = tpu.matmul %190, %192, %cst_78 {dimension_numbers = #tpu.dot_dimension_numbers<[1], [1], [0], [0], [0, 0, 1, 0], [], []>} : vector<40x8xbf16>, vector<40x8xbf16>, vector<40x40xf32> -> vector<40x40xf32>
    "tpu.trace_stop"() : () -> ()
    %196 = arith.addf %195, %96 : vector<40x40xf32>
    %197 = math.exp %196 : vector<40x40xf32>
    %cst_79 = arith.constant dense<0.000000e+00> : vector<40xf32>
    %198 = vector.multi_reduction <add>, %197, %cst_79 [1] : vector<40x40xf32> to vector<40xf32>
    %199 = vector.shape_cast %198 : vector<40xf32> to vector<40x1xf32>
    %200 = tpu.reciprocal %199 {approx = true} : vector<40x1xf32> -> vector<40x1xf32>
    %201 = vector.broadcast %200 : vector<40x1xf32> to vector<40x40xf32>
    %202 = arith.mulf %197, %201 : vector<40x40xf32>
    %203 = arith.truncf %202 : vector<40x40xf32> to vector<40x40xbf16>
    %cst_80 = arith.constant dense<0.000000e+00> : vector<40x8xf32>
    %204 = tpu.matmul %203, %194, %cst_80 {dimension_numbers = #tpu.dot_dimension_numbers<[1], [0], [0], [1], [0, 0, 1, 1], [], []>} : vector<40x40xbf16>, vector<40x8xbf16>, vector<40x8xf32> -> vector<40x8xf32>
    %205 = tpu.concatenate %150, %168, %186, %204 in 1 : vector<40x8xf32>, vector<40x8xf32>, vector<40x8xf32>, vector<40x8xf32> -> vector<40x32xf32>
    %206 = arith.truncf %205 : vector<40x32xf32> to vector<40x32xbf16>
    %c0_81 = arith.constant 0 : index
    %c0_82 = arith.constant 0 : index
    %c0_83 = arith.constant 0 : index
    %207 = vector.load %arg11[%c0_81, %c0_82, %c0_83] : memref<2x32x32xbf16, #tpu.memory_space<vmem>>, vector<1x32x32xbf16>
    %208 = vector.shape_cast %207 : vector<1x32x32xbf16> to vector<32x32xbf16>
    %cst_84 = arith.constant dense<0.000000e+00> : vector<40x32xf32>
    %209 = tpu.matmul %206, %208, %cst_84 {dimension_numbers = #tpu.dot_dimension_numbers<[1], [0], [0], [1], [0, 0, 1, 1], [], []>} : vector<40x32xbf16>, vector<32x32xbf16>, vector<40x32xf32> -> vector<40x32xf32>
    %c0_85 = arith.constant 0 : index
    %c0_86 = arith.constant 0 : index
    %c0_87 = arith.constant 0 : index
    %210 = vector.load %arg12[%c0_85, %c0_86, %c0_87] : memref<2x1x32xf32, #tpu.memory_space<vmem>>, vector<1x1x32xf32>
    %211 = vector.shape_cast %210 : vector<1x1x32xf32> to vector<1x32xf32>
    %212 = vector.broadcast %211 : vector<1x32xf32> to vector<40x32xf32>
    %213 = arith.addf %209, %212 : vector<40x32xf32>
    %214 = arith.addf %44, %213 : vector<40x32xf32>
    %c0_88 = arith.constant 0 : index
    %c0_89 = arith.constant 0 : index
    %c0_90 = arith.constant 0 : index
    %215 = vector.load %arg13[%c0_88, %c0_89, %c0_90] : memref<2x1x32xf32, #tpu.memory_space<vmem>>, vector<1x1x32xf32>
    %216 = vector.shape_cast %215 : vector<1x1x32xf32> to vector<1x32xf32>
    %c0_91 = arith.constant 0 : index
    %c0_92 = arith.constant 0 : index
    %c0_93 = arith.constant 0 : index
    %217 = vector.load %arg14[%c0_91, %c0_92, %c0_93] : memref<2x1x32xf32, #tpu.memory_space<vmem>>, vector<1x1x32xf32>
    %218 = vector.shape_cast %217 : vector<1x1x32xf32> to vector<1x32xf32>
    %cst_94 = arith.constant dense<0.000000e+00> : vector<40xf32>
    %219 = vector.multi_reduction <add>, %214, %cst_94 [1] : vector<40x32xf32> to vector<40xf32>
    %220 = vector.shape_cast %219 : vector<40xf32> to vector<40x1xf32>
    %221 = arith.mulf %214, %214 : vector<40x32xf32>
    %cst_95 = arith.constant dense<0.000000e+00> : vector<40xf32>
    %222 = vector.multi_reduction <add>, %221, %cst_95 [1] : vector<40x32xf32> to vector<40xf32>
    %223 = vector.shape_cast %222 : vector<40xf32> to vector<40x1xf32>
    %cst_96 = arith.constant 3.125000e-02 : f32
    %224 = vector.broadcast %cst_96 : f32 to vector<40x1xf32>
    %225 = arith.mulf %220, %224 : vector<40x1xf32>
    %cst_97 = arith.constant 3.125000e-02 : f32
    %226 = vector.broadcast %cst_97 : f32 to vector<40x1xf32>
    %227 = arith.mulf %223, %226 : vector<40x1xf32>
    %228 = arith.mulf %225, %225 : vector<40x1xf32>
    %229 = arith.subf %227, %228 : vector<40x1xf32>
    %cst_98 = arith.constant 0.000000e+00 : f32
    %230 = vector.broadcast %cst_98 : f32 to vector<40x1xf32>
    %231 = arith.maximumf %229, %230 : vector<40x1xf32>
    %232 = vector.broadcast %225 : vector<40x1xf32> to vector<40x32xf32>
    %233 = arith.subf %214, %232 : vector<40x32xf32>
    %cst_99 = arith.constant 9.99999974E-6 : f32
    %234 = vector.broadcast %cst_99 : f32 to vector<40x1xf32>
    %235 = arith.addf %231, %234 : vector<40x1xf32>
    %236 = math.rsqrt %235 : vector<40x1xf32>
    %237 = vector.broadcast %236 : vector<40x1xf32> to vector<40x32xf32>
    %238 = arith.mulf %233, %237 : vector<40x32xf32>
    %239 = vector.broadcast %216 : vector<1x32xf32> to vector<40x32xf32>
    %240 = arith.mulf %238, %239 : vector<40x32xf32>
    %241 = vector.broadcast %218 : vector<1x32xf32> to vector<40x32xf32>
    %242 = arith.addf %240, %241 : vector<40x32xf32>
    %243 = arith.truncf %242 : vector<40x32xf32> to vector<40x32xbf16>
    %c0_100 = arith.constant 0 : index
    %c0_101 = arith.constant 0 : index
    %c0_102 = arith.constant 0 : index
    %244 = vector.load %arg15[%c0_100, %c0_101, %c0_102] : memref<2x32x128xbf16, #tpu.memory_space<vmem>>, vector<1x32x128xbf16>
    %245 = vector.shape_cast %244 : vector<1x32x128xbf16> to vector<32x128xbf16>
    %cst_103 = arith.constant dense<0.000000e+00> : vector<40x128xf32>
    %246 = tpu.matmul %243, %245, %cst_103 {dimension_numbers = #tpu.dot_dimension_numbers<[1], [0], [0], [1], [0, 0, 1, 1], [], []>} : vector<40x32xbf16>, vector<32x128xbf16>, vector<40x128xf32> -> vector<40x128xf32>
    %c0_104 = arith.constant 0 : index
    %c0_105 = arith.constant 0 : index
    %c0_106 = arith.constant 0 : index
    %247 = vector.load %arg16[%c0_104, %c0_105, %c0_106] : memref<2x1x128xf32, #tpu.memory_space<vmem>>, vector<1x1x128xf32>
    %248 = vector.shape_cast %247 : vector<1x1x128xf32> to vector<1x128xf32>
    %249 = vector.broadcast %248 : vector<1x128xf32> to vector<40x128xf32>
    %250 = arith.addf %246, %249 : vector<40x128xf32>
    %cst_107 = arith.constant 1.702000e+00 : f32
    %251 = vector.broadcast %cst_107 : f32 to vector<40x128xf32>
    %252 = arith.mulf %251, %250 : vector<40x128xf32>
    %253 = arith.negf %252 : vector<40x128xf32>
    %254 = math.exp %253 : vector<40x128xf32>
    %cst_108 = arith.constant 1.000000e+00 : f32
    %255 = vector.broadcast %cst_108 : f32 to vector<40x128xf32>
    %256 = arith.addf %255, %254 : vector<40x128xf32>
    %257 = arith.divf %255, %256 : vector<40x128xf32>
    %258 = arith.mulf %250, %257 : vector<40x128xf32>
    %259 = arith.truncf %258 : vector<40x128xf32> to vector<40x128xbf16>
    %c0_109 = arith.constant 0 : index
    %c0_110 = arith.constant 0 : index
    %c0_111 = arith.constant 0 : index
    %260 = vector.load %arg17[%c0_109, %c0_110, %c0_111] : memref<2x128x32xbf16, #tpu.memory_space<vmem>>, vector<1x128x32xbf16>
    %261 = vector.shape_cast %260 : vector<1x128x32xbf16> to vector<128x32xbf16>
    %cst_112 = arith.constant dense<0.000000e+00> : vector<40x32xf32>
    %262 = tpu.matmul %259, %261, %cst_112 {dimension_numbers = #tpu.dot_dimension_numbers<[1], [0], [0], [1], [0, 0, 1, 1], [], []>} : vector<40x128xbf16>, vector<128x32xbf16>, vector<40x32xf32> -> vector<40x32xf32>
    %c0_113 = arith.constant 0 : index
    %c0_114 = arith.constant 0 : index
    %c0_115 = arith.constant 0 : index
    %263 = vector.load %arg18[%c0_113, %c0_114, %c0_115] : memref<2x1x32xf32, #tpu.memory_space<vmem>>, vector<1x1x32xf32>
    %264 = vector.shape_cast %263 : vector<1x1x32xf32> to vector<1x32xf32>
    %265 = vector.broadcast %264 : vector<1x32xf32> to vector<40x32xf32>
    %266 = arith.addf %262, %265 : vector<40x32xf32>
    %267 = arith.addf %214, %266 : vector<40x32xf32>
    %c1 = arith.constant 1 : index
    %c0_116 = arith.constant 0 : index
    %c0_117 = arith.constant 0 : index
    %268 = vector.load %arg7[%c1, %c0_116, %c0_117] : memref<2x1x32xf32, #tpu.memory_space<vmem>>, vector<1x1x32xf32>
    %269 = vector.shape_cast %268 : vector<1x1x32xf32> to vector<1x32xf32>
    %c1_118 = arith.constant 1 : index
    %c0_119 = arith.constant 0 : index
    %c0_120 = arith.constant 0 : index
    %270 = vector.load %arg8[%c1_118, %c0_119, %c0_120] : memref<2x1x32xf32, #tpu.memory_space<vmem>>, vector<1x1x32xf32>
    %271 = vector.shape_cast %270 : vector<1x1x32xf32> to vector<1x32xf32>
    %cst_121 = arith.constant dense<0.000000e+00> : vector<40xf32>
    %272 = vector.multi_reduction <add>, %267, %cst_121 [1] : vector<40x32xf32> to vector<40xf32>
    %273 = vector.shape_cast %272 : vector<40xf32> to vector<40x1xf32>
    %274 = arith.mulf %267, %267 : vector<40x32xf32>
    %cst_122 = arith.constant dense<0.000000e+00> : vector<40xf32>
    %275 = vector.multi_reduction <add>, %274, %cst_122 [1] : vector<40x32xf32> to vector<40xf32>
    %276 = vector.shape_cast %275 : vector<40xf32> to vector<40x1xf32>
    %cst_123 = arith.constant 3.125000e-02 : f32
    %277 = vector.broadcast %cst_123 : f32 to vector<40x1xf32>
    %278 = arith.mulf %273, %277 : vector<40x1xf32>
    %cst_124 = arith.constant 3.125000e-02 : f32
    %279 = vector.broadcast %cst_124 : f32 to vector<40x1xf32>
    %280 = arith.mulf %276, %279 : vector<40x1xf32>
    %281 = arith.mulf %278, %278 : vector<40x1xf32>
    %282 = arith.subf %280, %281 : vector<40x1xf32>
    %cst_125 = arith.constant 0.000000e+00 : f32
    %283 = vector.broadcast %cst_125 : f32 to vector<40x1xf32>
    %284 = arith.maximumf %282, %283 : vector<40x1xf32>
    %285 = vector.broadcast %278 : vector<40x1xf32> to vector<40x32xf32>
    %286 = arith.subf %267, %285 : vector<40x32xf32>
    %cst_126 = arith.constant 9.99999974E-6 : f32
    %287 = vector.broadcast %cst_126 : f32 to vector<40x1xf32>
    %288 = arith.addf %284, %287 : vector<40x1xf32>
    %289 = math.rsqrt %288 : vector<40x1xf32>
    %290 = vector.broadcast %289 : vector<40x1xf32> to vector<40x32xf32>
    %291 = arith.mulf %286, %290 : vector<40x32xf32>
    %292 = vector.broadcast %269 : vector<1x32xf32> to vector<40x32xf32>
    %293 = arith.mulf %291, %292 : vector<40x32xf32>
    %294 = vector.broadcast %271 : vector<1x32xf32> to vector<40x32xf32>
    %295 = arith.addf %293, %294 : vector<40x32xf32>
    %296 = arith.truncf %295 : vector<40x32xf32> to vector<40x32xbf16>
    %c1_127 = arith.constant 1 : index
    %c0_128 = arith.constant 0 : index
    %c0_129 = arith.constant 0 : index
    %297 = vector.load %arg9[%c1_127, %c0_128, %c0_129] : memref<2x32x96xbf16, #tpu.memory_space<vmem>>, vector<1x32x96xbf16>
    %298 = vector.shape_cast %297 : vector<1x32x96xbf16> to vector<32x96xbf16>
    %cst_130 = arith.constant dense<0.000000e+00> : vector<40x96xf32>
    %299 = tpu.matmul %296, %298, %cst_130 {dimension_numbers = #tpu.dot_dimension_numbers<[1], [0], [0], [1], [0, 0, 1, 1], [], []>} : vector<40x32xbf16>, vector<32x96xbf16>, vector<40x96xf32> -> vector<40x96xf32>
    %c1_131 = arith.constant 1 : index
    %c0_132 = arith.constant 0 : index
    %c0_133 = arith.constant 0 : index
    %300 = vector.load %arg10[%c1_131, %c0_132, %c0_133] : memref<2x1x96xf32, #tpu.memory_space<vmem>>, vector<1x1x96xf32>
    %301 = vector.shape_cast %300 : vector<1x1x96xf32> to vector<1x96xf32>
    %302 = vector.broadcast %301 : vector<1x96xf32> to vector<40x96xf32>
    %303 = arith.addf %299, %302 : vector<40x96xf32>
    %304 = vector.extract_strided_slice %303 {offsets = [0, 0], sizes = [40, 8], strides = [1, 1]} : vector<40x96xf32> to vector<40x8xf32>
    %cst_134 = arith.constant 0.353553385 : f32
    %305 = vector.broadcast %cst_134 : f32 to vector<40x8xf32>
    %306 = arith.mulf %304, %305 : vector<40x8xf32>
    %307 = arith.truncf %306 : vector<40x8xf32> to vector<40x8xbf16>
    %308 = vector.extract_strided_slice %303 {offsets = [0, 32], sizes = [40, 8], strides = [1, 1]} : vector<40x96xf32> to vector<40x8xf32>
    %309 = arith.truncf %308 : vector<40x8xf32> to vector<40x8xbf16>
    %310 = vector.extract_strided_slice %303 {offsets = [0, 64], sizes = [40, 8], strides = [1, 1]} : vector<40x96xf32> to vector<40x8xf32>
    %311 = arith.truncf %310 : vector<40x8xf32> to vector<40x8xbf16>
    "tpu.trace_start"() <{level = 10 : i32, message = "qd,kd->qk"}> : () -> ()
    %cst_135 = arith.constant dense<0.000000e+00> : vector<40x40xf32>
    %312 = tpu.matmul %307, %309, %cst_135 {dimension_numbers = #tpu.dot_dimension_numbers<[1], [1], [0], [0], [0, 0, 1, 0], [], []>} : vector<40x8xbf16>, vector<40x8xbf16>, vector<40x40xf32> -> vector<40x40xf32>
    "tpu.trace_stop"() : () -> ()
    %313 = arith.addf %312, %96 : vector<40x40xf32>
    %314 = math.exp %313 : vector<40x40xf32>
    %cst_136 = arith.constant dense<0.000000e+00> : vector<40xf32>
    %315 = vector.multi_reduction <add>, %314, %cst_136 [1] : vector<40x40xf32> to vector<40xf32>
    %316 = vector.shape_cast %315 : vector<40xf32> to vector<40x1xf32>
    %317 = tpu.reciprocal %316 {approx = true} : vector<40x1xf32> -> vector<40x1xf32>
    %318 = vector.broadcast %317 : vector<40x1xf32> to vector<40x40xf32>
    %319 = arith.mulf %314, %318 : vector<40x40xf32>
    %320 = arith.truncf %319 : vector<40x40xf32> to vector<40x40xbf16>
    %cst_137 = arith.constant dense<0.000000e+00> : vector<40x8xf32>
    %321 = tpu.matmul %320, %311, %cst_137 {dimension_numbers = #tpu.dot_dimension_numbers<[1], [0], [0], [1], [0, 0, 1, 1], [], []>} : vector<40x40xbf16>, vector<40x8xbf16>, vector<40x8xf32> -> vector<40x8xf32>
    %322 = vector.extract_strided_slice %303 {offsets = [0, 8], sizes = [40, 8], strides = [1, 1]} : vector<40x96xf32> to vector<40x8xf32>
    %cst_138 = arith.constant 0.353553385 : f32
    %323 = vector.broadcast %cst_138 : f32 to vector<40x8xf32>
    %324 = arith.mulf %322, %323 : vector<40x8xf32>
    %325 = arith.truncf %324 : vector<40x8xf32> to vector<40x8xbf16>
    %326 = vector.extract_strided_slice %303 {offsets = [0, 40], sizes = [40, 8], strides = [1, 1]} : vector<40x96xf32> to vector<40x8xf32>
    %327 = arith.truncf %326 : vector<40x8xf32> to vector<40x8xbf16>
    %328 = vector.extract_strided_slice %303 {offsets = [0, 72], sizes = [40, 8], strides = [1, 1]} : vector<40x96xf32> to vector<40x8xf32>
    %329 = arith.truncf %328 : vector<40x8xf32> to vector<40x8xbf16>
    "tpu.trace_start"() <{level = 10 : i32, message = "qd,kd->qk"}> : () -> ()
    %cst_139 = arith.constant dense<0.000000e+00> : vector<40x40xf32>
    %330 = tpu.matmul %325, %327, %cst_139 {dimension_numbers = #tpu.dot_dimension_numbers<[1], [1], [0], [0], [0, 0, 1, 0], [], []>} : vector<40x8xbf16>, vector<40x8xbf16>, vector<40x40xf32> -> vector<40x40xf32>
    "tpu.trace_stop"() : () -> ()
    %331 = arith.addf %330, %96 : vector<40x40xf32>
    %332 = math.exp %331 : vector<40x40xf32>
    %cst_140 = arith.constant dense<0.000000e+00> : vector<40xf32>
    %333 = vector.multi_reduction <add>, %332, %cst_140 [1] : vector<40x40xf32> to vector<40xf32>
    %334 = vector.shape_cast %333 : vector<40xf32> to vector<40x1xf32>
    %335 = tpu.reciprocal %334 {approx = true} : vector<40x1xf32> -> vector<40x1xf32>
    %336 = vector.broadcast %335 : vector<40x1xf32> to vector<40x40xf32>
    %337 = arith.mulf %332, %336 : vector<40x40xf32>
    %338 = arith.truncf %337 : vector<40x40xf32> to vector<40x40xbf16>
    %cst_141 = arith.constant dense<0.000000e+00> : vector<40x8xf32>
    %339 = tpu.matmul %338, %329, %cst_141 {dimension_numbers = #tpu.dot_dimension_numbers<[1], [0], [0], [1], [0, 0, 1, 1], [], []>} : vector<40x40xbf16>, vector<40x8xbf16>, vector<40x8xf32> -> vector<40x8xf32>
    %340 = vector.extract_strided_slice %303 {offsets = [0, 16], sizes = [40, 8], strides = [1, 1]} : vector<40x96xf32> to vector<40x8xf32>
    %cst_142 = arith.constant 0.353553385 : f32
    %341 = vector.broadcast %cst_142 : f32 to vector<40x8xf32>
    %342 = arith.mulf %340, %341 : vector<40x8xf32>
    %343 = arith.truncf %342 : vector<40x8xf32> to vector<40x8xbf16>
    %344 = vector.extract_strided_slice %303 {offsets = [0, 48], sizes = [40, 8], strides = [1, 1]} : vector<40x96xf32> to vector<40x8xf32>
    %345 = arith.truncf %344 : vector<40x8xf32> to vector<40x8xbf16>
    %346 = vector.extract_strided_slice %303 {offsets = [0, 80], sizes = [40, 8], strides = [1, 1]} : vector<40x96xf32> to vector<40x8xf32>
    %347 = arith.truncf %346 : vector<40x8xf32> to vector<40x8xbf16>
    "tpu.trace_start"() <{level = 10 : i32, message = "qd,kd->qk"}> : () -> ()
    %cst_143 = arith.constant dense<0.000000e+00> : vector<40x40xf32>
    %348 = tpu.matmul %343, %345, %cst_143 {dimension_numbers = #tpu.dot_dimension_numbers<[1], [1], [0], [0], [0, 0, 1, 0], [], []>} : vector<40x8xbf16>, vector<40x8xbf16>, vector<40x40xf32> -> vector<40x40xf32>
    "tpu.trace_stop"() : () -> ()
    %349 = arith.addf %348, %96 : vector<40x40xf32>
    %350 = math.exp %349 : vector<40x40xf32>
    %cst_144 = arith.constant dense<0.000000e+00> : vector<40xf32>
    %351 = vector.multi_reduction <add>, %350, %cst_144 [1] : vector<40x40xf32> to vector<40xf32>
    %352 = vector.shape_cast %351 : vector<40xf32> to vector<40x1xf32>
    %353 = tpu.reciprocal %352 {approx = true} : vector<40x1xf32> -> vector<40x1xf32>
    %354 = vector.broadcast %353 : vector<40x1xf32> to vector<40x40xf32>
    %355 = arith.mulf %350, %354 : vector<40x40xf32>
    %356 = arith.truncf %355 : vector<40x40xf32> to vector<40x40xbf16>
    %cst_145 = arith.constant dense<0.000000e+00> : vector<40x8xf32>
    %357 = tpu.matmul %356, %347, %cst_145 {dimension_numbers = #tpu.dot_dimension_numbers<[1], [0], [0], [1], [0, 0, 1, 1], [], []>} : vector<40x40xbf16>, vector<40x8xbf16>, vector<40x8xf32> -> vector<40x8xf32>
    %358 = vector.extract_strided_slice %303 {offsets = [0, 24], sizes = [40, 8], strides = [1, 1]} : vector<40x96xf32> to vector<40x8xf32>
    %cst_146 = arith.constant 0.353553385 : f32
    %359 = vector.broadcast %cst_146 : f32 to vector<40x8xf32>
    %360 = arith.mulf %358, %359 : vector<40x8xf32>
    %361 = arith.truncf %360 : vector<40x8xf32> to vector<40x8xbf16>
    %362 = vector.extract_strided_slice %303 {offsets = [0, 56], sizes = [40, 8], strides = [1, 1]} : vector<40x96xf32> to vector<40x8xf32>
    %363 = arith.truncf %362 : vector<40x8xf32> to vector<40x8xbf16>
    %364 = vector.extract_strided_slice %303 {offsets = [0, 88], sizes = [40, 8], strides = [1, 1]} : vector<40x96xf32> to vector<40x8xf32>
    %365 = arith.truncf %364 : vector<40x8xf32> to vector<40x8xbf16>
    "tpu.trace_start"() <{level = 10 : i32, message = "qd,kd->qk"}> : () -> ()
    %cst_147 = arith.constant dense<0.000000e+00> : vector<40x40xf32>
    %366 = tpu.matmul %361, %363, %cst_147 {dimension_numbers = #tpu.dot_dimension_numbers<[1], [1], [0], [0], [0, 0, 1, 0], [], []>} : vector<40x8xbf16>, vector<40x8xbf16>, vector<40x40xf32> -> vector<40x40xf32>
    "tpu.trace_stop"() : () -> ()
    %367 = arith.addf %366, %96 : vector<40x40xf32>
    %368 = math.exp %367 : vector<40x40xf32>
    %cst_148 = arith.constant dense<0.000000e+00> : vector<40xf32>
    %369 = vector.multi_reduction <add>, %368, %cst_148 [1] : vector<40x40xf32> to vector<40xf32>
    %370 = vector.shape_cast %369 : vector<40xf32> to vector<40x1xf32>
    %371 = tpu.reciprocal %370 {approx = true} : vector<40x1xf32> -> vector<40x1xf32>
    %372 = vector.broadcast %371 : vector<40x1xf32> to vector<40x40xf32>
    %373 = arith.mulf %368, %372 : vector<40x40xf32>
    %374 = arith.truncf %373 : vector<40x40xf32> to vector<40x40xbf16>
    %cst_149 = arith.constant dense<0.000000e+00> : vector<40x8xf32>
    %375 = tpu.matmul %374, %365, %cst_149 {dimension_numbers = #tpu.dot_dimension_numbers<[1], [0], [0], [1], [0, 0, 1, 1], [], []>} : vector<40x40xbf16>, vector<40x8xbf16>, vector<40x8xf32> -> vector<40x8xf32>
    %376 = tpu.concatenate %321, %339, %357, %375 in 1 : vector<40x8xf32>, vector<40x8xf32>, vector<40x8xf32>, vector<40x8xf32> -> vector<40x32xf32>
    %377 = arith.truncf %376 : vector<40x32xf32> to vector<40x32xbf16>
    %c1_150 = arith.constant 1 : index
    %c0_151 = arith.constant 0 : index
    %c0_152 = arith.constant 0 : index
    %378 = vector.load %arg11[%c1_150, %c0_151, %c0_152] : memref<2x32x32xbf16, #tpu.memory_space<vmem>>, vector<1x32x32xbf16>
    %379 = vector.shape_cast %378 : vector<1x32x32xbf16> to vector<32x32xbf16>
    %cst_153 = arith.constant dense<0.000000e+00> : vector<40x32xf32>
    %380 = tpu.matmul %377, %379, %cst_153 {dimension_numbers = #tpu.dot_dimension_numbers<[1], [0], [0], [1], [0, 0, 1, 1], [], []>} : vector<40x32xbf16>, vector<32x32xbf16>, vector<40x32xf32> -> vector<40x32xf32>
    %c1_154 = arith.constant 1 : index
    %c0_155 = arith.constant 0 : index
    %c0_156 = arith.constant 0 : index
    %381 = vector.load %arg12[%c1_154, %c0_155, %c0_156] : memref<2x1x32xf32, #tpu.memory_space<vmem>>, vector<1x1x32xf32>
    %382 = vector.shape_cast %381 : vector<1x1x32xf32> to vector<1x32xf32>
    %383 = vector.broadcast %382 : vector<1x32xf32> to vector<40x32xf32>
    %384 = arith.addf %380, %383 : vector<40x32xf32>
    %385 = arith.addf %267, %384 : vector<40x32xf32>
    %c1_157 = arith.constant 1 : index
    %c0_158 = arith.constant 0 : index
    %c0_159 = arith.constant 0 : index
    %386 = vector.load %arg13[%c1_157, %c0_158, %c0_159] : memref<2x1x32xf32, #tpu.memory_space<vmem>>, vector<1x1x32xf32>
    %387 = vector.shape_cast %386 : vector<1x1x32xf32> to vector<1x32xf32>
    %c1_160 = arith.constant 1 : index
    %c0_161 = arith.constant 0 : index
    %c0_162 = arith.constant 0 : index
    %388 = vector.load %arg14[%c1_160, %c0_161, %c0_162] : memref<2x1x32xf32, #tpu.memory_space<vmem>>, vector<1x1x32xf32>
    %389 = vector.shape_cast %388 : vector<1x1x32xf32> to vector<1x32xf32>
    %cst_163 = arith.constant dense<0.000000e+00> : vector<40xf32>
    %390 = vector.multi_reduction <add>, %385, %cst_163 [1] : vector<40x32xf32> to vector<40xf32>
    %391 = vector.shape_cast %390 : vector<40xf32> to vector<40x1xf32>
    %392 = arith.mulf %385, %385 : vector<40x32xf32>
    %cst_164 = arith.constant dense<0.000000e+00> : vector<40xf32>
    %393 = vector.multi_reduction <add>, %392, %cst_164 [1] : vector<40x32xf32> to vector<40xf32>
    %394 = vector.shape_cast %393 : vector<40xf32> to vector<40x1xf32>
    %cst_165 = arith.constant 3.125000e-02 : f32
    %395 = vector.broadcast %cst_165 : f32 to vector<40x1xf32>
    %396 = arith.mulf %391, %395 : vector<40x1xf32>
    %cst_166 = arith.constant 3.125000e-02 : f32
    %397 = vector.broadcast %cst_166 : f32 to vector<40x1xf32>
    %398 = arith.mulf %394, %397 : vector<40x1xf32>
    %399 = arith.mulf %396, %396 : vector<40x1xf32>
    %400 = arith.subf %398, %399 : vector<40x1xf32>
    %cst_167 = arith.constant 0.000000e+00 : f32
    %401 = vector.broadcast %cst_167 : f32 to vector<40x1xf32>
    %402 = arith.maximumf %400, %401 : vector<40x1xf32>
    %403 = vector.broadcast %396 : vector<40x1xf32> to vector<40x32xf32>
    %404 = arith.subf %385, %403 : vector<40x32xf32>
    %cst_168 = arith.constant 9.99999974E-6 : f32
    %405 = vector.broadcast %cst_168 : f32 to vector<40x1xf32>
    %406 = arith.addf %402, %405 : vector<40x1xf32>
    %407 = math.rsqrt %406 : vector<40x1xf32>
    %408 = vector.broadcast %407 : vector<40x1xf32> to vector<40x32xf32>
    %409 = arith.mulf %404, %408 : vector<40x32xf32>
    %410 = vector.broadcast %387 : vector<1x32xf32> to vector<40x32xf32>
    %411 = arith.mulf %409, %410 : vector<40x32xf32>
    %412 = vector.broadcast %389 : vector<1x32xf32> to vector<40x32xf32>
    %413 = arith.addf %411, %412 : vector<40x32xf32>
    %414 = arith.truncf %413 : vector<40x32xf32> to vector<40x32xbf16>
    %c1_169 = arith.constant 1 : index
    %c0_170 = arith.constant 0 : index
    %c0_171 = arith.constant 0 : index
    %415 = vector.load %arg15[%c1_169, %c0_170, %c0_171] : memref<2x32x128xbf16, #tpu.memory_space<vmem>>, vector<1x32x128xbf16>
    %416 = vector.shape_cast %415 : vector<1x32x128xbf16> to vector<32x128xbf16>
    %cst_172 = arith.constant dense<0.000000e+00> : vector<40x128xf32>
    %417 = tpu.matmul %414, %416, %cst_172 {dimension_numbers = #tpu.dot_dimension_numbers<[1], [0], [0], [1], [0, 0, 1, 1], [], []>} : vector<40x32xbf16>, vector<32x128xbf16>, vector<40x128xf32> -> vector<40x128xf32>
    %c1_173 = arith.constant 1 : index
    %c0_174 = arith.constant 0 : index
    %c0_175 = arith.constant 0 : index
    %418 = vector.load %arg16[%c1_173, %c0_174, %c0_175] : memref<2x1x128xf32, #tpu.memory_space<vmem>>, vector<1x1x128xf32>
    %419 = vector.shape_cast %418 : vector<1x1x128xf32> to vector<1x128xf32>
    %420 = vector.broadcast %419 : vector<1x128xf32> to vector<40x128xf32>
    %421 = arith.addf %417, %420 : vector<40x128xf32>
    %cst_176 = arith.constant 1.702000e+00 : f32
    %422 = vector.broadcast %cst_176 : f32 to vector<40x128xf32>
    %423 = arith.mulf %422, %421 : vector<40x128xf32>
    %424 = arith.negf %423 : vector<40x128xf32>
    %425 = math.exp %424 : vector<40x128xf32>
    %cst_177 = arith.constant 1.000000e+00 : f32
    %426 = vector.broadcast %cst_177 : f32 to vector<40x128xf32>
    %427 = arith.addf %426, %425 : vector<40x128xf32>
    %428 = arith.divf %426, %427 : vector<40x128xf32>
    %429 = arith.mulf %421, %428 : vector<40x128xf32>
    %430 = arith.truncf %429 : vector<40x128xf32> to vector<40x128xbf16>
    %c1_178 = arith.constant 1 : index
    %c0_179 = arith.constant 0 : index
    %c0_180 = arith.constant 0 : index
    %431 = vector.load %arg17[%c1_178, %c0_179, %c0_180] : memref<2x128x32xbf16, #tpu.memory_space<vmem>>, vector<1x128x32xbf16>
    %432 = vector.shape_cast %431 : vector<1x128x32xbf16> to vector<128x32xbf16>
    %cst_181 = arith.constant dense<0.000000e+00> : vector<40x32xf32>
    %433 = tpu.matmul %430, %432, %cst_181 {dimension_numbers = #tpu.dot_dimension_numbers<[1], [0], [0], [1], [0, 0, 1, 1], [], []>} : vector<40x128xbf16>, vector<128x32xbf16>, vector<40x32xf32> -> vector<40x32xf32>
    %c1_182 = arith.constant 1 : index
    %c0_183 = arith.constant 0 : index
    %c0_184 = arith.constant 0 : index
    %434 = vector.load %arg18[%c1_182, %c0_183, %c0_184] : memref<2x1x32xf32, #tpu.memory_space<vmem>>, vector<1x1x32xf32>
    %435 = vector.shape_cast %434 : vector<1x1x32xf32> to vector<1x32xf32>
    %436 = vector.broadcast %435 : vector<1x32xf32> to vector<40x32xf32>
    %437 = arith.addf %433, %436 : vector<40x32xf32>
    %438 = arith.addf %385, %437 : vector<40x32xf32>
    %439 = vector.extract_strided_slice %438 {offsets = [32, 0], sizes = [2, 32], strides = [1, 1]} : vector<40x32xf32> to vector<2x32xf32>
    %c0_185 = arith.constant 0 : index
    %c0_186 = arith.constant 0 : index
    %440 = vector.load %arg19[%c0_185, %c0_186] : memref<1x32xf32, #tpu.memory_space<vmem>>, vector<1x32xf32>
    %c0_187 = arith.constant 0 : index
    %c0_188 = arith.constant 0 : index
    %441 = vector.load %arg20[%c0_187, %c0_188] : memref<1x32xf32, #tpu.memory_space<vmem>>, vector<1x32xf32>
    %cst_189 = arith.constant dense<0.000000e+00> : vector<2xf32>
    %442 = vector.multi_reduction <add>, %439, %cst_189 [1] : vector<2x32xf32> to vector<2xf32>
    %443 = vector.shape_cast %442 : vector<2xf32> to vector<2x1xf32>
    %444 = arith.mulf %439, %439 : vector<2x32xf32>
    %cst_190 = arith.constant dense<0.000000e+00> : vector<2xf32>
    %445 = vector.multi_reduction <add>, %444, %cst_190 [1] : vector<2x32xf32> to vector<2xf32>
    %446 = vector.shape_cast %445 : vector<2xf32> to vector<2x1xf32>
    %cst_191 = arith.constant 3.125000e-02 : f32
    %447 = vector.broadcast %cst_191 : f32 to vector<2x1xf32>
    %448 = arith.mulf %443, %447 : vector<2x1xf32>
    %cst_192 = arith.constant 3.125000e-02 : f32
    %449 = vector.broadcast %cst_192 : f32 to vector<2x1xf32>
    %450 = arith.mulf %446, %449 : vector<2x1xf32>
    %451 = arith.mulf %448, %448 : vector<2x1xf32>
    %452 = arith.subf %450, %451 : vector<2x1xf32>
    %cst_193 = arith.constant 0.000000e+00 : f32
    %453 = vector.broadcast %cst_193 : f32 to vector<2x1xf32>
    %454 = arith.maximumf %452, %453 : vector<2x1xf32>
    %455 = vector.broadcast %448 : vector<2x1xf32> to vector<2x32xf32>
    %456 = arith.subf %439, %455 : vector<2x32xf32>
    %cst_194 = arith.constant 9.99999974E-6 : f32
    %457 = vector.broadcast %cst_194 : f32 to vector<2x1xf32>
    %458 = arith.addf %454, %457 : vector<2x1xf32>
    %459 = math.rsqrt %458 : vector<2x1xf32>
    %460 = vector.broadcast %459 : vector<2x1xf32> to vector<2x32xf32>
    %461 = arith.mulf %456, %460 : vector<2x32xf32>
    %462 = vector.broadcast %440 : vector<1x32xf32> to vector<2x32xf32>
    %463 = arith.mulf %461, %462 : vector<2x32xf32>
    %464 = vector.broadcast %441 : vector<1x32xf32> to vector<2x32xf32>
    %465 = arith.addf %463, %464 : vector<2x32xf32>
    %c0_195 = arith.constant 0 : index
    %c0_196 = arith.constant 0 : index
    %466 = vector.load %arg21[%c0_195, %c0_196] : memref<32x16xf32, #tpu.memory_space<vmem>>, vector<32x16xf32>
    %cst_197 = arith.constant dense<0.000000e+00> : vector<2x16xf32>
    %467 = tpu.matmul %465, %466, %cst_197 {dimension_numbers = #tpu.dot_dimension_numbers<[1], [0], [0], [1], [0, 0, 1, 1], [], []>} : vector<2x32xf32>, vector<32x16xf32>, vector<2x16xf32> -> vector<2x16xf32>
    %c0_198 = arith.constant 0 : index
    %c0_199 = arith.constant 0 : index
    %468 = vector.load %arg22[%c0_198, %c0_199] : memref<2x16xf32, #tpu.memory_space<vmem>>, vector<2x16xf32>
    tpu.vector_store %arg22[%c0_198, %c0_199], %467 {strides = array<i32>} : memref<2x16xf32, #tpu.memory_space<vmem>>, vector<2x16xf32>,
    return
  }
}

</mosaic_0001>

<llo_original>
// kernel: partial_vit_forward.1
$region0: #{partial_vit_forward.1}
  #allocation0 [shape = 'u32[]', space=smem, size = 0x4, offset = 0x4, fixed_abs, tag = 'smem constant byte address 0x4 - core index']
  #allocation1 [shape = 'u32[72,128]{1,0:T(1,128)}', space=vmem, size = 0x9000, scoped, tag = 'internal scratch']
  #allocation2 [shape = 'f32[40,32]{1,0:T(8,128)}', space=vmem, size = 0x5000, scoped, tag = 'scratch operand']
  %s0 = inlined_call_operand.vmem [shape: f32[32,48], index: 0, kind: input, shape index: {}]
  %s1 = inlined_call_operand.vmem [shape: f32[48,32], index: 1, kind: input, shape index: {}]
  %s2 = inlined_call_operand.vmem [shape: f32[1,32], index: 2, kind: input, shape index: {}]
  %s3 = inlined_call_operand.vmem [shape: f32[1,32], index: 3, kind: input, shape index: {}]
  %s4 = inlined_call_operand.vmem [shape: f32[16,32], index: 4, kind: input, shape index: {}]
  %s5 = inlined_call_operand.vmem [shape: f32[1,32], index: 5, kind: input, shape index: {}]
  %s6 = inlined_call_operand.vmem [shape: f32[1,32], index: 6, kind: input, shape index: {}]
  %s7 = inlined_call_operand.vmem [shape: f32[2,1,32], index: 7, kind: input, shape index: {}]
  %s8 = inlined_call_operand.vmem [shape: f32[2,1,32], index: 8, kind: input, shape index: {}]
  %s9 = inlined_call_operand.vmem [shape: bf16[2,32,96], index: 9, kind: input, shape index: {}]
  %s10 = inlined_call_operand.vmem [shape: f32[2,1,96], index: 10, kind: input, shape index: {}]
  %s11 = inlined_call_operand.vmem [shape: bf16[2,32,32], index: 11, kind: input, shape index: {}]
  %s12 = inlined_call_operand.vmem [shape: f32[2,1,32], index: 12, kind: input, shape index: {}]
  %s13 = inlined_call_operand.vmem [shape: f32[2,1,32], index: 13, kind: input, shape index: {}]
  %s14 = inlined_call_operand.vmem [shape: f32[2,1,32], index: 14, kind: input, shape index: {}]
  %s15 = inlined_call_operand.vmem [shape: bf16[2,32,128], index: 15, kind: input, shape index: {}]
  %s16 = inlined_call_operand.vmem [shape: f32[2,1,128], index: 16, kind: input, shape index: {}]
  %s17 = inlined_call_operand.vmem [shape: bf16[2,128,32], index: 17, kind: input, shape index: {}]
  %s18 = inlined_call_operand.vmem [shape: f32[2,1,32], index: 18, kind: input, shape index: {}]
  %s19 = inlined_call_operand.vmem [shape: f32[1,32], index: 19, kind: input, shape index: {}]
  %s20 = inlined_call_operand.vmem [shape: f32[1,32], index: 20, kind: input, shape index: {}]
  %s21 = inlined_call_operand.vmem [shape: f32[32,16], index: 21, kind: input, shape index: {}]
  %s22 = inlined_call_operand.hbm [shape: f32[2,16], index: 22, kind: output, shape index: {}]
  %s23 = sld [smem:[#allocation0]]
  $region98: #{partial_vit_forward.1} parent=0
    _
  %s25 = ssub.s32 1, %s23
  %s26 = scalar_select 0, %s25, %s23
  $region1: #{partial_vit_forward.1} parent=0
    #allocation3 [shape = 'u8[1024]{0}', space=vmem, size = 0x400, scoped, tag = 'output window, operand 0, single buffered']
    #allocation4 [shape = 's32[1]{0}', space=sflag, size = 0x4, scoped, tag = 'scoped memory for partial_vit_forward.1']
    %27 = vsyncpa [#allocation4], 0
    // Predicated region
    $region2: #{partial_vit_forward.1} parent=1 // pred_check
      _
    $region3: #{partial_vit_forward.1} parent=1 // pred_check_branch
      %29 = sbr.rel (0) target = $region5
    $region4: #{partial_vit_forward.1} parent=1 // pred_region
      _
    $region5: #{partial_vit_forward.1} parent=1 // pred_fallthru
      _
    // Predicated region
    $region6: #{partial_vit_forward.1} parent=1 // pred_check
      _
    $region7: #{partial_vit_forward.1} parent=1 // pred_check_branch
      %31 = sbr.rel (0) target = $region9
    $region8: #{partial_vit_forward.1} parent=1 // pred_region
      _
    $region9: #{partial_vit_forward.1} parent=1 // pred_fallthru
      _
    // Predicated region
    $region10: #{partial_vit_forward.1} parent=1 // pred_check
      _
    $region11: #{partial_vit_forward.1} parent=1 // pred_check_branch
      %33 = sbr.rel (0) target = $region13
    $region12: #{partial_vit_forward.1} parent=1 // pred_region
      _
    $region13: #{partial_vit_forward.1} parent=1 // pred_fallthru
      _
    // Predicated region
    $region14: #{partial_vit_forward.1} parent=1 // pred_check
      _
    $region15: #{partial_vit_forward.1} parent=1 // pred_check_branch
      %35 = sbr.rel (0) target = $region17
    $region16: #{partial_vit_forward.1} parent=1 // pred_region
      _
    $region17: #{partial_vit_forward.1} parent=1 // pred_fallthru
      _
    // Predicated region
    $region18: #{partial_vit_forward.1} parent=1 // pred_check
      _
    $region19: #{partial_vit_forward.1} parent=1 // pred_check_branch
      %37 = sbr.rel (0) target = $region21
    $region20: #{partial_vit_forward.1} parent=1 // pred_region
      _
    $region21: #{partial_vit_forward.1} parent=1 // pred_fallthru
      _
    // Predicated region
    $region22: #{partial_vit_forward.1} parent=1 // pred_check
      _
    $region23: #{partial_vit_forward.1} parent=1 // pred_check_branch
      %39 = sbr.rel (0) target = $region25
    $region24: #{partial_vit_forward.1} parent=1 // pred_region
      _
    $region25: #{partial_vit_forward.1} parent=1 // pred_fallthru
      _
    // Predicated region
    $region26: #{partial_vit_forward.1} parent=1 // pred_check
      _
    $region27: #{partial_vit_forward.1} parent=1 // pred_check_branch
      %41 = sbr.rel (0) target = $region29
    $region28: #{partial_vit_forward.1} parent=1 // pred_region
      _
    $region29: #{partial_vit_forward.1} parent=1 // pred_fallthru
      _
    // Predicated region
    $region30: #{partial_vit_forward.1} parent=1 // pred_check
      _
    $region31: #{partial_vit_forward.1} parent=1 // pred_check_branch
      %43 = sbr.rel (0) target = $region33
    $region32: #{partial_vit_forward.1} parent=1 // pred_region
      _
    $region33: #{partial_vit_forward.1} parent=1 // pred_fallthru
      _
    // Predicated region
    $region34: #{partial_vit_forward.1} parent=1 // pred_check
      _
    $region35: #{partial_vit_forward.1} parent=1 // pred_check_branch
      %45 = sbr.rel (0) target = $region37
    $region36: #{partial_vit_forward.1} parent=1 // pred_region
      _
    $region37: #{partial_vit_forward.1} parent=1 // pred_fallthru
      _
    // Predicated region
    $region38: #{partial_vit_forward.1} parent=1 // pred_check
      _
    $region39: #{partial_vit_forward.1} parent=1 // pred_check_branch
      %47 = sbr.rel (0) target = $region41
    $region40: #{partial_vit_forward.1} parent=1 // pred_region
      _
    $region41: #{partial_vit_forward.1} parent=1 // pred_fallthru
      _
    // Predicated region
    $region42: #{partial_vit_forward.1} parent=1 // pred_check
      _
    $region43: #{partial_vit_forward.1} parent=1 // pred_check_branch
      %49 = sbr.rel (0) target = $region45
    $region44: #{partial_vit_forward.1} parent=1 // pred_region
      _
    $region45: #{partial_vit_forward.1} parent=1 // pred_fallthru
      _
    // Predicated region
    $region46: #{partial_vit_forward.1} parent=1 // pred_check
      _
    $region47: #{partial_vit_forward.1} parent=1 // pred_check_branch
      %51 = sbr.rel (0) target = $region49
    $region48: #{partial_vit_forward.1} parent=1 // pred_region
      _
    $region49: #{partial_vit_forward.1} parent=1 // pred_fallthru
      _
    // Predicated region
    $region50: #{partial_vit_forward.1} parent=1 // pred_check
      _
    $region51: #{partial_vit_forward.1} parent=1 // pred_check_branch
      %53 = sbr.rel (0) target = $region53
    $region52: #{partial_vit_forward.1} parent=1 // pred_region
      _
    $region53: #{partial_vit_forward.1} parent=1 // pred_fallthru
      _
    // Predicated region
    $region54: #{partial_vit_forward.1} parent=1 // pred_check
      _
    $region55: #{partial_vit_forward.1} parent=1 // pred_check_branch
      %55 = sbr.rel (0) target = $region57
    $region56: #{partial_vit_forward.1} parent=1 // pred_region
      _
    $region57: #{partial_vit_forward.1} parent=1 // pred_fallthru
      _
    // Predicated region
    $region58: #{partial_vit_forward.1} parent=1 // pred_check
      _
    $region59: #{partial_vit_forward.1} parent=1 // pred_check_branch
      %57 = sbr.rel (0) target = $region61
    $region60: #{partial_vit_forward.1} parent=1 // pred_region
      _
    $region61: #{partial_vit_forward.1} parent=1 // pred_fallthru
      _
    // Predicated region
    $region62: #{partial_vit_forward.1} parent=1 // pred_check
      _
    $region63: #{partial_vit_forward.1} parent=1 // pred_check_branch
      %59 = sbr.rel (0) target = $region65
    $region64: #{partial_vit_forward.1} parent=1 // pred_region
      _
    $region65: #{partial_vit_forward.1} parent=1 // pred_fallthru
      _
    // Predicated region
    $region66: #{partial_vit_forward.1} parent=1 // pred_check
      _
    $region67: #{partial_vit_forward.1} parent=1 // pred_check_branch
      %61 = sbr.rel (0) target = $region69
    $region68: #{partial_vit_forward.1} parent=1 // pred_region
      _
    $region69: #{partial_vit_forward.1} parent=1 // pred_fallthru
      _
    // Predicated region
    $region70: #{partial_vit_forward.1} parent=1 // pred_check
      _
    $region71: #{partial_vit_forward.1} parent=1 // pred_check_branch
      %63 = sbr.rel (0) target = $region73
    $region72: #{partial_vit_forward.1} parent=1 // pred_region
      _
    $region73: #{partial_vit_forward.1} parent=1 // pred_fallthru
      _
    // Predicated region
    $region74: #{partial_vit_forward.1} parent=1 // pred_check
      _
    $region75: #{partial_vit_forward.1} parent=1 // pred_check_branch
      %65 = sbr.rel (0) target = $region77
    $region76: #{partial_vit_forward.1} parent=1 // pred_region
      _
    $region77: #{partial_vit_forward.1} parent=1 // pred_fallthru
      _
    // Predicated region
    $region78: #{partial_vit_forward.1} parent=1 // pred_check
      _
    $region79: #{partial_vit_forward.1} parent=1 // pred_check_branch
      %67 = sbr.rel (0) target = $region81
    $region80: #{partial_vit_forward.1} parent=1 // pred_region
      _
    $region81: #{partial_vit_forward.1} parent=1 // pred_fallthru
      _
    // Predicated region
    $region82: #{partial_vit_forward.1} parent=1 // pred_check
      _
    $region83: #{partial_vit_forward.1} parent=1 // pred_check_branch
      %69 = sbr.rel (0) target = $region85
    $region84: #{partial_vit_forward.1} parent=1 // pred_region
      _
    $region85: #{partial_vit_forward.1} parent=1 // pred_fallthru
      _
    // Predicated region
    $region86: #{partial_vit_forward.1} parent=1 // pred_check
      _
    $region87: #{partial_vit_forward.1} parent=1 // pred_check_branch
      %71 = sbr.rel (0) target = $region89
    $region88: #{partial_vit_forward.1} parent=1 // pred_region
      _
    $region89: #{partial_vit_forward.1} parent=1 // pred_fallthru
      _
    %v73 = vld [vmem:[%s0] sm:$0xff]
    %v74 = vld [vmem:[%s0 + $0x8] sm:$0xff]
    %v75 = vld [vmem:[%s0 + $0x10] sm:$0xff]
    %v76 = vld [vmem:[%s0 + $0x18] sm:$0xff]
    %v77 = vld [vmem:[%s1] sm:$0xff]
    %v78 = vld [vmem:[%s1 + $0x8] sm:$0xff]
    %v79 = vld [vmem:[%s1 + $0x10] sm:$0xff]
    %v80 = vld [vmem:[%s1 + $0x18] sm:$0xff]
    %v81 = vld [vmem:[%s1 + $0x20] sm:$0xff]
    %v82 = vld [vmem:[%s1 + $0x28] sm:$0xff]
    %vm83 = vcmask 392192
    %v85 = vsel %vm83, %v73, 0
    %v88 = vsel %vm83, %v74, 0
    %v91 = vsel %vm83, %v75, 0
    %v94 = vsel %vm83, %v76, 0
    %96 = vmatpush.msra.mxu0 0.0
    %97 = vmatpush.msra.mxu0 0.0
    %98 = vmatpush.msra.mxu0 0.0
    %99 = vmatpush.msra.mxu0 0.0
    %100 = vmatpush.msra.mxu0 0.0
    %101 = vmatpush.msra.mxu0 0.0
    %102 = vmatpush.msra.mxu0 0.0
    %103 = vmatpush.msra.mxu0 0.0
    %104 = vmatpush.msra.mxu0 0.0
    %105 = vmatpush.msra.mxu0 0.0
    %106 = vmatpush.msra.mxu0 %v82
    %107 = vmatpush.msra.mxu0 %v81
    %108 = vmatpush.msra.mxu0 %v80
    %109 = vmatpush.msra.mxu0 %v79
    %110 = vmatpush.msra.mxu0 %v78
    %111 = vmatpush.msra.mxu0 %v77
    %112 = vmatmul.f32.gmra.mxu0 %v85
    %v113 = vpop.f32.mrf.mxu0
    %v114 = vadd.f32 0.0, %v113
    %115 = vmatmul.f32.gmra.mxu0 %v88
    %v116 = vpop.f32.mrf.mxu0
    %v117 = vadd.f32 0.0, %v116
    %118 = vmatmul.f32.gmra.mxu0 %v91
    %v119 = vpop.f32.mrf.mxu0
    %v120 = vadd.f32 0.0, %v119
    %121 = vmatmul.f32.gmra.mxu0 %v94
    %v122 = vpop.f32.mrf.mxu0
    %v123 = vadd.f32 0.0, %v122
    %124 = vdwg.mxu0
    %v125 = vld [vmem:[%s4] sm:$0xff]
    %v126 = vld [vmem:[%s4 + $0x8] sm:$0xff]
    %vm127 = vcmask 261120
    %128 = vst.msk [vmem:[#allocation2] sm:$0xff] %vm127, 0.0
    %129 = vst.msk [vmem:[#allocation2 + $0x8] sm:$0xff] %vm127, 0.0
    %130 = vst.msk [vmem:[#allocation2 + $0x10] sm:$0xff] %vm127, 0.0
    %131 = vst.msk [vmem:[#allocation2 + $0x18] sm:$0xff] %vm127, 0.0
    %132 = vst.msk [vmem:[#allocation2 + $0x20] sm:$0xff] %vm127, 0.0
    %v133 = vadd.f32 %v114, %v125
    %v134 = vadd.f32 %v117, %v126
    %135 = vst.msk [vmem:[#allocation2] sm:$0xff] %vm127, %v133
    %136 = vst.msk [vmem:[#allocation2 + $0x8] sm:$0xff] %vm127, %v134
    %v137 = vadd.f32 %v120, %v125
    %v138 = vadd.f32 %v123, %v126
    %139 = vst.msk [vmem:[#allocation2 + $0x10] sm:$0xff] %vm127, %v137
    %140 = vst.msk [vmem:[#allocation2 + $0x18] sm:$0xff] %vm127, %v138
    %v141 = vld [vmem:[%s2] sm:$0x1]
    %v142 = vld [vmem:[%s3] sm:$0x1]
    %v143 = vadd.f32 %v141, %v142
    %v145 = vperm.slane %v143, 0
    %vm147 = vcmask 254976
    %148 = vst.msk [vmem:[#allocation2 + $0x20] sm:$0x3] %vm147, %v145
    %v149 = vld [vmem:[#allocation2] sm:$0xff]
    %v150 = vld [vmem:[#allocation2 + $0x8] sm:$0xff]
    %v151 = vld [vmem:[#allocation2 + $0x10] sm:$0xff]
    %v152 = vld [vmem:[#allocation2 + $0x18] sm:$0xff]
    %v153 = vld [vmem:[#allocation2 + $0x20] sm:$0xff]
    %v154 = vld [vmem:[%s5] sm:$0x1]
    %v155 = vld [vmem:[%s6] sm:$0x1]
    %v156 = vsel %vm127, %v149, 0.0
    %157 = vadd.xlane.f32.xlu0 %v156
    %v158 = vpop.xlane.xlu0 %157
    %v159 = vsel %vm127, %v150, 0.0
    %160 = vadd.xlane.f32.xlu0 %v159
    %v161 = vpop.xlane.xlu0 %160
    %v162 = vsel %vm127, %v151, 0.0
    %163 = vadd.xlane.f32.xlu0 %v162
    %v164 = vpop.xlane.xlu0 %163
    %v165 = vsel %vm127, %v152, 0.0
    %166 = vadd.xlane.f32.xlu0 %v165
    %v167 = vpop.xlane.xlu0 %166
    %v168 = vsel %vm127, %v153, 0.0
    %169 = vadd.xlane.f32.xlu0 %v168
    %v170 = vpop.xlane.xlu0 %169
    %v171 = vmul.f32 %v149, %v149
    %v172 = vmul.f32 %v150, %v150
    %v173 = vmul.f32 %v151, %v151
    %v174 = vmul.f32 %v152, %v152
    %v175 = vmul.f32 %v153, %v153
    %v176 = vsel %vm127, %v171, 0.0
    %177 = vadd.xlane.f32.xlu0 %v176
    %v178 = vpop.xlane.xlu0 %177
    %v179 = vsel %vm127, %v172, 0.0
    %180 = vadd.xlane.f32.xlu0 %v179
    %v181 = vpop.xlane.xlu0 %180
    %v182 = vsel %vm127, %v173, 0.0
    %183 = vadd.xlane.f32.xlu0 %v182
    %v184 = vpop.xlane.xlu0 %183
    %v185 = vsel %vm127, %v174, 0.0
    %186 = vadd.xlane.f32.xlu0 %v185
    %v187 = vpop.xlane.xlu0 %186
    %v188 = vsel %vm127, %v175, 0.0
    %189 = vadd.xlane.f32.xlu0 %v188
    %v190 = vpop.xlane.xlu0 %189
    %v191 = vmul.f32 %v158, 0.03125
    %v192 = vmul.f32 %v161, 0.03125
    %v193 = vmul.f32 %v164, 0.03125
    %v194 = vmul.f32 %v167, 0.03125
    %v195 = vmul.f32 %v170, 0.03125
    %v196 = vmul.f32 %v178, 0.03125
    %v197 = vmul.f32 %v181, 0.03125
    %v198 = vmul.f32 %v184, 0.03125
    %v199 = vmul.f32 %v187, 0.03125
    %v200 = vmul.f32 %v190, 0.03125
    %v201 = vmul.f32 %v191, %v191
    %v202 = vmul.f32 %v192, %v192
    %v203 = vmul.f32 %v193, %v193
    %v204 = vmul.f32 %v194, %v194
    %v205 = vmul.f32 %v195, %v195
    %v206 = vsub.f32 %v196, %v201
    %v207 = vsub.f32 %v197, %v202
    %v208 = vsub.f32 %v198, %v203
    %v209 = vsub.f32 %v199, %v204
    %v210 = vsub.f32 %v200, %v205
    %v211 = vmax.f32 %v206, 0.0
    %v212 = vmax.f32 %v207, 0.0
    %v213 = vmax.f32 %v208, 0.0
    %v214 = vmax.f32 %v209, 0.0
    %v215 = vmax.f32 %v210, 0.0
    %v216 = vsub.f32 %v149, %v191
    %v217 = vsub.f32 %v150, %v192
    %v218 = vsub.f32 %v151, %v193
    %v219 = vsub.f32 %v152, %v194
    %v220 = vsub.f32 %v153, %v195
    %v221 = vadd.f32 %v211, 1e-05
    %v222 = vadd.f32 %v212, 1e-05
    %v223 = vadd.f32 %v213, 1e-05
    %v224 = vadd.f32 %v214, 1e-05
    %v225 = vadd.f32 %v215, 1e-05
    %v226 = vrsqrt.pop %v221
    %v227 = vmul.f32 %v226, %v221
    %v228 = vmul.f32 %v227, %v226
    %v229 = vmul.f32 0.5, %v228
    %v230 = vsub.f32 1.5, %v229
    %v231 = vmul.f32 %v226, %v230
    %vm232 = vweird.f32 %v221
    %vm233 = vweird.f32 %v226
    %vm234 = vmor %vm232, %vm233
    %v235 = vsel %vm234, %v226, %v231
    %v236 = vrsqrt.pop %v222
    %v237 = vmul.f32 %v236, %v222
    %v238 = vmul.f32 %v237, %v236
    %v239 = vmul.f32 0.5, %v238
    %v240 = vsub.f32 1.5, %v239
    %v241 = vmul.f32 %v236, %v240
    %vm242 = vweird.f32 %v222
    %vm243 = vweird.f32 %v236
    %vm244 = vmor %vm242, %vm243
    %v245 = vsel %vm244, %v236, %v241
    %v246 = vrsqrt.pop %v223
    %v247 = vmul.f32 %v246, %v223
    %v248 = vmul.f32 %v247, %v246
    %v249 = vmul.f32 0.5, %v248
    %v250 = vsub.f32 1.5, %v249
    %v251 = vmul.f32 %v246, %v250
    %vm252 = vweird.f32 %v223
    %vm253 = vweird.f32 %v246
    %vm254 = vmor %vm252, %vm253
    %v255 = vsel %vm254, %v246, %v251
    %v256 = vrsqrt.pop %v224
    %v257 = vmul.f32 %v256, %v224
    %v258 = vmul.f32 %v257, %v256
    %v259 = vmul.f32 0.5, %v258
    %v260 = vsub.f32 1.5, %v259
    %v261 = vmul.f32 %v256, %v260
    %vm262 = vweird.f32 %v224
    %vm263 = vweird.f32 %v256
    %vm264 = vmor %vm262, %vm263
    %v265 = vsel %vm264, %v256, %v261
    %v266 = vrsqrt.pop %v225
    %v267 = vmul.f32 %v266, %v225
    %v268 = vmul.f32 %v267, %v266
    %v269 = vmul.f32 0.5, %v268
    %v270 = vsub.f32 1.5, %v269
    %v271 = vmul.f32 %v266, %v270
    %vm272 = vweird.f32 %v225
    %vm273 = vweird.f32 %v266
    %vm274 = vmor %vm272, %vm273
    %v275 = vsel %vm274, %v266, %v271
    %v276 = vmul.f32 %v216, %v235
    %v277 = vmul.f32 %v217, %v245
    %v278 = vmul.f32 %v218, %v255
    %v279 = vmul.f32 %v219, %v265
    %v280 = vmul.f32 %v220, %v275
    %v282 = vperm.slane %v154, 0
    %v284 = vmul.f32 %v276, %v282
    %v285 = vmul.f32 %v277, %v282
    %v286 = vmul.f32 %v278, %v282
    %v287 = vmul.f32 %v279, %v282
    %v288 = vmul.f32 %v280, %v282
    %v290 = vperm.slane %v155, 0
    %v292 = vadd.f32 %v284, %v290
    %v293 = vadd.f32 %v285, %v290
    %v294 = vadd.f32 %v286, %v290
    %v295 = vadd.f32 %v287, %v290
    %v296 = vadd.f32 %v288, %v290
    %v297 = vlaneseq
    %v298 = vshrl.u32 %v297, 7
    %v299 = vadd.s32 %v298, 8
    %v300 = vadd.s32 %v298, 16
    %v301 = vadd.s32 %v298, 24
    %v302 = vadd.s32 %v298, 32
    %v303 = vlaneseq
    %v304 = vand.u32 %v303, 127
    %vm305 = vcmp.ge.s32.totalorder %v298, 0
    %vm306 = vcmp.ge.s32.totalorder %v299, 0
    %vm307 = vcmp.ge.s32.totalorder %v300, 0
    %vm308 = vcmp.ge.s32.totalorder %v301, 0
    %vm309 = vcmp.ge.s32.totalorder %v302, 0
    %vm310 = vcmp.lt.s32.totalorder %v298, 16
    %vm311 = vcmp.lt.s32.totalorder %v299, 16
    %vm312 = vcmp.lt.s32.totalorder %v300, 16
    %vm313 = vcmp.lt.s32.totalorder %v301, 16
    %vm314 = vcmp.lt.s32.totalorder %v302, 16
    %vm315 = vmand %vm305, %vm310
    %vm316 = vmand %vm306, %vm311
    %vm317 = vmand %vm307, %vm312
    %vm318 = vmand %vm308, %vm313
    %vm319 = vmand %vm309, %vm314
    %v320 = vsel %vm315, 0, 2
    %v321 = vsel %vm316, 0, 2
    %v322 = vsel %vm317, 0, 2
    %v323 = vsel %vm318, 0, 2
    %v324 = vsel %vm319, 0, 2
    %vm325 = vcmp.eq.s32.totalorder %v298, 32
    %vm326 = vcmp.eq.s32.totalorder %v299, 32
    %vm327 = vcmp.eq.s32.totalorder %v300, 32
    %vm328 = vcmp.eq.s32.totalorder %v301, 32
    %vm329 = vcmp.eq.s32.totalorder %v302, 32
    %v330 = vsel %vm325, 0, %v320
    %v331 = vsel %vm326, 0, %v321
    %v332 = vsel %vm327, 0, %v322
    %v333 = vsel %vm328, 0, %v323
    %v334 = vsel %vm329, 0, %v324
    %vm335 = vcmp.ge.s32.totalorder %v298, 16
    %vm336 = vcmp.ge.s32.totalorder %v299, 16
    %vm337 = vcmp.ge.s32.totalorder %v300, 16
    %vm338 = vcmp.ge.s32.totalorder %v301, 16
    %vm339 = vcmp.ge.s32.totalorder %v302, 16
    %vm340 = vcmp.lt.s32.totalorder %v298, 32
    %vm341 = vcmp.lt.s32.totalorder %v299, 32
    %vm342 = vcmp.lt.s32.totalorder %v300, 32
    %vm343 = vcmp.lt.s32.totalorder %v301, 32
    %vm344 = vcmp.lt.s32.totalorder %v302, 32
    %vm345 = vmand %vm335, %vm340
    %vm346 = vmand %vm336, %vm341
    %vm347 = vmand %vm337, %vm342
    %vm348 = vmand %vm338, %vm343
    %vm349 = vmand %vm339, %vm344
    %v350 = vsel %vm345, 1, %v330
    %v351 = vsel %vm346, 1, %v331
    %v352 = vsel %vm347, 1, %v332
    %v353 = vsel %vm348, 1, %v333
    %v354 = vsel %vm349, 1, %v334
    %vm355 = vcmp.eq.s32.totalorder %v298, 33
    %vm356 = vcmp.eq.s32.totalorder %v299, 33
    %vm357 = vcmp.eq.s32.totalorder %v300, 33
    %vm358 = vcmp.eq.s32.totalorder %v301, 33
    %vm359 = vcmp.eq.s32.totalorder %v302, 33
    %v360 = vsel %vm355, 1, %v350
    %v361 = vsel %vm356, 1, %v351
    %v362 = vsel %vm357, 1, %v352
    %v363 = vsel %vm358, 1, %v353
    %v364 = vsel %vm359, 1, %v354
    %vm365 = vcmp.ge.s32.totalorder %v304, 0
    %vm366 = vcmp.lt.s32.totalorder %v304, 16
    %vm367 = vmand %vm365, %vm366
    %v368 = vsel %vm367, 0, 2
    %vm369 = vcmp.eq.s32.totalorder %v304, 32
    %v370 = vsel %vm369, 0, %v368
    %vm371 = vcmp.ge.s32.totalorder %v304, 16
    %vm372 = vcmp.lt.s32.totalorder %v304, 32
    %vm373 = vmand %vm371, %vm372
    %v374 = vsel %vm373, 1, %v370
    %vm375 = vcmp.eq.s32.totalorder %v304, 33
    %v376 = vsel %vm375, 1, %v374
    %vm377 = vcmp.eq.s32.totalorder %v360, %v376
    %vm378 = vcmp.eq.s32.totalorder %v361, %v376
    %vm379 = vcmp.eq.s32.totalorder %v362, %v376
    %vm380 = vcmp.eq.s32.totalorder %v363, %v376
    %vm381 = vcmp.eq.s32.totalorder %v364, %v376
    %v382 = vsel %vm377, 0.0, -1e+30
    %v383 = vsel %vm378, 0.0, -1e+30
    %v384 = vsel %vm379, 0.0, -1e+30
    %v385 = vsel %vm380, 0.0, -1e+30
    %v386 = vsel %vm381, 0.0, -1e+30
    %v387 = vld [vmem:[%s7] sm:$0x1]
    %v388 = vld [vmem:[%s8] sm:$0x1]
    %v389 = vsel %vm127, %v292, 0.0
    %390 = vadd.xlane.f32.xlu0 %v389
    %v391 = vpop.xlane.xlu0 %390
    %v392 = vsel %vm127, %v293, 0.0
    %393 = vadd.xlane.f32.xlu0 %v392
    %v394 = vpop.xlane.xlu0 %393
    %v395 = vsel %vm127, %v294, 0.0
    %396 = vadd.xlane.f32.xlu0 %v395
    %v397 = vpop.xlane.xlu0 %396
    %v398 = vsel %vm127, %v295, 0.0
    %399 = vadd.xlane.f32.xlu0 %v398
    %v400 = vpop.xlane.xlu0 %399
    %v401 = vsel %vm127, %v296, 0.0
    %402 = vadd.xlane.f32.xlu0 %v401
    %v403 = vpop.xlane.xlu0 %402
    %v404 = vmul.f32 %v292, %v292
    %v405 = vmul.f32 %v293, %v293
    %v406 = vmul.f32 %v294, %v294
    %v407 = vmul.f32 %v295, %v295
    %v408 = vmul.f32 %v296, %v296
    %v409 = vsel %vm127, %v404, 0.0
    %410 = vadd.xlane.f32.xlu0 %v409
    %v411 = vpop.xlane.xlu0 %410
    %v412 = vsel %vm127, %v405, 0.0
    %413 = vadd.xlane.f32.xlu0 %v412
    %v414 = vpop.xlane.xlu0 %413
    %v415 = vsel %vm127, %v406, 0.0
    %416 = vadd.xlane.f32.xlu0 %v415
    %v417 = vpop.xlane.xlu0 %416
    %v418 = vsel %vm127, %v407, 0.0
    %419 = vadd.xlane.f32.xlu0 %v418
    %v420 = vpop.xlane.xlu0 %419
    %v421 = vsel %vm127, %v408, 0.0
    %422 = vadd.xlane.f32.xlu0 %v421
    %v423 = vpop.xlane.xlu0 %422
    %v424 = vmul.f32 %v391, 0.03125
    %v425 = vmul.f32 %v394, 0.03125
    %v426 = vmul.f32 %v397, 0.03125
    %v427 = vmul.f32 %v400, 0.03125
    %v428 = vmul.f32 %v403, 0.03125
    %v429 = vmul.f32 %v411, 0.03125
    %v430 = vmul.f32 %v414, 0.03125
    %v431 = vmul.f32 %v417, 0.03125
    %v432 = vmul.f32 %v420, 0.03125
    %v433 = vmul.f32 %v423, 0.03125
    %v434 = vmul.f32 %v424, %v424
    %v435 = vmul.f32 %v425, %v425
    %v436 = vmul.f32 %v426, %v426
    %v437 = vmul.f32 %v427, %v427
    %v438 = vmul.f32 %v428, %v428
    %v439 = vsub.f32 %v429, %v434
    %v440 = vsub.f32 %v430, %v435
    %v441 = vsub.f32 %v431, %v436
    %v442 = vsub.f32 %v432, %v437
    %v443 = vsub.f32 %v433, %v438
    %v444 = vmax.f32 %v439, 0.0
    %v445 = vmax.f32 %v440, 0.0
    %v446 = vmax.f32 %v441, 0.0
    %v447 = vmax.f32 %v442, 0.0
    %v448 = vmax.f32 %v443, 0.0
    %v449 = vsub.f32 %v292, %v424
    %v450 = vsub.f32 %v293, %v425
    %v451 = vsub.f32 %v294, %v426
    %v452 = vsub.f32 %v295, %v427
    %v453 = vsub.f32 %v296, %v428
    %v454 = vadd.f32 %v444, 1e-05
    %v455 = vadd.f32 %v445, 1e-05
    %v456 = vadd.f32 %v446, 1e-05
    %v457 = vadd.f32 %v447, 1e-05
    %v458 = vadd.f32 %v448, 1e-05
    %v459 = vrsqrt.pop %v454
    %v460 = vmul.f32 %v459, %v454
    %v461 = vmul.f32 %v460, %v459
    %v462 = vmul.f32 0.5, %v461
    %v463 = vsub.f32 1.5, %v462
    %v464 = vmul.f32 %v459, %v463
    %vm465 = vweird.f32 %v454
    %vm466 = vweird.f32 %v459
    %vm467 = vmor %vm465, %vm466
    %v468 = vsel %vm467, %v459, %v464
    %v469 = vrsqrt.pop %v455
    %v470 = vmul.f32 %v469, %v455
    %v471 = vmul.f32 %v470, %v469
    %v472 = vmul.f32 0.5, %v471
    %v473 = vsub.f32 1.5, %v472
    %v474 = vmul.f32 %v469, %v473
    %vm475 = vweird.f32 %v455
    %vm476 = vweird.f32 %v469
    %vm477 = vmor %vm475, %vm476
    %v478 = vsel %vm477, %v469, %v474
    %v479 = vrsqrt.pop %v456
    %v480 = vmul.f32 %v479, %v456
    %v481 = vmul.f32 %v480, %v479
    %v482 = vmul.f32 0.5, %v481
    %v483 = vsub.f32 1.5, %v482
    %v484 = vmul.f32 %v479, %v483
    %vm485 = vweird.f32 %v456
    %vm486 = vweird.f32 %v479
    %vm487 = vmor %vm485, %vm486
    %v488 = vsel %vm487, %v479, %v484
    %v489 = vrsqrt.pop %v457
    %v490 = vmul.f32 %v489, %v457
    %v491 = vmul.f32 %v490, %v489
    %v492 = vmul.f32 0.5, %v491
    %v493 = vsub.f32 1.5, %v492
    %v494 = vmul.f32 %v489, %v493
    %vm495 = vweird.f32 %v457
    %vm496 = vweird.f32 %v489
    %vm497 = vmor %vm495, %vm496
    %v498 = vsel %vm497, %v489, %v494
    %v499 = vrsqrt.pop %v458
    %v500 = vmul.f32 %v499, %v458
    %v501 = vmul.f32 %v500, %v499
    %v502 = vmul.f32 0.5, %v501
    %v503 = vsub.f32 1.5, %v502
    %v504 = vmul.f32 %v499, %v503
    %vm505 = vweird.f32 %v458
    %vm506 = vweird.f32 %v499
    %vm507 = vmor %vm505, %vm506
    %v508 = vsel %vm507, %v499, %v504
    %v509 = vmul.f32 %v449, %v468
    %v510 = vmul.f32 %v450, %v478
    %v511 = vmul.f32 %v451, %v488
    %v512 = vmul.f32 %v452, %v498
    %v513 = vmul.f32 %v453, %v508
    %v515 = vperm.slane %v387, 0
    %v517 = vmul.f32 %v509, %v515
    %v518 = vmul.f32 %v510, %v515
    %v519 = vmul.f32 %v511, %v515
    %v520 = vmul.f32 %v512, %v515
    %v521 = vmul.f32 %v513, %v515
    %v523 = vperm.slane %v388, 0
    %v525 = vadd.f32 %v517, %v523
    %v526 = vadd.f32 %v518, %v523
    %v527 = vadd.f32 %v519, %v523
    %v528 = vadd.f32 %v520, %v523
    %v529 = vadd.f32 %v521, %v523
    %v530 = vpack.c.bf16 %v526, %v525
    %v531 = vpack.c.bf16 %v528, %v527
    %v532 = vpack.c.bf16 %v529, %v529
    %v533 = vld [vmem:[%s9] sm:$0xf]
    %v534 = vld [vmem:[%s9 + $0x4] sm:$0xf]
    %v535 = vld [vmem:[%s9 + $0x8] sm:$0xf]
    %v536 = vld [vmem:[%s9 + $0xc] sm:$0xf]
    %v537 = vld [vmem:[%s10] sm:$0x1]
    %v539 = vperm.slane %v537, 0
    %v545 = vunpack.c.l.b16 %v533
    %v546 = vunpack.c.l.b16 %v534
    %v547 = vunpack.c.l.b16 %v535
    %v548 = vunpack.c.l.b16 %v536
    %v549 = vpack.c.b16 %v546, %v545
    %v550 = vpack.c.b16 %v548, %v547
    %v554 = vsel %vm127, %v530, 0
    %v557 = vsel %vm127, %v531, 0
    %v560 = vsel %vm127, %v532, 0
    %562 = vmatpush.bf16.msra.mxu0 0
    %563 = vmatpush.bf16.msra.mxu0 0
    %564 = vmatpush.bf16.msra.mxu0 0
    %565 = vmatpush.bf16.msra.mxu0 0
    %566 = vmatpush.bf16.msra.mxu0 0
    %567 = vmatpush.bf16.msra.mxu0 0
    %568 = vmatpush.bf16.msra.mxu0 %v550
    %569 = vmatpush.bf16.msra.mxu0 %v549
    %570 = vmatmul.bf16.gmra.mxu0 %v554
    %v571 = vpop.f32.mrf.mxu0
    %v572 = vadd.f32 %v539, %v571
    %v573 = vpop.f32.mrf.mxu0
    %v574 = vadd.f32 %v539, %v573
    %575 = vmatmul.bf16.gmra.mxu0 %v557
    %v576 = vpop.f32.mrf.mxu0
    %v577 = vadd.f32 %v539, %v576
    %v578 = vpop.f32.mrf.mxu0
    %v579 = vadd.f32 %v539, %v578
    %580 = vmatmul.bf16.gmra.mxu0 %v560
    %v581 = vpop.f32.mrf.mxu0
    %v582 = vadd.f32 %v539, %v581
    %v583 = vpop.f32.mrf.mxu0
    %584 = vdwg.mxu0
    %v585 = vmul.f32 %v572, 0.35355338
    %v586 = vmul.f32 %v574, 0.35355338
    %v587 = vmul.f32 %v577, 0.35355338
    %v588 = vmul.f32 %v579, 0.35355338
    %v589 = vmul.f32 %v582, 0.35355338
    %v590 = vpack.c.bf16 %v586, %v585
    %v591 = vpack.c.bf16 %v588, %v587
    %v592 = vpack.c.bf16 %v589, %v589
    %v593 = vpack.c.bf16 %v574, %v572
    %v594 = vpack.c.bf16 %v579, %v577
    %v595 = vpack.c.bf16 %v582, %v582
    %599 = vrot.lane.b32.xlu0 %v593, 96
    %v600 = vpop.permute.xlu0 %599
    %601 = vrot.lane.b32.xlu0 %v594, 96
    %v602 = vpop.permute.xlu0 %601
    %603 = vrot.lane.b32.xlu0 %v595, 96
    %v604 = vpop.permute.xlu0 %603
    %vm605 = vcmask 64512
    %v607 = vsel %vm605, %v590, 0
    %v610 = vsel %vm605, %v591, 0
    %v613 = vsel %vm605, %v592, 0
    %v616 = vsel %vm605, %v600, 0
    %v619 = vsel %vm605, %v602, 0
    %v622 = vsel %vm605, %v604, 0
    %624 = vmatpush.bf16.xpose.msra.mxu0 0
    %625 = vmatpush.bf16.xpose.msra.mxu0 0
    %626 = vmatpush.bf16.xpose.msra.mxu0 0
    %627 = vmatpush.bf16.xpose.msra.mxu0 0
    %628 = vmatpush.bf16.xpose.msra.mxu0 0
    %629 = vmatpush.bf16.xpose.msra.mxu0 %v622
    %630 = vmatpush.bf16.xpose.msra.mxu0 %v619
    %631 = vmatpush.bf16.xpose.msra.mxu0 %v616
    %632 = vmatmul.bf16.gmra.mxu0 %v607
    %v633 = vpop.f32.mrf.mxu0
    %v634 = vadd.f32 %v382, %v633
    %v635 = vpop.f32.mrf.mxu0
    %v636 = vadd.f32 %v383, %v635
    %637 = vmatmul.bf16.gmra.mxu0 %v610
    %v638 = vpop.f32.mrf.mxu0
    %v639 = vadd.f32 %v384, %v638
    %v640 = vpop.f32.mrf.mxu0
    %v641 = vadd.f32 %v385, %v640
    %642 = vmatmul.bf16.gmra.mxu0 %v613
    %v643 = vpop.f32.mrf.mxu0
    %v644 = vadd.f32 %v386, %v643
    %v645 = vpop.f32.mrf.mxu0
    %646 = vdwg.mxu0
    %v647 = vmul.f32 %v634, 1.442695
    %v648 = vpow.pop %v647
    %v649 = vmul.f32 %v636, 1.442695
    %v650 = vpow.pop %v649
    %v651 = vmul.f32 %v639, 1.442695
    %v652 = vpow.pop %v651
    %v653 = vmul.f32 %v641, 1.442695
    %v654 = vpow.pop %v653
    %v655 = vmul.f32 %v644, 1.442695
    %v656 = vpow.pop %v655
    %vm657 = vcmask 326656
    %v658 = vsel %vm657, %v648, 0.0
    %659 = vadd.xlane.f32.xlu0 %v658
    %v660 = vpop.xlane.xlu0 %659
    %v661 = vsel %vm657, %v650, 0.0
    %662 = vadd.xlane.f32.xlu0 %v661
    %v663 = vpop.xlane.xlu0 %662
    %v664 = vsel %vm657, %v652, 0.0
    %665 = vadd.xlane.f32.xlu0 %v664
    %v666 = vpop.xlane.xlu0 %665
    %v667 = vsel %vm657, %v654, 0.0
    %668 = vadd.xlane.f32.xlu0 %v667
    %v669 = vpop.xlane.xlu0 %668
    %v670 = vsel %vm657, %v656, 0.0
    %671 = vadd.xlane.f32.xlu0 %v670
    %v672 = vpop.xlane.xlu0 %671
    %v673 = vrcp.pop %v660
    %v674 = vrcp.pop %v663
    %v675 = vrcp.pop %v666
    %v676 = vrcp.pop %v669
    %v677 = vrcp.pop %v672
    %v678 = vmul.f32 %v648, %v673
    %v679 = vmul.f32 %v650, %v674
    %v680 = vmul.f32 %v652, %v675
    %v681 = vmul.f32 %v654, %v676
    %v682 = vmul.f32 %v656, %v677
    %v683 = vpack.c.bf16 %v679, %v678
    %v684 = vpack.c.bf16 %v681, %v680
    %v685 = vpack.c.bf16 %v682, %v682
    %686 = vrot.lane.b32.xlu0 %v593, 64
    %v687 = vpop.permute.xlu0 %686
    %688 = vrot.lane.b32.xlu0 %v594, 64
    %v689 = vpop.permute.xlu0 %688
    %690 = vrot.lane.b32.xlu0 %v595, 64
    %v691 = vpop.permute.xlu0 %690
    %v695 = vsel %vm657, %v683, 0
    %v698 = vsel %vm657, %v684, 0
    %v701 = vsel %vm657, %v685, 0
    %vm703 = vcmask 1043456
    %v705 = vsel %vm703, %v691, 0
    %707 = vmatpush.bf16.msra.mxu0 0
    %708 = vmatpush.bf16.msra.mxu0 0
    %709 = vmatpush.bf16.msra.mxu0 0
    %710 = vmatpush.bf16.msra.mxu0 0
    %711 = vmatpush.bf16.msra.mxu0 0
    %712 = vmatpush.bf16.msra.mxu0 %v705
    %713 = vmatpush.bf16.msra.mxu0 %v689
    %714 = vmatpush.bf16.msra.mxu0 %v687
    %715 = vmatmul.bf16.gmra.mxu0 %v695
    %v716 = vpop.f32.mrf.mxu0
    %v717 = vadd.f32 0.0, %v716
    %v718 = vpop.f32.mrf.mxu0
    %v719 = vadd.f32 0.0, %v718
    %720 = vmatmul.bf16.gmra.mxu0 %v698
    %v721 = vpop.f32.mrf.mxu0
    %v722 = vadd.f32 0.0, %v721
    %v723 = vpop.f32.mrf.mxu0
    %v724 = vadd.f32 0.0, %v723
    %725 = vmatmul.bf16.gmra.mxu0 %v701
    %v726 = vpop.f32.mrf.mxu0
    %v727 = vadd.f32 0.0, %v726
    %v728 = vpop.f32.mrf.mxu0
    %729 = vdwg.mxu0
    %733 = vrot.lane.b32.xlu0 %v590, 120
    %v734 = vpop.permute.xlu0 %733
    %735 = vrot.lane.b32.xlu0 %v591, 120
    %v736 = vpop.permute.xlu0 %735
    %737 = vrot.lane.b32.xlu0 %v592, 120
    %v738 = vpop.permute.xlu0 %737
    %739 = vrot.lane.b32.xlu0 %v593, 88
    %v740 = vpop.permute.xlu0 %739
    %741 = vrot.lane.b32.xlu0 %v594, 88
    %v742 = vpop.permute.xlu0 %741
    %743 = vrot.lane.b32.xlu0 %v595, 88
    %v744 = vpop.permute.xlu0 %743
    %v746 = vsel %vm605, %v734, 0
    %v749 = vsel %vm605, %v736, 0
    %v752 = vsel %vm605, %v738, 0
    %v755 = vsel %vm605, %v740, 0
    %v758 = vsel %vm605, %v742, 0
    %v761 = vsel %vm605, %v744, 0
    %763 = vmatpush.bf16.xpose.msra.mxu0 0
    %764 = vmatpush.bf16.xpose.msra.mxu0 0
    %765 = vmatpush.bf16.xpose.msra.mxu0 0
    %766 = vmatpush.bf16.xpose.msra.mxu0 0
    %767 = vmatpush.bf16.xpose.msra.mxu0 0
    %768 = vmatpush.bf16.xpose.msra.mxu0 %v761
    %769 = vmatpush.bf16.xpose.msra.mxu0 %v758
    %770 = vmatpush.bf16.xpose.msra.mxu0 %v755
    %771 = vmatmul.bf16.gmra.mxu0 %v746
    %v772 = vpop.f32.mrf.mxu0
    %v773 = vadd.f32 %v382, %v772
    %v774 = vpop.f32.mrf.mxu0
    %v775 = vadd.f32 %v383, %v774
    %776 = vmatmul.bf16.gmra.mxu0 %v749
    %v777 = vpop.f32.mrf.mxu0
    %v778 = vadd.f32 %v384, %v777
    %v779 = vpop.f32.mrf.mxu0
    %v780 = vadd.f32 %v385, %v779
    %781 = vmatmul.bf16.gmra.mxu0 %v752
    %v782 = vpop.f32.mrf.mxu0
    %v783 = vadd.f32 %v386, %v782
    %v784 = vpop.f32.mrf.mxu0
    %785 = vdwg.mxu0
    %v786 = vmul.f32 %v773, 1.442695
    %v787 = vpow.pop %v786
    %v788 = vmul.f32 %v775, 1.442695
    %v789 = vpow.pop %v788
    %v790 = vmul.f32 %v778, 1.442695
    %v791 = vpow.pop %v790
    %v792 = vmul.f32 %v780, 1.442695
    %v793 = vpow.pop %v792
    %v794 = vmul.f32 %v783, 1.442695
    %v795 = vpow.pop %v794
    %v796 = vsel %vm657, %v787, 0.0
    %797 = vadd.xlane.f32.xlu0 %v796
    %v798 = vpop.xlane.xlu0 %797
    %v799 = vsel %vm657, %v789, 0.0
    %800 = vadd.xlane.f32.xlu0 %v799
    %v801 = vpop.xlane.xlu0 %800
    %v802 = vsel %vm657, %v791, 0.0
    %803 = vadd.xlane.f32.xlu0 %v802
    %v804 = vpop.xlane.xlu0 %803
    %v805 = vsel %vm657, %v793, 0.0
    %806 = vadd.xlane.f32.xlu0 %v805
    %v807 = vpop.xlane.xlu0 %806
    %v808 = vsel %vm657, %v795, 0.0
    %809 = vadd.xlane.f32.xlu0 %v808
    %v810 = vpop.xlane.xlu0 %809
    %v811 = vrcp.pop %v798
    %v812 = vrcp.pop %v801
    %v813 = vrcp.pop %v804
    %v814 = vrcp.pop %v807
    %v815 = vrcp.pop %v810
    %v816 = vmul.f32 %v787, %v811
    %v817 = vmul.f32 %v789, %v812
    %v818 = vmul.f32 %v791, %v813
    %v819 = vmul.f32 %v793, %v814
    %v820 = vmul.f32 %v795, %v815
    %v821 = vpack.c.bf16 %v817, %v816
    %v822 = vpack.c.bf16 %v819, %v818
    %v823 = vpack.c.bf16 %v820, %v820
    %824 = vrot.lane.b32.xlu0 %v593, 56
    %v825 = vpop.permute.xlu0 %824
    %826 = vrot.lane.b32.xlu0 %v594, 56
    %v827 = vpop.permute.xlu0 %826
    %828 = vrot.lane.b32.xlu0 %v595, 56
    %v829 = vpop.permute.xlu0 %828
    %v833 = vsel %vm657, %v821, 0
    %v836 = vsel %vm657, %v822, 0
    %v839 = vsel %vm657, %v823, 0
    %v842 = vsel %vm703, %v829, 0
    %844 = vmatpush.bf16.msra.mxu0 0
    %845 = vmatpush.bf16.msra.mxu0 0
    %846 = vmatpush.bf16.msra.mxu0 0
    %847 = vmatpush.bf16.msra.mxu0 0
    %848 = vmatpush.bf16.msra.mxu0 0
    %849 = vmatpush.bf16.msra.mxu0 %v842
    %850 = vmatpush.bf16.msra.mxu0 %v827
    %851 = vmatpush.bf16.msra.mxu0 %v825
    %852 = vmatmul.bf16.gmra.mxu0 %v833
    %v853 = vpop.f32.mrf.mxu0
    %v854 = vadd.f32 0.0, %v853
    %v855 = vpop.f32.mrf.mxu0
    %v856 = vadd.f32 0.0, %v855
    %857 = vmatmul.bf16.gmra.mxu0 %v836
    %v858 = vpop.f32.mrf.mxu0
    %v859 = vadd.f32 0.0, %v858
    %v860 = vpop.f32.mrf.mxu0
    %v861 = vadd.f32 0.0, %v860
    %862 = vmatmul.bf16.gmra.mxu0 %v839
    %v863 = vpop.f32.mrf.mxu0
    %v864 = vadd.f32 0.0, %v863
    %v865 = vpop.f32.mrf.mxu0
    %866 = vdwg.mxu0
    %867 = vrot.lane.b32.xlu0 %v590, 112
    %v868 = vpop.permute.xlu0 %867
    %869 = vrot.lane.b32.xlu0 %v591, 112
    %v870 = vpop.permute.xlu0 %869
    %871 = vrot.lane.b32.xlu0 %v592, 112
    %v872 = vpop.permute.xlu0 %871
    %873 = vrot.lane.b32.xlu0 %v593, 80
    %v874 = vpop.permute.xlu0 %873
    %875 = vrot.lane.b32.xlu0 %v594, 80
    %v876 = vpop.permute.xlu0 %875
    %877 = vrot.lane.b32.xlu0 %v595, 80
    %v878 = vpop.permute.xlu0 %877
    %v880 = vsel %vm605, %v868, 0
    %v883 = vsel %vm605, %v870, 0
    %v886 = vsel %vm605, %v872, 0
    %v889 = vsel %vm605, %v874, 0
    %v892 = vsel %vm605, %v876, 0
    %v895 = vsel %vm605, %v878, 0
    %897 = vmatpush.bf16.xpose.msra.mxu0 0
    %898 = vmatpush.bf16.xpose.msra.mxu0 0
    %899 = vmatpush.bf16.xpose.msra.mxu0 0
    %900 = vmatpush.bf16.xpose.msra.mxu0 0
    %901 = vmatpush.bf16.xpose.msra.mxu0 0
    %902 = vmatpush.bf16.xpose.msra.mxu0 %v895
    %903 = vmatpush.bf16.xpose.msra.mxu0 %v892
    %904 = vmatpush.bf16.xpose.msra.mxu0 %v889
    %905 = vmatmul.bf16.gmra.mxu0 %v880
    %v906 = vpop.f32.mrf.mxu0
    %v907 = vadd.f32 %v382, %v906
    %v908 = vpop.f32.mrf.mxu0
    %v909 = vadd.f32 %v383, %v908
    %910 = vmatmul.bf16.gmra.mxu0 %v883
    %v911 = vpop.f32.mrf.mxu0
    %v912 = vadd.f32 %v384, %v911
    %v913 = vpop.f32.mrf.mxu0
    %v914 = vadd.f32 %v385, %v913
    %915 = vmatmul.bf16.gmra.mxu0 %v886
    %v916 = vpop.f32.mrf.mxu0
    %v917 = vadd.f32 %v386, %v916
    %v918 = vpop.f32.mrf.mxu0
    %919 = vdwg.mxu0
    %v920 = vmul.f32 %v907, 1.442695
    %v921 = vpow.pop %v920
    %v922 = vmul.f32 %v909, 1.442695
    %v923 = vpow.pop %v922
    %v924 = vmul.f32 %v912, 1.442695
    %v925 = vpow.pop %v924
    %v926 = vmul.f32 %v914, 1.442695
    %v927 = vpow.pop %v926
    %v928 = vmul.f32 %v917, 1.442695
    %v929 = vpow.pop %v928
    %v930 = vsel %vm657, %v921, 0.0
    %931 = vadd.xlane.f32.xlu0 %v930
    %v932 = vpop.xlane.xlu0 %931
    %v933 = vsel %vm657, %v923, 0.0
    %934 = vadd.xlane.f32.xlu0 %v933
    %v935 = vpop.xlane.xlu0 %934
    %v936 = vsel %vm657, %v925, 0.0
    %937 = vadd.xlane.f32.xlu0 %v936
    %v938 = vpop.xlane.xlu0 %937
    %v939 = vsel %vm657, %v927, 0.0
    %940 = vadd.xlane.f32.xlu0 %v939
    %v941 = vpop.xlane.xlu0 %940
    %v942 = vsel %vm657, %v929, 0.0
    %943 = vadd.xlane.f32.xlu0 %v942
    %v944 = vpop.xlane.xlu0 %943
    %v945 = vrcp.pop %v932
    %v946 = vrcp.pop %v935
    %v947 = vrcp.pop %v938
    %v948 = vrcp.pop %v941
    %v949 = vrcp.pop %v944
    %v950 = vmul.f32 %v921, %v945
    %v951 = vmul.f32 %v923, %v946
    %v952 = vmul.f32 %v925, %v947
    %v953 = vmul.f32 %v927, %v948
    %v954 = vmul.f32 %v929, %v949
    %v955 = vpack.c.bf16 %v951, %v950
    %v956 = vpack.c.bf16 %v953, %v952
    %v957 = vpack.c.bf16 %v954, %v954
    %958 = vrot.lane.b32.xlu0 %v593, 48
    %v959 = vpop.permute.xlu0 %958
    %960 = vrot.lane.b32.xlu0 %v594, 48
    %v961 = vpop.permute.xlu0 %960
    %962 = vrot.lane.b32.xlu0 %v595, 48
    %v963 = vpop.permute.xlu0 %962
    %v967 = vsel %vm657, %v955, 0
    %v970 = vsel %vm657, %v956, 0
    %v973 = vsel %vm657, %v957, 0
    %v976 = vsel %vm703, %v963, 0
    %978 = vmatpush.bf16.msra.mxu0 0
    %979 = vmatpush.bf16.msra.mxu0 0
    %980 = vmatpush.bf16.msra.mxu0 0
    %981 = vmatpush.bf16.msra.mxu0 0
    %982 = vmatpush.bf16.msra.mxu0 0
    %983 = vmatpush.bf16.msra.mxu0 %v976
    %984 = vmatpush.bf16.msra.mxu0 %v961
    %985 = vmatpush.bf16.msra.mxu0 %v959
    %986 = vmatmul.bf16.gmra.mxu0 %v967
    %v987 = vpop.f32.mrf.mxu0
    %v988 = vadd.f32 0.0, %v987
    %v989 = vpop.f32.mrf.mxu0
    %v990 = vadd.f32 0.0, %v989
    %991 = vmatmul.bf16.gmra.mxu0 %v970
    %v992 = vpop.f32.mrf.mxu0
    %v993 = vadd.f32 0.0, %v992
    %v994 = vpop.f32.mrf.mxu0
    %v995 = vadd.f32 0.0, %v994
    %996 = vmatmul.bf16.gmra.mxu0 %v973
    %v997 = vpop.f32.mrf.mxu0
    %v998 = vadd.f32 0.0, %v997
    %v999 = vpop.f32.mrf.mxu0
    %1000 = vdwg.mxu0
    %1001 = vrot.lane.b32.xlu0 %v590, 104
    %v1002 = vpop.permute.xlu0 %1001
    %1003 = vrot.lane.b32.xlu0 %v591, 104
    %v1004 = vpop.permute.xlu0 %1003
    %1005 = vrot.lane.b32.xlu0 %v592, 104
    %v1006 = vpop.permute.xlu0 %1005
    %1007 = vrot.lane.b32.xlu0 %v593, 72
    %v1008 = vpop.permute.xlu0 %1007
    %1009 = vrot.lane.b32.xlu0 %v594, 72
    %v1010 = vpop.permute.xlu0 %1009
    %1011 = vrot.lane.b32.xlu0 %v595, 72
    %v1012 = vpop.permute.xlu0 %1011
    %v1014 = vsel %vm605, %v1002, 0
    %v1017 = vsel %vm605, %v1004, 0
    %v1020 = vsel %vm605, %v1006, 0
    %v1023 = vsel %vm605, %v1008, 0
    %v1026 = vsel %vm605, %v1010, 0
    %v1029 = vsel %vm605, %v1012, 0
    %1031 = vmatpush.bf16.xpose.msra.mxu0 0
    %1032 = vmatpush.bf16.xpose.msra.mxu0 0
    %1033 = vmatpush.bf16.xpose.msra.mxu0 0
    %1034 = vmatpush.bf16.xpose.msra.mxu0 0
    %1035 = vmatpush.bf16.xpose.msra.mxu0 0
    %1036 = vmatpush.bf16.xpose.msra.mxu0 %v1029
    %1037 = vmatpush.bf16.xpose.msra.mxu0 %v1026
    %1038 = vmatpush.bf16.xpose.msra.mxu0 %v1023
    %1039 = vmatmul.bf16.gmra.mxu0 %v1014
    %v1040 = vpop.f32.mrf.mxu0
    %v1041 = vadd.f32 %v382, %v1040
    %v1042 = vpop.f32.mrf.mxu0
    %v1043 = vadd.f32 %v383, %v1042
    %1044 = vmatmul.bf16.gmra.mxu0 %v1017
    %v1045 = vpop.f32.mrf.mxu0
    %v1046 = vadd.f32 %v384, %v1045
    %v1047 = vpop.f32.mrf.mxu0
    %v1048 = vadd.f32 %v385, %v1047
    %1049 = vmatmul.bf16.gmra.mxu0 %v1020
    %v1050 = vpop.f32.mrf.mxu0
    %v1051 = vadd.f32 %v386, %v1050
    %v1052 = vpop.f32.mrf.mxu0
    %1053 = vdwg.mxu0
    %v1054 = vmul.f32 %v1041, 1.442695
    %v1055 = vpow.pop %v1054
    %v1056 = vmul.f32 %v1043, 1.442695
    %v1057 = vpow.pop %v1056
    %v1058 = vmul.f32 %v1046, 1.442695
    %v1059 = vpow.pop %v1058
    %v1060 = vmul.f32 %v1048, 1.442695
    %v1061 = vpow.pop %v1060
    %v1062 = vmul.f32 %v1051, 1.442695
    %v1063 = vpow.pop %v1062
    %v1064 = vsel %vm657, %v1055, 0.0
    %1065 = vadd.xlane.f32.xlu0 %v1064
    %v1066 = vpop.xlane.xlu0 %1065
    %v1067 = vsel %vm657, %v1057, 0.0
    %1068 = vadd.xlane.f32.xlu0 %v1067
    %v1069 = vpop.xlane.xlu0 %1068
    %v1070 = vsel %vm657, %v1059, 0.0
    %1071 = vadd.xlane.f32.xlu0 %v1070
    %v1072 = vpop.xlane.xlu0 %1071
    %v1073 = vsel %vm657, %v1061, 0.0
    %1074 = vadd.xlane.f32.xlu0 %v1073
    %v1075 = vpop.xlane.xlu0 %1074
    %v1076 = vsel %vm657, %v1063, 0.0
    %1077 = vadd.xlane.f32.xlu0 %v1076
    %v1078 = vpop.xlane.xlu0 %1077
    %v1079 = vrcp.pop %v1066
    %v1080 = vrcp.pop %v1069
    %v1081 = vrcp.pop %v1072
    %v1082 = vrcp.pop %v1075
    %v1083 = vrcp.pop %v1078
    %v1084 = vmul.f32 %v1055, %v1079
    %v1085 = vmul.f32 %v1057, %v1080
    %v1086 = vmul.f32 %v1059, %v1081
    %v1087 = vmul.f32 %v1061, %v1082
    %v1088 = vmul.f32 %v1063, %v1083
    %v1089 = vpack.c.bf16 %v1085, %v1084
    %v1090 = vpack.c.bf16 %v1087, %v1086
    %v1091 = vpack.c.bf16 %v1088, %v1088
    %1092 = vrot.lane.b32.xlu0 %v593, 40
    %v1093 = vpop.permute.xlu0 %1092
    %1094 = vrot.lane.b32.xlu0 %v594, 40
    %v1095 = vpop.permute.xlu0 %1094
    %1096 = vrot.lane.b32.xlu0 %v595, 40
    %v1097 = vpop.permute.xlu0 %1096
    %v1101 = vsel %vm657, %v1089, 0
    %v1104 = vsel %vm657, %v1090, 0
    %v1107 = vsel %vm657, %v1091, 0
    %v1110 = vsel %vm703, %v1097, 0
    %1112 = vmatpush.bf16.msra.mxu0 0
    %1113 = vmatpush.bf16.msra.mxu0 0
    %1114 = vmatpush.bf16.msra.mxu0 0
    %1115 = vmatpush.bf16.msra.mxu0 0
    %1116 = vmatpush.bf16.msra.mxu0 0
    %1117 = vmatpush.bf16.msra.mxu0 %v1110
    %1118 = vmatpush.bf16.msra.mxu0 %v1095
    %1119 = vmatpush.bf16.msra.mxu0 %v1093
    %1120 = vmatmul.bf16.gmra.mxu0 %v1101
    %v1121 = vpop.f32.mrf.mxu0
    %v1122 = vadd.f32 0.0, %v1121
    %v1123 = vpop.f32.mrf.mxu0
    %v1124 = vadd.f32 0.0, %v1123
    %1125 = vmatmul.bf16.gmra.mxu0 %v1104
    %v1126 = vpop.f32.mrf.mxu0
    %v1127 = vadd.f32 0.0, %v1126
    %v1128 = vpop.f32.mrf.mxu0
    %v1129 = vadd.f32 0.0, %v1128
    %1130 = vmatmul.bf16.gmra.mxu0 %v1107
    %v1131 = vpop.f32.mrf.mxu0
    %v1132 = vadd.f32 0.0, %v1131
    %v1133 = vpop.f32.mrf.mxu0
    %1134 = vdwg.mxu0
    %1140 = vrot.lane.b32.xlu0 %v854, 8
    %v1141 = vpop.permute.xlu0 %1140
    %1142 = vrot.lane.b32.xlu0 %v856, 8
    %v1143 = vpop.permute.xlu0 %1142
    %1144 = vrot.lane.b32.xlu0 %v859, 8
    %v1145 = vpop.permute.xlu0 %1144
    %1146 = vrot.lane.b32.xlu0 %v861, 8
    %v1147 = vpop.permute.xlu0 %1146
    %1148 = vrot.lane.b32.xlu0 %v864, 8
    %v1149 = vpop.permute.xlu0 %1148
    %1160 = vrot.lane.b32.xlu0 %v988, 16
    %v1161 = vpop.permute.xlu0 %1160
    %1162 = vrot.lane.b32.xlu0 %v990, 16
    %v1163 = vpop.permute.xlu0 %1162
    %1164 = vrot.lane.b32.xlu0 %v993, 16
    %v1165 = vpop.permute.xlu0 %1164
    %1166 = vrot.lane.b32.xlu0 %v995, 16
    %v1167 = vpop.permute.xlu0 %1166
    %1168 = vrot.lane.b32.xlu0 %v998, 16
    %v1169 = vpop.permute.xlu0 %1168
    %1180 = vrot.lane.b32.xlu0 %v1122, 24
    %v1181 = vpop.permute.xlu0 %1180
    %1182 = vrot.lane.b32.xlu0 %v1124, 24
    %v1183 = vpop.permute.xlu0 %1182
    %1184 = vrot.lane.b32.xlu0 %v1127, 24
    %v1185 = vpop.permute.xlu0 %1184
    %1186 = vrot.lane.b32.xlu0 %v1129, 24
    %v1187 = vpop.permute.xlu0 %1186
    %1188 = vrot.lane.b32.xlu0 %v1132, 24
    %v1189 = vpop.permute.xlu0 %1188
    %v1195 = vsel %vm605, %v717, %v1141
    %v1196 = vsel %vm605, %v719, %v1143
    %v1197 = vsel %vm605, %v722, %v1145
    %v1198 = vsel %vm605, %v724, %v1147
    %v1199 = vsel %vm605, %v727, %v1149
    %vm1200 = vcmask 130048
    %v1201 = vsel %vm1200, %v1195, %v1161
    %v1202 = vsel %vm1200, %v1196, %v1163
    %v1203 = vsel %vm1200, %v1197, %v1165
    %v1204 = vsel %vm1200, %v1198, %v1167
    %v1205 = vsel %vm1200, %v1199, %v1169
    %vm1206 = vcmask 195584
    %v1207 = vsel %vm1206, %v1201, %v1181
    %v1208 = vsel %vm1206, %v1202, %v1183
    %v1209 = vsel %vm1206, %v1203, %v1185
    %v1210 = vsel %vm1206, %v1204, %v1187
    %v1211 = vsel %vm1206, %v1205, %v1189
    %v1212 = vpack.c.bf16 %v1208, %v1207
    %v1213 = vpack.c.bf16 %v1210, %v1209
    %v1214 = vpack.c.bf16 %v1211, %v1211
    %v1215 = vld [vmem:[%s11] sm:$0xf]
    %v1216 = vld [vmem:[%s11 + $0x4] sm:$0xf]
    %v1217 = vld [vmem:[%s11 + $0x8] sm:$0xf]
    %v1218 = vld [vmem:[%s11 + $0xc] sm:$0xf]
    %v1219 = vld [vmem:[%s12] sm:$0x1]
    %v1221 = vperm.slane %v1219, 0
    %v1227 = vunpack.c.l.b16 %v1215
    %v1228 = vunpack.c.l.b16 %v1216
    %v1229 = vunpack.c.l.b16 %v1217
    %v1230 = vunpack.c.l.b16 %v1218
    %v1231 = vpack.c.b16 %v1228, %v1227
    %v1232 = vpack.c.b16 %v1230, %v1229
    %v1236 = vsel %vm127, %v1212, 0
    %v1239 = vsel %vm127, %v1213, 0
    %v1242 = vsel %vm127, %v1214, 0
    %1244 = vmatpush.bf16.msra.mxu0 0
    %1245 = vmatpush.bf16.msra.mxu0 0
    %1246 = vmatpush.bf16.msra.mxu0 0
    %1247 = vmatpush.bf16.msra.mxu0 0
    %1248 = vmatpush.bf16.msra.mxu0 0
    %1249 = vmatpush.bf16.msra.mxu0 0
    %1250 = vmatpush.bf16.msra.mxu0 %v1232
    %1251 = vmatpush.bf16.msra.mxu0 %v1231
    %1252 = vmatmul.bf16.gmra.mxu0 %v1236
    %v1253 = vpop.f32.mrf.mxu0
    %v1254 = vadd.f32 %v1221, %v1253
    %v1255 = vpop.f32.mrf.mxu0
    %v1256 = vadd.f32 %v1221, %v1255
    %1257 = vmatmul.bf16.gmra.mxu0 %v1239
    %v1258 = vpop.f32.mrf.mxu0
    %v1259 = vadd.f32 %v1221, %v1258
    %v1260 = vpop.f32.mrf.mxu0
    %v1261 = vadd.f32 %v1221, %v1260
    %1262 = vmatmul.bf16.gmra.mxu0 %v1242
    %v1263 = vpop.f32.mrf.mxu0
    %v1264 = vadd.f32 %v1221, %v1263
    %v1265 = vpop.f32.mrf.mxu0
    %1266 = vdwg.mxu0
    %v1267 = vadd.f32 %v292, %v1254
    %v1268 = vadd.f32 %v293, %v1256
    %v1269 = vadd.f32 %v294, %v1259
    %v1270 = vadd.f32 %v295, %v1261
    %v1271 = vadd.f32 %v296, %v1264
    %v1272 = vld [vmem:[%s13] sm:$0x1]
    %v1273 = vld [vmem:[%s14] sm:$0x1]
    %v1274 = vsel %vm127, %v1267, 0.0
    %1275 = vadd.xlane.f32.xlu0 %v1274
    %v1276 = vpop.xlane.xlu0 %1275
    %v1277 = vsel %vm127, %v1268, 0.0
    %1278 = vadd.xlane.f32.xlu0 %v1277
    %v1279 = vpop.xlane.xlu0 %1278
    %v1280 = vsel %vm127, %v1269, 0.0
    %1281 = vadd.xlane.f32.xlu0 %v1280
    %v1282 = vpop.xlane.xlu0 %1281
    %v1283 = vsel %vm127, %v1270, 0.0
    %1284 = vadd.xlane.f32.xlu0 %v1283
    %v1285 = vpop.xlane.xlu0 %1284
    %v1286 = vsel %vm127, %v1271, 0.0
    %1287 = vadd.xlane.f32.xlu0 %v1286
    %v1288 = vpop.xlane.xlu0 %1287
    %v1289 = vmul.f32 %v1267, %v1267
    %v1290 = vmul.f32 %v1268, %v1268
    %v1291 = vmul.f32 %v1269, %v1269
    %v1292 = vmul.f32 %v1270, %v1270
    %v1293 = vmul.f32 %v1271, %v1271
    %v1294 = vsel %vm127, %v1289, 0.0
    %1295 = vadd.xlane.f32.xlu0 %v1294
    %v1296 = vpop.xlane.xlu0 %1295
    %v1297 = vsel %vm127, %v1290, 0.0
    %1298 = vadd.xlane.f32.xlu0 %v1297
    %v1299 = vpop.xlane.xlu0 %1298
    %v1300 = vsel %vm127, %v1291, 0.0
    %1301 = vadd.xlane.f32.xlu0 %v1300
    %v1302 = vpop.xlane.xlu0 %1301
    %v1303 = vsel %vm127, %v1292, 0.0
    %1304 = vadd.xlane.f32.xlu0 %v1303
    %v1305 = vpop.xlane.xlu0 %1304
    %v1306 = vsel %vm127, %v1293, 0.0
    %1307 = vadd.xlane.f32.xlu0 %v1306
    %v1308 = vpop.xlane.xlu0 %1307
    %v1309 = vmul.f32 %v1276, 0.03125
    %v1310 = vmul.f32 %v1279, 0.03125
    %v1311 = vmul.f32 %v1282, 0.03125
    %v1312 = vmul.f32 %v1285, 0.03125
    %v1313 = vmul.f32 %v1288, 0.03125
    %v1314 = vmul.f32 %v1296, 0.03125
    %v1315 = vmul.f32 %v1299, 0.03125
    %v1316 = vmul.f32 %v1302, 0.03125
    %v1317 = vmul.f32 %v1305, 0.03125
    %v1318 = vmul.f32 %v1308, 0.03125
    %v1319 = vmul.f32 %v1309, %v1309
    %v1320 = vmul.f32 %v1310, %v1310
    %v1321 = vmul.f32 %v1311, %v1311
    %v1322 = vmul.f32 %v1312, %v1312
    %v1323 = vmul.f32 %v1313, %v1313
    %v1324 = vsub.f32 %v1314, %v1319
    %v1325 = vsub.f32 %v1315, %v1320
    %v1326 = vsub.f32 %v1316, %v1321
    %v1327 = vsub.f32 %v1317, %v1322
    %v1328 = vsub.f32 %v1318, %v1323
    %v1329 = vmax.f32 %v1324, 0.0
    %v1330 = vmax.f32 %v1325, 0.0
    %v1331 = vmax.f32 %v1326, 0.0
    %v1332 = vmax.f32 %v1327, 0.0
    %v1333 = vmax.f32 %v1328, 0.0
    %v1334 = vsub.f32 %v1267, %v1309
    %v1335 = vsub.f32 %v1268, %v1310
    %v1336 = vsub.f32 %v1269, %v1311
    %v1337 = vsub.f32 %v1270, %v1312
    %v1338 = vsub.f32 %v1271, %v1313
    %v1339 = vadd.f32 %v1329, 1e-05
    %v1340 = vadd.f32 %v1330, 1e-05
    %v1341 = vadd.f32 %v1331, 1e-05
    %v1342 = vadd.f32 %v1332, 1e-05
    %v1343 = vadd.f32 %v1333, 1e-05
    %v1344 = vrsqrt.pop %v1339
    %v1345 = vmul.f32 %v1344, %v1339
    %v1346 = vmul.f32 %v1345, %v1344
    %v1347 = vmul.f32 0.5, %v1346
    %v1348 = vsub.f32 1.5, %v1347
    %v1349 = vmul.f32 %v1344, %v1348
    %vm1350 = vweird.f32 %v1339
    %vm1351 = vweird.f32 %v1344
    %vm1352 = vmor %vm1350, %vm1351
    %v1353 = vsel %vm1352, %v1344, %v1349
    %v1354 = vrsqrt.pop %v1340
    %v1355 = vmul.f32 %v1354, %v1340
    %v1356 = vmul.f32 %v1355, %v1354
    %v1357 = vmul.f32 0.5, %v1356
    %v1358 = vsub.f32 1.5, %v1357
    %v1359 = vmul.f32 %v1354, %v1358
    %vm1360 = vweird.f32 %v1340
    %vm1361 = vweird.f32 %v1354
    %vm1362 = vmor %vm1360, %vm1361
    %v1363 = vsel %vm1362, %v1354, %v1359
    %v1364 = vrsqrt.pop %v1341
    %v1365 = vmul.f32 %v1364, %v1341
    %v1366 = vmul.f32 %v1365, %v1364
    %v1367 = vmul.f32 0.5, %v1366
    %v1368 = vsub.f32 1.5, %v1367
    %v1369 = vmul.f32 %v1364, %v1368
    %vm1370 = vweird.f32 %v1341
    %vm1371 = vweird.f32 %v1364
    %vm1372 = vmor %vm1370, %vm1371
    %v1373 = vsel %vm1372, %v1364, %v1369
    %v1374 = vrsqrt.pop %v1342
    %v1375 = vmul.f32 %v1374, %v1342
    %v1376 = vmul.f32 %v1375, %v1374
    %v1377 = vmul.f32 0.5, %v1376
    %v1378 = vsub.f32 1.5, %v1377
    %v1379 = vmul.f32 %v1374, %v1378
    %vm1380 = vweird.f32 %v1342
    %vm1381 = vweird.f32 %v1374
    %vm1382 = vmor %vm1380, %vm1381
    %v1383 = vsel %vm1382, %v1374, %v1379
    %v1384 = vrsqrt.pop %v1343
    %v1385 = vmul.f32 %v1384, %v1343
    %v1386 = vmul.f32 %v1385, %v1384
    %v1387 = vmul.f32 0.5, %v1386
    %v1388 = vsub.f32 1.5, %v1387
    %v1389 = vmul.f32 %v1384, %v1388
    %vm1390 = vweird.f32 %v1343
    %vm1391 = vweird.f32 %v1384
    %vm1392 = vmor %vm1390, %vm1391
    %v1393 = vsel %vm1392, %v1384, %v1389
    %v1394 = vmul.f32 %v1334, %v1353
    %v1395 = vmul.f32 %v1335, %v1363
    %v1396 = vmul.f32 %v1336, %v1373
    %v1397 = vmul.f32 %v1337, %v1383
    %v1398 = vmul.f32 %v1338, %v1393
    %v1400 = vperm.slane %v1272, 0
    %v1402 = vmul.f32 %v1394, %v1400
    %v1403 = vmul.f32 %v1395, %v1400
    %v1404 = vmul.f32 %v1396, %v1400
    %v1405 = vmul.f32 %v1397, %v1400
    %v1406 = vmul.f32 %v1398, %v1400
    %v1408 = vperm.slane %v1273, 0
    %v1410 = vadd.f32 %v1402, %v1408
    %v1411 = vadd.f32 %v1403, %v1408
    %v1412 = vadd.f32 %v1404, %v1408
    %v1413 = vadd.f32 %v1405, %v1408
    %v1414 = vadd.f32 %v1406, %v1408
    %v1415 = vpack.c.bf16 %v1411, %v1410
    %v1416 = vpack.c.bf16 %v1413, %v1412
    %v1417 = vpack.c.bf16 %v1414, %v1414
    %v1418 = vld [vmem:[%s15] sm:$0xf]
    %v1419 = vld [vmem:[%s15 + $0x4] sm:$0xf]
    %v1420 = vld [vmem:[%s15 + $0x8] sm:$0xf]
    %v1421 = vld [vmem:[%s15 + $0xc] sm:$0xf]
    %v1422 = vld [vmem:[%s16] sm:$0x1]
    %v1424 = vperm.slane %v1422, 0
    %v1430 = vunpack.c.l.b16 %v1418
    %v1431 = vunpack.c.l.b16 %v1419
    %v1432 = vunpack.c.l.b16 %v1420
    %v1433 = vunpack.c.l.b16 %v1421
    %v1434 = vpack.c.b16 %v1431, %v1430
    %v1435 = vpack.c.b16 %v1433, %v1432
    %v1439 = vsel %vm127, %v1415, 0
    %v1442 = vsel %vm127, %v1416, 0
    %v1445 = vsel %vm127, %v1417, 0
    %1447 = vmatpush.bf16.msra.mxu0 0
    %1448 = vmatpush.bf16.msra.mxu0 0
    %1449 = vmatpush.bf16.msra.mxu0 0
    %1450 = vmatpush.bf16.msra.mxu0 0
    %1451 = vmatpush.bf16.msra.mxu0 0
    %1452 = vmatpush.bf16.msra.mxu0 0
    %1453 = vmatpush.bf16.msra.mxu0 %v1435
    %1454 = vmatpush.bf16.msra.mxu0 %v1434
    %1455 = vmatmul.bf16.gmra.mxu0 %v1439
    %v1456 = vpop.f32.mrf.mxu0
    %v1457 = vadd.f32 %v1424, %v1456
    %v1458 = vpop.f32.mrf.mxu0
    %v1459 = vadd.f32 %v1424, %v1458
    %1460 = vmatmul.bf16.gmra.mxu0 %v1442
    %v1461 = vpop.f32.mrf.mxu0
    %v1462 = vadd.f32 %v1424, %v1461
    %v1463 = vpop.f32.mrf.mxu0
    %v1464 = vadd.f32 %v1424, %v1463
    %1465 = vmatmul.bf16.gmra.mxu0 %v1445
    %v1466 = vpop.f32.mrf.mxu0
    %v1467 = vadd.f32 %v1424, %v1466
    %v1468 = vpop.f32.mrf.mxu0
    %1469 = vdwg.mxu0
    %v1470 = vmul.f32 %v1457, 1.702
    %v1471 = vmul.f32 %v1459, 1.702
    %v1472 = vmul.f32 %v1462, 1.702
    %v1473 = vmul.f32 %v1464, 1.702
    %v1474 = vmul.f32 %v1467, 1.702
    %v1475 = vxor.u32 %v1470, 2147483648
    %v1476 = vxor.u32 %v1471, 2147483648
    %v1477 = vxor.u32 %v1472, 2147483648
    %v1478 = vxor.u32 %v1473, 2147483648
    %v1479 = vxor.u32 %v1474, 2147483648
    %v1480 = vmul.f32 %v1475, 1.442695
    %v1481 = vpow.pop %v1480
    %v1482 = vmul.f32 %v1476, 1.442695
    %v1483 = vpow.pop %v1482
    %v1484 = vmul.f32 %v1477, 1.442695
    %v1485 = vpow.pop %v1484
    %v1486 = vmul.f32 %v1478, 1.442695
    %v1487 = vpow.pop %v1486
    %v1488 = vmul.f32 %v1479, 1.442695
    %v1489 = vpow.pop %v1488
    %v1490 = vadd.f32 %v1481, 1.0
    %v1491 = vadd.f32 %v1483, 1.0
    %v1492 = vadd.f32 %v1485, 1.0
    %v1493 = vadd.f32 %v1487, 1.0
    %v1494 = vadd.f32 %v1489, 1.0
    %v1495 = vrcp.pop %v1490
    %v1496 = vmul.f32 %v1490, %v1495
    %v1497 = vsub.f32 1.0, %v1496
    %v1498 = vmul.f32 %v1495, %v1497
    %v1499 = vadd.f32 %v1495, %v1498
    %vm1500 = vweird.f32 %v1490
    %vm1501 = vweird.f32 %v1495
    %vm1502 = vmor %vm1500, %vm1501
    %v1503 = vsel %vm1502, %v1495, %v1499
    %v1504 = vand.u32 2147483647, %v1490
    %vm1505 = vcmp.eq.f32.partialorder %v1504, 8.507059e+37
    %v1506 = vand.u32 %v1490, 2147483648
    %v1507 = vor.u32 1.1754944e-38, %v1506
    %v1508 = vsel %vm1505, %v1507, %v1503
    %v1509 = vmul.f32 1.0, %v1508
    %v1510 = vrcp.pop %v1491
    %v1511 = vmul.f32 %v1491, %v1510
    %v1512 = vsub.f32 1.0, %v1511
    %v1513 = vmul.f32 %v1510, %v1512
    %v1514 = vadd.f32 %v1510, %v1513
    %vm1515 = vweird.f32 %v1491
    %vm1516 = vweird.f32 %v1510
    %vm1517 = vmor %vm1515, %vm1516
    %v1518 = vsel %vm1517, %v1510, %v1514
    %v1519 = vand.u32 2147483647, %v1491
    %vm1520 = vcmp.eq.f32.partialorder %v1519, 8.507059e+37
    %v1521 = vand.u32 %v1491, 2147483648
    %v1522 = vor.u32 1.1754944e-38, %v1521
    %v1523 = vsel %vm1520, %v1522, %v1518
    %v1524 = vmul.f32 1.0, %v1523
    %v1525 = vrcp.pop %v1492
    %v1526 = vmul.f32 %v1492, %v1525
    %v1527 = vsub.f32 1.0, %v1526
    %v1528 = vmul.f32 %v1525, %v1527
    %v1529 = vadd.f32 %v1525, %v1528
    %vm1530 = vweird.f32 %v1492
    %vm1531 = vweird.f32 %v1525
    %vm1532 = vmor %vm1530, %vm1531
    %v1533 = vsel %vm1532, %v1525, %v1529
    %v1534 = vand.u32 2147483647, %v1492
    %vm1535 = vcmp.eq.f32.partialorder %v1534, 8.507059e+37
    %v1536 = vand.u32 %v1492, 2147483648
    %v1537 = vor.u32 1.1754944e-38, %v1536
    %v1538 = vsel %vm1535, %v1537, %v1533
    %v1539 = vmul.f32 1.0, %v1538
    %v1540 = vrcp.pop %v1493
    %v1541 = vmul.f32 %v1493, %v1540
    %v1542 = vsub.f32 1.0, %v1541
    %v1543 = vmul.f32 %v1540, %v1542
    %v1544 = vadd.f32 %v1540, %v1543
    %vm1545 = vweird.f32 %v1493
    %vm1546 = vweird.f32 %v1540
    %vm1547 = vmor %vm1545, %vm1546
    %v1548 = vsel %vm1547, %v1540, %v1544
    %v1549 = vand.u32 2147483647, %v1493
    %vm1550 = vcmp.eq.f32.partialorder %v1549, 8.507059e+37
    %v1551 = vand.u32 %v1493, 2147483648
    %v1552 = vor.u32 1.1754944e-38, %v1551
    %v1553 = vsel %vm1550, %v1552, %v1548
    %v1554 = vmul.f32 1.0, %v1553
    %v1555 = vrcp.pop %v1494
    %v1556 = vmul.f32 %v1494, %v1555
    %v1557 = vsub.f32 1.0, %v1556
    %v1558 = vmul.f32 %v1555, %v1557
    %v1559 = vadd.f32 %v1555, %v1558
    %vm1560 = vweird.f32 %v1494
    %vm1561 = vweird.f32 %v1555
    %vm1562 = vmor %vm1560, %vm1561
    %v1563 = vsel %vm1562, %v1555, %v1559
    %v1564 = vand.u32 2147483647, %v1494
    %vm1565 = vcmp.eq.f32.partialorder %v1564, 8.507059e+37
    %v1566 = vand.u32 %v1494, 2147483648
    %v1567 = vor.u32 1.1754944e-38, %v1566
    %v1568 = vsel %vm1565, %v1567, %v1563
    %v1569 = vmul.f32 1.0, %v1568
    %v1570 = vmul.f32 %v1457, %v1509
    %v1571 = vmul.f32 %v1459, %v1524
    %v1572 = vmul.f32 %v1462, %v1539
    %v1573 = vmul.f32 %v1464, %v1554
    %v1574 = vmul.f32 %v1467, %v1569
    %v1575 = vpack.c.bf16 %v1571, %v1570
    %v1576 = vpack.c.bf16 %v1573, %v1572
    %v1577 = vpack.c.bf16 %v1574, %v1574
    %v1578 = vld [vmem:[%s17] sm:$0xf]
    %v1579 = vld [vmem:[%s17 + $0x4] sm:$0xf]
    %v1580 = vld [vmem:[%s17 + $0x8] sm:$0xf]
    %v1581 = vld [vmem:[%s17 + $0xc] sm:$0xf]
    %v1582 = vld [vmem:[%s17 + $0x10] sm:$0xf]
    %v1583 = vld [vmem:[%s17 + $0x14] sm:$0xf]
    %v1584 = vld [vmem:[%s17 + $0x18] sm:$0xf]
    %v1585 = vld [vmem:[%s17 + $0x1c] sm:$0xf]
    %v1586 = vld [vmem:[%s17 + $0x20] sm:$0xf]
    %v1587 = vld [vmem:[%s17 + $0x24] sm:$0xf]
    %v1588 = vld [vmem:[%s17 + $0x28] sm:$0xf]
    %v1589 = vld [vmem:[%s17 + $0x2c] sm:$0xf]
    %v1590 = vld [vmem:[%s17 + $0x30] sm:$0xf]
    %v1591 = vld [vmem:[%s17 + $0x34] sm:$0xf]
    %v1592 = vld [vmem:[%s17 + $0x38] sm:$0xf]
    %v1593 = vld [vmem:[%s17 + $0x3c] sm:$0xf]
    %v1594 = vld [vmem:[%s18] sm:$0x1]
    %v1596 = vperm.slane %v1594, 0
    %v1614 = vunpack.c.l.b16 %v1578
    %v1615 = vunpack.c.l.b16 %v1579
    %v1616 = vunpack.c.l.b16 %v1580
    %v1617 = vunpack.c.l.b16 %v1581
    %v1618 = vunpack.c.l.b16 %v1582
    %v1619 = vunpack.c.l.b16 %v1583
    %v1620 = vunpack.c.l.b16 %v1584
    %v1621 = vunpack.c.l.b16 %v1585
    %v1622 = vunpack.c.l.b16 %v1586
    %v1623 = vunpack.c.l.b16 %v1587
    %v1624 = vunpack.c.l.b16 %v1588
    %v1625 = vunpack.c.l.b16 %v1589
    %v1626 = vunpack.c.l.b16 %v1590
    %v1627 = vunpack.c.l.b16 %v1591
    %v1628 = vunpack.c.l.b16 %v1592
    %v1629 = vunpack.c.l.b16 %v1593
    %v1630 = vpack.c.b16 %v1615, %v1614
    %v1631 = vpack.c.b16 %v1617, %v1616
    %v1632 = vpack.c.b16 %v1619, %v1618
    %v1633 = vpack.c.b16 %v1621, %v1620
    %v1634 = vpack.c.b16 %v1623, %v1622
    %v1635 = vpack.c.b16 %v1625, %v1624
    %v1636 = vpack.c.b16 %v1627, %v1626
    %v1637 = vpack.c.b16 %v1629, %v1628
    %1646 = vmatpush.bf16.msra.mxu0 %v1637
    %1647 = vmatpush.bf16.msra.mxu0 %v1636
    %1648 = vmatpush.bf16.msra.mxu0 %v1635
    %1649 = vmatpush.bf16.msra.mxu0 %v1634
    %1650 = vmatpush.bf16.msra.mxu0 %v1633
    %1651 = vmatpush.bf16.msra.mxu0 %v1632
    %1652 = vmatpush.bf16.msra.mxu0 %v1631
    %1653 = vmatpush.bf16.msra.mxu0 %v1630
    %1654 = vmatmul.bf16.gmra.mxu0 %v1575
    %v1655 = vpop.f32.mrf.mxu0
    %v1656 = vadd.f32 %v1596, %v1655
    %v1657 = vpop.f32.mrf.mxu0
    %v1658 = vadd.f32 %v1596, %v1657
    %1659 = vmatmul.bf16.gmra.mxu0 %v1576
    %v1660 = vpop.f32.mrf.mxu0
    %v1661 = vadd.f32 %v1596, %v1660
    %v1662 = vpop.f32.mrf.mxu0
    %v1663 = vadd.f32 %v1596, %v1662
    %1664 = vmatmul.bf16.gmra.mxu0 %v1577
    %v1665 = vpop.f32.mrf.mxu0
    %v1666 = vadd.f32 %v1596, %v1665
    %v1667 = vpop.f32.mrf.mxu0
    %1668 = vdwg.mxu0
    %v1669 = vadd.f32 %v1267, %v1656
    %v1670 = vadd.f32 %v1268, %v1658
    %v1671 = vadd.f32 %v1269, %v1661
    %v1672 = vadd.f32 %v1270, %v1663
    %v1673 = vadd.f32 %v1271, %v1666
    %s1674 = scalar_lea.vmem %s7, 1
    %v1675 = vld [vmem:[%s1674] sm:$0x1]
    %s1676 = scalar_lea.vmem %s8, 1
    %v1677 = vld [vmem:[%s1676] sm:$0x1]
    %v1678 = vsel %vm127, %v1669, 0.0
    %1679 = vadd.xlane.f32.xlu0 %v1678
    %v1680 = vpop.xlane.xlu0 %1679
    %v1681 = vsel %vm127, %v1670, 0.0
    %1682 = vadd.xlane.f32.xlu0 %v1681
    %v1683 = vpop.xlane.xlu0 %1682
    %v1684 = vsel %vm127, %v1671, 0.0
    %1685 = vadd.xlane.f32.xlu0 %v1684
    %v1686 = vpop.xlane.xlu0 %1685
    %v1687 = vsel %vm127, %v1672, 0.0
    %1688 = vadd.xlane.f32.xlu0 %v1687
    %v1689 = vpop.xlane.xlu0 %1688
    %v1690 = vsel %vm127, %v1673, 0.0
    %1691 = vadd.xlane.f32.xlu0 %v1690
    %v1692 = vpop.xlane.xlu0 %1691
    %v1693 = vmul.f32 %v1669, %v1669
    %v1694 = vmul.f32 %v1670, %v1670
    %v1695 = vmul.f32 %v1671, %v1671
    %v1696 = vmul.f32 %v1672, %v1672
    %v1697 = vmul.f32 %v1673, %v1673
    %v1698 = vsel %vm127, %v1693, 0.0
    %1699 = vadd.xlane.f32.xlu0 %v1698
    %v1700 = vpop.xlane.xlu0 %1699
    %v1701 = vsel %vm127, %v1694, 0.0
    %1702 = vadd.xlane.f32.xlu0 %v1701
    %v1703 = vpop.xlane.xlu0 %1702
    %v1704 = vsel %vm127, %v1695, 0.0
    %1705 = vadd.xlane.f32.xlu0 %v1704
    %v1706 = vpop.xlane.xlu0 %1705
    %v1707 = vsel %vm127, %v1696, 0.0
    %1708 = vadd.xlane.f32.xlu0 %v1707
    %v1709 = vpop.xlane.xlu0 %1708
    %v1710 = vsel %vm127, %v1697, 0.0
    %1711 = vadd.xlane.f32.xlu0 %v1710
    %v1712 = vpop.xlane.xlu0 %1711
    %v1713 = vmul.f32 %v1680, 0.03125
    %v1714 = vmul.f32 %v1683, 0.03125
    %v1715 = vmul.f32 %v1686, 0.03125
    %v1716 = vmul.f32 %v1689, 0.03125
    %v1717 = vmul.f32 %v1692, 0.03125
    %v1718 = vmul.f32 %v1700, 0.03125
    %v1719 = vmul.f32 %v1703, 0.03125
    %v1720 = vmul.f32 %v1706, 0.03125
    %v1721 = vmul.f32 %v1709, 0.03125
    %v1722 = vmul.f32 %v1712, 0.03125
    %v1723 = vmul.f32 %v1713, %v1713
    %v1724 = vmul.f32 %v1714, %v1714
    %v1725 = vmul.f32 %v1715, %v1715
    %v1726 = vmul.f32 %v1716, %v1716
    %v1727 = vmul.f32 %v1717, %v1717
    %v1728 = vsub.f32 %v1718, %v1723
    %v1729 = vsub.f32 %v1719, %v1724
    %v1730 = vsub.f32 %v1720, %v1725
    %v1731 = vsub.f32 %v1721, %v1726
    %v1732 = vsub.f32 %v1722, %v1727
    %v1733 = vmax.f32 %v1728, 0.0
    %v1734 = vmax.f32 %v1729, 0.0
    %v1735 = vmax.f32 %v1730, 0.0
    %v1736 = vmax.f32 %v1731, 0.0
    %v1737 = vmax.f32 %v1732, 0.0
    %v1738 = vsub.f32 %v1669, %v1713
    %v1739 = vsub.f32 %v1670, %v1714
    %v1740 = vsub.f32 %v1671, %v1715
    %v1741 = vsub.f32 %v1672, %v1716
    %v1742 = vsub.f32 %v1673, %v1717
    %v1743 = vadd.f32 %v1733, 1e-05
    %v1744 = vadd.f32 %v1734, 1e-05
    %v1745 = vadd.f32 %v1735, 1e-05
    %v1746 = vadd.f32 %v1736, 1e-05
    %v1747 = vadd.f32 %v1737, 1e-05
    %v1748 = vrsqrt.pop %v1743
    %v1749 = vmul.f32 %v1748, %v1743
    %v1750 = vmul.f32 %v1749, %v1748
    %v1751 = vmul.f32 0.5, %v1750
    %v1752 = vsub.f32 1.5, %v1751
    %v1753 = vmul.f32 %v1748, %v1752
    %vm1754 = vweird.f32 %v1743
    %vm1755 = vweird.f32 %v1748
    %vm1756 = vmor %vm1754, %vm1755
    %v1757 = vsel %vm1756, %v1748, %v1753
    %v1758 = vrsqrt.pop %v1744
    %v1759 = vmul.f32 %v1758, %v1744
    %v1760 = vmul.f32 %v1759, %v1758
    %v1761 = vmul.f32 0.5, %v1760
    %v1762 = vsub.f32 1.5, %v1761
    %v1763 = vmul.f32 %v1758, %v1762
    %vm1764 = vweird.f32 %v1744
    %vm1765 = vweird.f32 %v1758
    %vm1766 = vmor %vm1764, %vm1765
    %v1767 = vsel %vm1766, %v1758, %v1763
    %v1768 = vrsqrt.pop %v1745
    %v1769 = vmul.f32 %v1768, %v1745
    %v1770 = vmul.f32 %v1769, %v1768
    %v1771 = vmul.f32 0.5, %v1770
    %v1772 = vsub.f32 1.5, %v1771
    %v1773 = vmul.f32 %v1768, %v1772
    %vm1774 = vweird.f32 %v1745
    %vm1775 = vweird.f32 %v1768
    %vm1776 = vmor %vm1774, %vm1775
    %v1777 = vsel %vm1776, %v1768, %v1773
    %v1778 = vrsqrt.pop %v1746
    %v1779 = vmul.f32 %v1778, %v1746
    %v1780 = vmul.f32 %v1779, %v1778
    %v1781 = vmul.f32 0.5, %v1780
    %v1782 = vsub.f32 1.5, %v1781
    %v1783 = vmul.f32 %v1778, %v1782
    %vm1784 = vweird.f32 %v1746
    %vm1785 = vweird.f32 %v1778
    %vm1786 = vmor %vm1784, %vm1785
    %v1787 = vsel %vm1786, %v1778, %v1783
    %v1788 = vrsqrt.pop %v1747
    %v1789 = vmul.f32 %v1788, %v1747
    %v1790 = vmul.f32 %v1789, %v1788
    %v1791 = vmul.f32 0.5, %v1790
    %v1792 = vsub.f32 1.5, %v1791
    %v1793 = vmul.f32 %v1788, %v1792
    %vm1794 = vweird.f32 %v1747
    %vm1795 = vweird.f32 %v1788
    %vm1796 = vmor %vm1794, %vm1795
    %v1797 = vsel %vm1796, %v1788, %v1793
    %v1798 = vmul.f32 %v1738, %v1757
    %v1799 = vmul.f32 %v1739, %v1767
    %v1800 = vmul.f32 %v1740, %v1777
    %v1801 = vmul.f32 %v1741, %v1787
    %v1802 = vmul.f32 %v1742, %v1797
    %v1804 = vperm.slane %v1675, 0
    %v1806 = vmul.f32 %v1798, %v1804
    %v1807 = vmul.f32 %v1799, %v1804
    %v1808 = vmul.f32 %v1800, %v1804
    %v1809 = vmul.f32 %v1801, %v1804
    %v1810 = vmul.f32 %v1802, %v1804
    %v1812 = vperm.slane %v1677, 0
    %v1814 = vadd.f32 %v1806, %v1812
    %v1815 = vadd.f32 %v1807, %v1812
    %v1816 = vadd.f32 %v1808, %v1812
    %v1817 = vadd.f32 %v1809, %v1812
    %v1818 = vadd.f32 %v1810, %v1812
    %v1819 = vpack.c.bf16 %v1815, %v1814
    %v1820 = vpack.c.bf16 %v1817, %v1816
    %v1821 = vpack.c.bf16 %v1818, %v1818
    %s1822 = scalar_lea.vmem %s9, 16
    %v1823 = vld [vmem:[%s1822] sm:$0xf]
    %v1824 = vld [vmem:[%s1822 + $0x4] sm:$0xf]
    %v1825 = vld [vmem:[%s1822 + $0x8] sm:$0xf]
    %v1826 = vld [vmem:[%s1822 + $0xc] sm:$0xf]
    %s1827 = scalar_lea.vmem %s10, 1
    %v1828 = vld [vmem:[%s1827] sm:$0x1]
    %v1830 = vperm.slane %v1828, 0
    %v1836 = vunpack.c.l.b16 %v1823
    %v1837 = vunpack.c.l.b16 %v1824
    %v1838 = vunpack.c.l.b16 %v1825
    %v1839 = vunpack.c.l.b16 %v1826
    %v1840 = vpack.c.b16 %v1837, %v1836
    %v1841 = vpack.c.b16 %v1839, %v1838
    %v1845 = vsel %vm127, %v1819, 0
    %v1848 = vsel %vm127, %v1820, 0
    %v1851 = vsel %vm127, %v1821, 0
    %1853 = vmatpush.bf16.msra.mxu0 0
    %1854 = vmatpush.bf16.msra.mxu0 0
    %1855 = vmatpush.bf16.msra.mxu0 0
    %1856 = vmatpush.bf16.msra.mxu0 0
    %1857 = vmatpush.bf16.msra.mxu0 0
    %1858 = vmatpush.bf16.msra.mxu0 0
    %1859 = vmatpush.bf16.msra.mxu0 %v1841
    %1860 = vmatpush.bf16.msra.mxu0 %v1840
    %1861 = vmatmul.bf16.gmra.mxu0 %v1845
    %v1862 = vpop.f32.mrf.mxu0
    %v1863 = vadd.f32 %v1830, %v1862
    %v1864 = vpop.f32.mrf.mxu0
    %v1865 = vadd.f32 %v1830, %v1864
    %1866 = vmatmul.bf16.gmra.mxu0 %v1848
    %v1867 = vpop.f32.mrf.mxu0
    %v1868 = vadd.f32 %v1830, %v1867
    %v1869 = vpop.f32.mrf.mxu0
    %v1870 = vadd.f32 %v1830, %v1869
    %1871 = vmatmul.bf16.gmra.mxu0 %v1851
    %v1872 = vpop.f32.mrf.mxu0
    %v1873 = vadd.f32 %v1830, %v1872
    %v1874 = vpop.f32.mrf.mxu0
    %1875 = vdwg.mxu0
    %v1876 = vmul.f32 %v1863, 0.35355338
    %v1877 = vmul.f32 %v1865, 0.35355338
    %v1878 = vmul.f32 %v1868, 0.35355338
    %v1879 = vmul.f32 %v1870, 0.35355338
    %v1880 = vmul.f32 %v1873, 0.35355338
    %v1881 = vpack.c.bf16 %v1877, %v1876
    %v1882 = vpack.c.bf16 %v1879, %v1878
    %v1883 = vpack.c.bf16 %v1880, %v1880
    %v1884 = vpack.c.bf16 %v1865, %v1863
    %v1885 = vpack.c.bf16 %v1870, %v1868
    %v1886 = vpack.c.bf16 %v1873, %v1873
    %1890 = vrot.lane.b32.xlu0 %v1884, 96
    %v1891 = vpop.permute.xlu0 %1890
    %1892 = vrot.lane.b32.xlu0 %v1885, 96
    %v1893 = vpop.permute.xlu0 %1892
    %1894 = vrot.lane.b32.xlu0 %v1886, 96
    %v1895 = vpop.permute.xlu0 %1894
    %v1897 = vsel %vm605, %v1881, 0
    %v1900 = vsel %vm605, %v1882, 0
    %v1903 = vsel %vm605, %v1883, 0
    %v1906 = vsel %vm605, %v1891, 0
    %v1909 = vsel %vm605, %v1893, 0
    %v1912 = vsel %vm605, %v1895, 0
    %1914 = vmatpush.bf16.xpose.msra.mxu0 0
    %1915 = vmatpush.bf16.xpose.msra.mxu0 0
    %1916 = vmatpush.bf16.xpose.msra.mxu0 0
    %1917 = vmatpush.bf16.xpose.msra.mxu0 0
    %1918 = vmatpush.bf16.xpose.msra.mxu0 0
    %1919 = vmatpush.bf16.xpose.msra.mxu0 %v1912
    %1920 = vmatpush.bf16.xpose.msra.mxu0 %v1909
    %1921 = vmatpush.bf16.xpose.msra.mxu0 %v1906
    %1922 = vmatmul.bf16.gmra.mxu0 %v1897
    %v1923 = vpop.f32.mrf.mxu0
    %v1924 = vadd.f32 %v382, %v1923
    %v1925 = vpop.f32.mrf.mxu0
    %v1926 = vadd.f32 %v383, %v1925
    %1927 = vmatmul.bf16.gmra.mxu0 %v1900
    %v1928 = vpop.f32.mrf.mxu0
    %v1929 = vadd.f32 %v384, %v1928
    %v1930 = vpop.f32.mrf.mxu0
    %v1931 = vadd.f32 %v385, %v1930
    %1932 = vmatmul.bf16.gmra.mxu0 %v1903
    %v1933 = vpop.f32.mrf.mxu0
    %v1934 = vadd.f32 %v386, %v1933
    %v1935 = vpop.f32.mrf.mxu0
    %1936 = vdwg.mxu0
    %v1937 = vmul.f32 %v1924, 1.442695
    %v1938 = vpow.pop %v1937
    %v1939 = vmul.f32 %v1926, 1.442695
    %v1940 = vpow.pop %v1939
    %v1941 = vmul.f32 %v1929, 1.442695
    %v1942 = vpow.pop %v1941
    %v1943 = vmul.f32 %v1931, 1.442695
    %v1944 = vpow.pop %v1943
    %v1945 = vmul.f32 %v1934, 1.442695
    %v1946 = vpow.pop %v1945
    %v1947 = vsel %vm657, %v1938, 0.0
    %1948 = vadd.xlane.f32.xlu0 %v1947
    %v1949 = vpop.xlane.xlu0 %1948
    %v1950 = vsel %vm657, %v1940, 0.0
    %1951 = vadd.xlane.f32.xlu0 %v1950
    %v1952 = vpop.xlane.xlu0 %1951
    %v1953 = vsel %vm657, %v1942, 0.0
    %1954 = vadd.xlane.f32.xlu0 %v1953
    %v1955 = vpop.xlane.xlu0 %1954
    %v1956 = vsel %vm657, %v1944, 0.0
    %1957 = vadd.xlane.f32.xlu0 %v1956
    %v1958 = vpop.xlane.xlu0 %1957
    %v1959 = vsel %vm657, %v1946, 0.0
    %1960 = vadd.xlane.f32.xlu0 %v1959
    %v1961 = vpop.xlane.xlu0 %1960
    %v1962 = vrcp.pop %v1949
    %v1963 = vrcp.pop %v1952
    %v1964 = vrcp.pop %v1955
    %v1965 = vrcp.pop %v1958
    %v1966 = vrcp.pop %v1961
    %v1967 = vmul.f32 %v1938, %v1962
    %v1968 = vmul.f32 %v1940, %v1963
    %v1969 = vmul.f32 %v1942, %v1964
    %v1970 = vmul.f32 %v1944, %v1965
    %v1971 = vmul.f32 %v1946, %v1966
    %v1972 = vpack.c.bf16 %v1968, %v1967
    %v1973 = vpack.c.bf16 %v1970, %v1969
    %v1974 = vpack.c.bf16 %v1971, %v1971
    %1975 = vrot.lane.b32.xlu0 %v1884, 64
    %v1976 = vpop.permute.xlu0 %1975
    %1977 = vrot.lane.b32.xlu0 %v1885, 64
    %v1978 = vpop.permute.xlu0 %1977
    %1979 = vrot.lane.b32.xlu0 %v1886, 64
    %v1980 = vpop.permute.xlu0 %1979
    %v1984 = vsel %vm657, %v1972, 0
    %v1987 = vsel %vm657, %v1973, 0
    %v1990 = vsel %vm657, %v1974, 0
    %v1993 = vsel %vm703, %v1980, 0
    %1995 = vmatpush.bf16.msra.mxu0 0
    %1996 = vmatpush.bf16.msra.mxu0 0
    %1997 = vmatpush.bf16.msra.mxu0 0
    %1998 = vmatpush.bf16.msra.mxu0 0
    %1999 = vmatpush.bf16.msra.mxu0 0
    %2000 = vmatpush.bf16.msra.mxu0 %v1993
    %2001 = vmatpush.bf16.msra.mxu0 %v1978
    %2002 = vmatpush.bf16.msra.mxu0 %v1976
    %2003 = vmatmul.bf16.gmra.mxu0 %v1984
    %v2004 = vpop.f32.mrf.mxu0
    %v2005 = vadd.f32 0.0, %v2004
    %v2006 = vpop.f32.mrf.mxu0
    %v2007 = vadd.f32 0.0, %v2006
    %2008 = vmatmul.bf16.gmra.mxu0 %v1987
    %v2009 = vpop.f32.mrf.mxu0
    %v2010 = vadd.f32 0.0, %v2009
    %v2011 = vpop.f32.mrf.mxu0
    %v2012 = vadd.f32 0.0, %v2011
    %2013 = vmatmul.bf16.gmra.mxu0 %v1990
    %v2014 = vpop.f32.mrf.mxu0
    %v2015 = vadd.f32 0.0, %v2014
    %v2016 = vpop.f32.mrf.mxu0
    %2017 = vdwg.mxu0
    %2021 = vrot.lane.b32.xlu0 %v1881, 120
    %v2022 = vpop.permute.xlu0 %2021
    %2023 = vrot.lane.b32.xlu0 %v1882, 120
    %v2024 = vpop.permute.xlu0 %2023
    %2025 = vrot.lane.b32.xlu0 %v1883, 120
    %v2026 = vpop.permute.xlu0 %2025
    %2027 = vrot.lane.b32.xlu0 %v1884, 88
    %v2028 = vpop.permute.xlu0 %2027
    %2029 = vrot.lane.b32.xlu0 %v1885, 88
    %v2030 = vpop.permute.xlu0 %2029
    %2031 = vrot.lane.b32.xlu0 %v1886, 88
    %v2032 = vpop.permute.xlu0 %2031
    %v2034 = vsel %vm605, %v2022, 0
    %v2037 = vsel %vm605, %v2024, 0
    %v2040 = vsel %vm605, %v2026, 0
    %v2043 = vsel %vm605, %v2028, 0
    %v2046 = vsel %vm605, %v2030, 0
    %v2049 = vsel %vm605, %v2032, 0
    %2051 = vmatpush.bf16.xpose.msra.mxu0 0
    %2052 = vmatpush.bf16.xpose.msra.mxu0 0
    %2053 = vmatpush.bf16.xpose.msra.mxu0 0
    %2054 = vmatpush.bf16.xpose.msra.mxu0 0
    %2055 = vmatpush.bf16.xpose.msra.mxu0 0
    %2056 = vmatpush.bf16.xpose.msra.mxu0 %v2049
    %2057 = vmatpush.bf16.xpose.msra.mxu0 %v2046
    %2058 = vmatpush.bf16.xpose.msra.mxu0 %v2043
    %2059 = vmatmul.bf16.gmra.mxu0 %v2034
    %v2060 = vpop.f32.mrf.mxu0
    %v2061 = vadd.f32 %v382, %v2060
    %v2062 = vpop.f32.mrf.mxu0
    %v2063 = vadd.f32 %v383, %v2062
    %2064 = vmatmul.bf16.gmra.mxu0 %v2037
    %v2065 = vpop.f32.mrf.mxu0
    %v2066 = vadd.f32 %v384, %v2065
    %v2067 = vpop.f32.mrf.mxu0
    %v2068 = vadd.f32 %v385, %v2067
    %2069 = vmatmul.bf16.gmra.mxu0 %v2040
    %v2070 = vpop.f32.mrf.mxu0
    %v2071 = vadd.f32 %v386, %v2070
    %v2072 = vpop.f32.mrf.mxu0
    %2073 = vdwg.mxu0
    %v2074 = vmul.f32 %v2061, 1.442695
    %v2075 = vpow.pop %v2074
    %v2076 = vmul.f32 %v2063, 1.442695
    %v2077 = vpow.pop %v2076
    %v2078 = vmul.f32 %v2066, 1.442695
    %v2079 = vpow.pop %v2078
    %v2080 = vmul.f32 %v2068, 1.442695
    %v2081 = vpow.pop %v2080
    %v2082 = vmul.f32 %v2071, 1.442695
    %v2083 = vpow.pop %v2082
    %v2084 = vsel %vm657, %v2075, 0.0
    %2085 = vadd.xlane.f32.xlu0 %v2084
    %v2086 = vpop.xlane.xlu0 %2085
    %v2087 = vsel %vm657, %v2077, 0.0
    %2088 = vadd.xlane.f32.xlu0 %v2087
    %v2089 = vpop.xlane.xlu0 %2088
    %v2090 = vsel %vm657, %v2079, 0.0
    %2091 = vadd.xlane.f32.xlu0 %v2090
    %v2092 = vpop.xlane.xlu0 %2091
    %v2093 = vsel %vm657, %v2081, 0.0
    %2094 = vadd.xlane.f32.xlu0 %v2093
    %v2095 = vpop.xlane.xlu0 %2094
    %v2096 = vsel %vm657, %v2083, 0.0
    %2097 = vadd.xlane.f32.xlu0 %v2096
    %v2098 = vpop.xlane.xlu0 %2097
    %v2099 = vrcp.pop %v2086
    %v2100 = vrcp.pop %v2089
    %v2101 = vrcp.pop %v2092
    %v2102 = vrcp.pop %v2095
    %v2103 = vrcp.pop %v2098
    %v2104 = vmul.f32 %v2075, %v2099
    %v2105 = vmul.f32 %v2077, %v2100
    %v2106 = vmul.f32 %v2079, %v2101
    %v2107 = vmul.f32 %v2081, %v2102
    %v2108 = vmul.f32 %v2083, %v2103
    %v2109 = vpack.c.bf16 %v2105, %v2104
    %v2110 = vpack.c.bf16 %v2107, %v2106
    %v2111 = vpack.c.bf16 %v2108, %v2108
    %2112 = vrot.lane.b32.xlu0 %v1884, 56
    %v2113 = vpop.permute.xlu0 %2112
    %2114 = vrot.lane.b32.xlu0 %v1885, 56
    %v2115 = vpop.permute.xlu0 %2114
    %2116 = vrot.lane.b32.xlu0 %v1886, 56
    %v2117 = vpop.permute.xlu0 %2116
    %v2121 = vsel %vm657, %v2109, 0
    %v2124 = vsel %vm657, %v2110, 0
    %v2127 = vsel %vm657, %v2111, 0
    %v2130 = vsel %vm703, %v2117, 0
    %2132 = vmatpush.bf16.msra.mxu0 0
    %2133 = vmatpush.bf16.msra.mxu0 0
    %2134 = vmatpush.bf16.msra.mxu0 0
    %2135 = vmatpush.bf16.msra.mxu0 0
    %2136 = vmatpush.bf16.msra.mxu0 0
    %2137 = vmatpush.bf16.msra.mxu0 %v2130
    %2138 = vmatpush.bf16.msra.mxu0 %v2115
    %2139 = vmatpush.bf16.msra.mxu0 %v2113
    %2140 = vmatmul.bf16.gmra.mxu0 %v2121
    %v2141 = vpop.f32.mrf.mxu0
    %v2142 = vadd.f32 0.0, %v2141
    %v2143 = vpop.f32.mrf.mxu0
    %v2144 = vadd.f32 0.0, %v2143
    %2145 = vmatmul.bf16.gmra.mxu0 %v2124
    %v2146 = vpop.f32.mrf.mxu0
    %v2147 = vadd.f32 0.0, %v2146
    %v2148 = vpop.f32.mrf.mxu0
    %v2149 = vadd.f32 0.0, %v2148
    %2150 = vmatmul.bf16.gmra.mxu0 %v2127
    %v2151 = vpop.f32.mrf.mxu0
    %v2152 = vadd.f32 0.0, %v2151
    %v2153 = vpop.f32.mrf.mxu0
    %2154 = vdwg.mxu0
    %2155 = vrot.lane.b32.xlu0 %v1881, 112
    %v2156 = vpop.permute.xlu0 %2155
    %2157 = vrot.lane.b32.xlu0 %v1882, 112
    %v2158 = vpop.permute.xlu0 %2157
    %2159 = vrot.lane.b32.xlu0 %v1883, 112
    %v2160 = vpop.permute.xlu0 %2159
    %2161 = vrot.lane.b32.xlu0 %v1884, 80
    %v2162 = vpop.permute.xlu0 %2161
    %2163 = vrot.lane.b32.xlu0 %v1885, 80
    %v2164 = vpop.permute.xlu0 %2163
    %2165 = vrot.lane.b32.xlu0 %v1886, 80
    %v2166 = vpop.permute.xlu0 %2165
    %v2168 = vsel %vm605, %v2156, 0
    %v2171 = vsel %vm605, %v2158, 0
    %v2174 = vsel %vm605, %v2160, 0
    %v2177 = vsel %vm605, %v2162, 0
    %v2180 = vsel %vm605, %v2164, 0
    %v2183 = vsel %vm605, %v2166, 0
    %2185 = vmatpush.bf16.xpose.msra.mxu0 0
    %2186 = vmatpush.bf16.xpose.msra.mxu0 0
    %2187 = vmatpush.bf16.xpose.msra.mxu0 0
    %2188 = vmatpush.bf16.xpose.msra.mxu0 0
    %2189 = vmatpush.bf16.xpose.msra.mxu0 0
    %2190 = vmatpush.bf16.xpose.msra.mxu0 %v2183
    %2191 = vmatpush.bf16.xpose.msra.mxu0 %v2180
    %2192 = vmatpush.bf16.xpose.msra.mxu0 %v2177
    %2193 = vmatmul.bf16.gmra.mxu0 %v2168
    %v2194 = vpop.f32.mrf.mxu0
    %v2195 = vadd.f32 %v382, %v2194
    %v2196 = vpop.f32.mrf.mxu0
    %v2197 = vadd.f32 %v383, %v2196
    %2198 = vmatmul.bf16.gmra.mxu0 %v2171
    %v2199 = vpop.f32.mrf.mxu0
    %v2200 = vadd.f32 %v384, %v2199
    %v2201 = vpop.f32.mrf.mxu0
    %v2202 = vadd.f32 %v385, %v2201
    %2203 = vmatmul.bf16.gmra.mxu0 %v2174
    %v2204 = vpop.f32.mrf.mxu0
    %v2205 = vadd.f32 %v386, %v2204
    %v2206 = vpop.f32.mrf.mxu0
    %2207 = vdwg.mxu0
    %v2208 = vmul.f32 %v2195, 1.442695
    %v2209 = vpow.pop %v2208
    %v2210 = vmul.f32 %v2197, 1.442695
    %v2211 = vpow.pop %v2210
    %v2212 = vmul.f32 %v2200, 1.442695
    %v2213 = vpow.pop %v2212
    %v2214 = vmul.f32 %v2202, 1.442695
    %v2215 = vpow.pop %v2214
    %v2216 = vmul.f32 %v2205, 1.442695
    %v2217 = vpow.pop %v2216
    %v2218 = vsel %vm657, %v2209, 0.0
    %2219 = vadd.xlane.f32.xlu0 %v2218
    %v2220 = vpop.xlane.xlu0 %2219
    %v2221 = vsel %vm657, %v2211, 0.0
    %2222 = vadd.xlane.f32.xlu0 %v2221
    %v2223 = vpop.xlane.xlu0 %2222
    %v2224 = vsel %vm657, %v2213, 0.0
    %2225 = vadd.xlane.f32.xlu0 %v2224
    %v2226 = vpop.xlane.xlu0 %2225
    %v2227 = vsel %vm657, %v2215, 0.0
    %2228 = vadd.xlane.f32.xlu0 %v2227
    %v2229 = vpop.xlane.xlu0 %2228
    %v2230 = vsel %vm657, %v2217, 0.0
    %2231 = vadd.xlane.f32.xlu0 %v2230
    %v2232 = vpop.xlane.xlu0 %2231
    %v2233 = vrcp.pop %v2220
    %v2234 = vrcp.pop %v2223
    %v2235 = vrcp.pop %v2226
    %v2236 = vrcp.pop %v2229
    %v2237 = vrcp.pop %v2232
    %v2238 = vmul.f32 %v2209, %v2233
    %v2239 = vmul.f32 %v2211, %v2234
    %v2240 = vmul.f32 %v2213, %v2235
    %v2241 = vmul.f32 %v2215, %v2236
    %v2242 = vmul.f32 %v2217, %v2237
    %v2243 = vpack.c.bf16 %v2239, %v2238
    %v2244 = vpack.c.bf16 %v2241, %v2240
    %v2245 = vpack.c.bf16 %v2242, %v2242
    %2246 = vrot.lane.b32.xlu0 %v1884, 48
    %v2247 = vpop.permute.xlu0 %2246
    %2248 = vrot.lane.b32.xlu0 %v1885, 48
    %v2249 = vpop.permute.xlu0 %2248
    %2250 = vrot.lane.b32.xlu0 %v1886, 48
    %v2251 = vpop.permute.xlu0 %2250
    %v2255 = vsel %vm657, %v2243, 0
    %v2258 = vsel %vm657, %v2244, 0
    %v2261 = vsel %vm657, %v2245, 0
    %v2264 = vsel %vm703, %v2251, 0
    %2266 = vmatpush.bf16.msra.mxu0 0
    %2267 = vmatpush.bf16.msra.mxu0 0
    %2268 = vmatpush.bf16.msra.mxu0 0
    %2269 = vmatpush.bf16.msra.mxu0 0
    %2270 = vmatpush.bf16.msra.mxu0 0
    %2271 = vmatpush.bf16.msra.mxu0 %v2264
    %2272 = vmatpush.bf16.msra.mxu0 %v2249
    %2273 = vmatpush.bf16.msra.mxu0 %v2247
    %2274 = vmatmul.bf16.gmra.mxu0 %v2255
    %v2275 = vpop.f32.mrf.mxu0
    %v2276 = vadd.f32 0.0, %v2275
    %v2277 = vpop.f32.mrf.mxu0
    %v2278 = vadd.f32 0.0, %v2277
    %2279 = vmatmul.bf16.gmra.mxu0 %v2258
    %v2280 = vpop.f32.mrf.mxu0
    %v2281 = vadd.f32 0.0, %v2280
    %v2282 = vpop.f32.mrf.mxu0
    %v2283 = vadd.f32 0.0, %v2282
    %2284 = vmatmul.bf16.gmra.mxu0 %v2261
    %v2285 = vpop.f32.mrf.mxu0
    %v2286 = vadd.f32 0.0, %v2285
    %v2287 = vpop.f32.mrf.mxu0
    %2288 = vdwg.mxu0
    %2289 = vrot.lane.b32.xlu0 %v1881, 104
    %v2290 = vpop.permute.xlu0 %2289
    %2291 = vrot.lane.b32.xlu0 %v1882, 104
    %v2292 = vpop.permute.xlu0 %2291
    %2293 = vrot.lane.b32.xlu0 %v1883, 104
    %v2294 = vpop.permute.xlu0 %2293
    %2295 = vrot.lane.b32.xlu0 %v1884, 72
    %v2296 = vpop.permute.xlu0 %2295
    %2297 = vrot.lane.b32.xlu0 %v1885, 72
    %v2298 = vpop.permute.xlu0 %2297
    %2299 = vrot.lane.b32.xlu0 %v1886, 72
    %v2300 = vpop.permute.xlu0 %2299
    %v2302 = vsel %vm605, %v2290, 0
    %v2305 = vsel %vm605, %v2292, 0
    %v2308 = vsel %vm605, %v2294, 0
    %v2311 = vsel %vm605, %v2296, 0
    %v2314 = vsel %vm605, %v2298, 0
    %v2317 = vsel %vm605, %v2300, 0
    %2319 = vmatpush.bf16.xpose.msra.mxu0 0
    %2320 = vmatpush.bf16.xpose.msra.mxu0 0
    %2321 = vmatpush.bf16.xpose.msra.mxu0 0
    %2322 = vmatpush.bf16.xpose.msra.mxu0 0
    %2323 = vmatpush.bf16.xpose.msra.mxu0 0
    %2324 = vmatpush.bf16.xpose.msra.mxu0 %v2317
    %2325 = vmatpush.bf16.xpose.msra.mxu0 %v2314
    %2326 = vmatpush.bf16.xpose.msra.mxu0 %v2311
    %2327 = vmatmul.bf16.gmra.mxu0 %v2302
    %v2328 = vpop.f32.mrf.mxu0
    %v2329 = vadd.f32 %v382, %v2328
    %v2330 = vpop.f32.mrf.mxu0
    %v2331 = vadd.f32 %v383, %v2330
    %2332 = vmatmul.bf16.gmra.mxu0 %v2305
    %v2333 = vpop.f32.mrf.mxu0
    %v2334 = vadd.f32 %v384, %v2333
    %v2335 = vpop.f32.mrf.mxu0
    %v2336 = vadd.f32 %v385, %v2335
    %2337 = vmatmul.bf16.gmra.mxu0 %v2308
    %v2338 = vpop.f32.mrf.mxu0
    %v2339 = vadd.f32 %v386, %v2338
    %v2340 = vpop.f32.mrf.mxu0
    %2341 = vdwg.mxu0
    %v2342 = vmul.f32 %v2329, 1.442695
    %v2343 = vpow.pop %v2342
    %v2344 = vmul.f32 %v2331, 1.442695
    %v2345 = vpow.pop %v2344
    %v2346 = vmul.f32 %v2334, 1.442695
    %v2347 = vpow.pop %v2346
    %v2348 = vmul.f32 %v2336, 1.442695
    %v2349 = vpow.pop %v2348
    %v2350 = vmul.f32 %v2339, 1.442695
    %v2351 = vpow.pop %v2350
    %v2352 = vsel %vm657, %v2343, 0.0
    %2353 = vadd.xlane.f32.xlu0 %v2352
    %v2354 = vpop.xlane.xlu0 %2353
    %v2355 = vsel %vm657, %v2345, 0.0
    %2356 = vadd.xlane.f32.xlu0 %v2355
    %v2357 = vpop.xlane.xlu0 %2356
    %v2358 = vsel %vm657, %v2347, 0.0
    %2359 = vadd.xlane.f32.xlu0 %v2358
    %v2360 = vpop.xlane.xlu0 %2359
    %v2361 = vsel %vm657, %v2349, 0.0
    %2362 = vadd.xlane.f32.xlu0 %v2361
    %v2363 = vpop.xlane.xlu0 %2362
    %v2364 = vsel %vm657, %v2351, 0.0
    %2365 = vadd.xlane.f32.xlu0 %v2364
    %v2366 = vpop.xlane.xlu0 %2365
    %v2367 = vrcp.pop %v2354
    %v2368 = vrcp.pop %v2357
    %v2369 = vrcp.pop %v2360
    %v2370 = vrcp.pop %v2363
    %v2371 = vrcp.pop %v2366
    %v2372 = vmul.f32 %v2343, %v2367
    %v2373 = vmul.f32 %v2345, %v2368
    %v2374 = vmul.f32 %v2347, %v2369
    %v2375 = vmul.f32 %v2349, %v2370
    %v2376 = vmul.f32 %v2351, %v2371
    %v2377 = vpack.c.bf16 %v2373, %v2372
    %v2378 = vpack.c.bf16 %v2375, %v2374
    %v2379 = vpack.c.bf16 %v2376, %v2376
    %2380 = vrot.lane.b32.xlu0 %v1884, 40
    %v2381 = vpop.permute.xlu0 %2380
    %2382 = vrot.lane.b32.xlu0 %v1885, 40
    %v2383 = vpop.permute.xlu0 %2382
    %2384 = vrot.lane.b32.xlu0 %v1886, 40
    %v2385 = vpop.permute.xlu0 %2384
    %v2389 = vsel %vm657, %v2377, 0
    %v2392 = vsel %vm657, %v2378, 0
    %v2395 = vsel %vm657, %v2379, 0
    %v2398 = vsel %vm703, %v2385, 0
    %2400 = vmatpush.bf16.msra.mxu0 0
    %2401 = vmatpush.bf16.msra.mxu0 0
    %2402 = vmatpush.bf16.msra.mxu0 0
    %2403 = vmatpush.bf16.msra.mxu0 0
    %2404 = vmatpush.bf16.msra.mxu0 0
    %2405 = vmatpush.bf16.msra.mxu0 %v2398
    %2406 = vmatpush.bf16.msra.mxu0 %v2383
    %2407 = vmatpush.bf16.msra.mxu0 %v2381
    %2408 = vmatmul.bf16.gmra.mxu0 %v2389
    %v2409 = vpop.f32.mrf.mxu0
    %v2410 = vadd.f32 0.0, %v2409
    %v2411 = vpop.f32.mrf.mxu0
    %v2412 = vadd.f32 0.0, %v2411
    %2413 = vmatmul.bf16.gmra.mxu0 %v2392
    %v2414 = vpop.f32.mrf.mxu0
    %v2415 = vadd.f32 0.0, %v2414
    %v2416 = vpop.f32.mrf.mxu0
    %v2417 = vadd.f32 0.0, %v2416
    %2418 = vmatmul.bf16.gmra.mxu0 %v2395
    %v2419 = vpop.f32.mrf.mxu0
    %v2420 = vadd.f32 0.0, %v2419
    %v2421 = vpop.f32.mrf.mxu0
    %2422 = vdwg.mxu0
    %2428 = vrot.lane.b32.xlu0 %v2142, 8
    %v2429 = vpop.permute.xlu0 %2428
    %2430 = vrot.lane.b32.xlu0 %v2144, 8
    %v2431 = vpop.permute.xlu0 %2430
    %2432 = vrot.lane.b32.xlu0 %v2147, 8
    %v2433 = vpop.permute.xlu0 %2432
    %2434 = vrot.lane.b32.xlu0 %v2149, 8
    %v2435 = vpop.permute.xlu0 %2434
    %2436 = vrot.lane.b32.xlu0 %v2152, 8
    %v2437 = vpop.permute.xlu0 %2436
    %2448 = vrot.lane.b32.xlu0 %v2276, 16
    %v2449 = vpop.permute.xlu0 %2448
    %2450 = vrot.lane.b32.xlu0 %v2278, 16
    %v2451 = vpop.permute.xlu0 %2450
    %2452 = vrot.lane.b32.xlu0 %v2281, 16
    %v2453 = vpop.permute.xlu0 %2452
    %2454 = vrot.lane.b32.xlu0 %v2283, 16
    %v2455 = vpop.permute.xlu0 %2454
    %2456 = vrot.lane.b32.xlu0 %v2286, 16
    %v2457 = vpop.permute.xlu0 %2456
    %2468 = vrot.lane.b32.xlu0 %v2410, 24
    %v2469 = vpop.permute.xlu0 %2468
    %2470 = vrot.lane.b32.xlu0 %v2412, 24
    %v2471 = vpop.permute.xlu0 %2470
    %2472 = vrot.lane.b32.xlu0 %v2415, 24
    %v2473 = vpop.permute.xlu0 %2472
    %2474 = vrot.lane.b32.xlu0 %v2417, 24
    %v2475 = vpop.permute.xlu0 %2474
    %2476 = vrot.lane.b32.xlu0 %v2420, 24
    %v2477 = vpop.permute.xlu0 %2476
    %v2483 = vsel %vm605, %v2005, %v2429
    %v2484 = vsel %vm605, %v2007, %v2431
    %v2485 = vsel %vm605, %v2010, %v2433
    %v2486 = vsel %vm605, %v2012, %v2435
    %v2487 = vsel %vm605, %v2015, %v2437
    %v2488 = vsel %vm1200, %v2483, %v2449
    %v2489 = vsel %vm1200, %v2484, %v2451
    %v2490 = vsel %vm1200, %v2485, %v2453
    %v2491 = vsel %vm1200, %v2486, %v2455
    %v2492 = vsel %vm1200, %v2487, %v2457
    %v2493 = vsel %vm1206, %v2488, %v2469
    %v2494 = vsel %vm1206, %v2489, %v2471
    %v2495 = vsel %vm1206, %v2490, %v2473
    %v2496 = vsel %vm1206, %v2491, %v2475
    %v2497 = vsel %vm1206, %v2492, %v2477
    %v2498 = vpack.c.bf16 %v2494, %v2493
    %v2499 = vpack.c.bf16 %v2496, %v2495
    %v2500 = vpack.c.bf16 %v2497, %v2497
    %s2501 = scalar_lea.vmem %s11, 16
    %v2502 = vld [vmem:[%s2501] sm:$0xf]
    %v2503 = vld [vmem:[%s2501 + $0x4] sm:$0xf]
    %v2504 = vld [vmem:[%s2501 + $0x8] sm:$0xf]
    %v2505 = vld [vmem:[%s2501 + $0xc] sm:$0xf]
    %s2506 = scalar_lea.vmem %s12, 1
    %v2507 = vld [vmem:[%s2506] sm:$0x1]
    %v2509 = vperm.slane %v2507, 0
    %v2515 = vunpack.c.l.b16 %v2502
    %v2516 = vunpack.c.l.b16 %v2503
    %v2517 = vunpack.c.l.b16 %v2504
    %v2518 = vunpack.c.l.b16 %v2505
    %v2519 = vpack.c.b16 %v2516, %v2515
    %v2520 = vpack.c.b16 %v2518, %v2517
    %v2524 = vsel %vm127, %v2498, 0
    %v2527 = vsel %vm127, %v2499, 0
    %v2530 = vsel %vm127, %v2500, 0
    %2532 = vmatpush.bf16.msra.mxu0 0
    %2533 = vmatpush.bf16.msra.mxu0 0
    %2534 = vmatpush.bf16.msra.mxu0 0
    %2535 = vmatpush.bf16.msra.mxu0 0
    %2536 = vmatpush.bf16.msra.mxu0 0
    %2537 = vmatpush.bf16.msra.mxu0 0
    %2538 = vmatpush.bf16.msra.mxu0 %v2520
    %2539 = vmatpush.bf16.msra.mxu0 %v2519
    %2540 = vmatmul.bf16.gmra.mxu0 %v2524
    %v2541 = vpop.f32.mrf.mxu0
    %v2542 = vadd.f32 %v2509, %v2541
    %v2543 = vpop.f32.mrf.mxu0
    %v2544 = vadd.f32 %v2509, %v2543
    %2545 = vmatmul.bf16.gmra.mxu0 %v2527
    %v2546 = vpop.f32.mrf.mxu0
    %v2547 = vadd.f32 %v2509, %v2546
    %v2548 = vpop.f32.mrf.mxu0
    %v2549 = vadd.f32 %v2509, %v2548
    %2550 = vmatmul.bf16.gmra.mxu0 %v2530
    %v2551 = vpop.f32.mrf.mxu0
    %v2552 = vadd.f32 %v2509, %v2551
    %v2553 = vpop.f32.mrf.mxu0
    %2554 = vdwg.mxu0
    %v2555 = vadd.f32 %v1669, %v2542
    %v2556 = vadd.f32 %v1670, %v2544
    %v2557 = vadd.f32 %v1671, %v2547
    %v2558 = vadd.f32 %v1672, %v2549
    %v2559 = vadd.f32 %v1673, %v2552
    %s2560 = scalar_lea.vmem %s13, 1
    %v2561 = vld [vmem:[%s2560] sm:$0x1]
    %s2562 = scalar_lea.vmem %s14, 1
    %v2563 = vld [vmem:[%s2562] sm:$0x1]
    %v2564 = vsel %vm127, %v2555, 0.0
    %2565 = vadd.xlane.f32.xlu0 %v2564
    %v2566 = vpop.xlane.xlu0 %2565
    %v2567 = vsel %vm127, %v2556, 0.0
    %2568 = vadd.xlane.f32.xlu0 %v2567
    %v2569 = vpop.xlane.xlu0 %2568
    %v2570 = vsel %vm127, %v2557, 0.0
    %2571 = vadd.xlane.f32.xlu0 %v2570
    %v2572 = vpop.xlane.xlu0 %2571
    %v2573 = vsel %vm127, %v2558, 0.0
    %2574 = vadd.xlane.f32.xlu0 %v2573
    %v2575 = vpop.xlane.xlu0 %2574
    %v2576 = vsel %vm127, %v2559, 0.0
    %2577 = vadd.xlane.f32.xlu0 %v2576
    %v2578 = vpop.xlane.xlu0 %2577
    %v2579 = vmul.f32 %v2555, %v2555
    %v2580 = vmul.f32 %v2556, %v2556
    %v2581 = vmul.f32 %v2557, %v2557
    %v2582 = vmul.f32 %v2558, %v2558
    %v2583 = vmul.f32 %v2559, %v2559
    %v2584 = vsel %vm127, %v2579, 0.0
    %2585 = vadd.xlane.f32.xlu0 %v2584
    %v2586 = vpop.xlane.xlu0 %2585
    %v2587 = vsel %vm127, %v2580, 0.0
    %2588 = vadd.xlane.f32.xlu0 %v2587
    %v2589 = vpop.xlane.xlu0 %2588
    %v2590 = vsel %vm127, %v2581, 0.0
    %2591 = vadd.xlane.f32.xlu0 %v2590
    %v2592 = vpop.xlane.xlu0 %2591
    %v2593 = vsel %vm127, %v2582, 0.0
    %2594 = vadd.xlane.f32.xlu0 %v2593
    %v2595 = vpop.xlane.xlu0 %2594
    %v2596 = vsel %vm127, %v2583, 0.0
    %2597 = vadd.xlane.f32.xlu0 %v2596
    %v2598 = vpop.xlane.xlu0 %2597
    %v2599 = vmul.f32 %v2566, 0.03125
    %v2600 = vmul.f32 %v2569, 0.03125
    %v2601 = vmul.f32 %v2572, 0.03125
    %v2602 = vmul.f32 %v2575, 0.03125
    %v2603 = vmul.f32 %v2578, 0.03125
    %v2604 = vmul.f32 %v2586, 0.03125
    %v2605 = vmul.f32 %v2589, 0.03125
    %v2606 = vmul.f32 %v2592, 0.03125
    %v2607 = vmul.f32 %v2595, 0.03125
    %v2608 = vmul.f32 %v2598, 0.03125
    %v2609 = vmul.f32 %v2599, %v2599
    %v2610 = vmul.f32 %v2600, %v2600
    %v2611 = vmul.f32 %v2601, %v2601
    %v2612 = vmul.f32 %v2602, %v2602
    %v2613 = vmul.f32 %v2603, %v2603
    %v2614 = vsub.f32 %v2604, %v2609
    %v2615 = vsub.f32 %v2605, %v2610
    %v2616 = vsub.f32 %v2606, %v2611
    %v2617 = vsub.f32 %v2607, %v2612
    %v2618 = vsub.f32 %v2608, %v2613
    %v2619 = vmax.f32 %v2614, 0.0
    %v2620 = vmax.f32 %v2615, 0.0
    %v2621 = vmax.f32 %v2616, 0.0
    %v2622 = vmax.f32 %v2617, 0.0
    %v2623 = vmax.f32 %v2618, 0.0
    %v2624 = vsub.f32 %v2555, %v2599
    %v2625 = vsub.f32 %v2556, %v2600
    %v2626 = vsub.f32 %v2557, %v2601
    %v2627 = vsub.f32 %v2558, %v2602
    %v2628 = vsub.f32 %v2559, %v2603
    %v2629 = vadd.f32 %v2619, 1e-05
    %v2630 = vadd.f32 %v2620, 1e-05
    %v2631 = vadd.f32 %v2621, 1e-05
    %v2632 = vadd.f32 %v2622, 1e-05
    %v2633 = vadd.f32 %v2623, 1e-05
    %v2634 = vrsqrt.pop %v2629
    %v2635 = vmul.f32 %v2634, %v2629
    %v2636 = vmul.f32 %v2635, %v2634
    %v2637 = vmul.f32 0.5, %v2636
    %v2638 = vsub.f32 1.5, %v2637
    %v2639 = vmul.f32 %v2634, %v2638
    %vm2640 = vweird.f32 %v2629
    %vm2641 = vweird.f32 %v2634
    %vm2642 = vmor %vm2640, %vm2641
    %v2643 = vsel %vm2642, %v2634, %v2639
    %v2644 = vrsqrt.pop %v2630
    %v2645 = vmul.f32 %v2644, %v2630
    %v2646 = vmul.f32 %v2645, %v2644
    %v2647 = vmul.f32 0.5, %v2646
    %v2648 = vsub.f32 1.5, %v2647
    %v2649 = vmul.f32 %v2644, %v2648
    %vm2650 = vweird.f32 %v2630
    %vm2651 = vweird.f32 %v2644
    %vm2652 = vmor %vm2650, %vm2651
    %v2653 = vsel %vm2652, %v2644, %v2649
    %v2654 = vrsqrt.pop %v2631
    %v2655 = vmul.f32 %v2654, %v2631
    %v2656 = vmul.f32 %v2655, %v2654
    %v2657 = vmul.f32 0.5, %v2656
    %v2658 = vsub.f32 1.5, %v2657
    %v2659 = vmul.f32 %v2654, %v2658
    %vm2660 = vweird.f32 %v2631
    %vm2661 = vweird.f32 %v2654
    %vm2662 = vmor %vm2660, %vm2661
    %v2663 = vsel %vm2662, %v2654, %v2659
    %v2664 = vrsqrt.pop %v2632
    %v2665 = vmul.f32 %v2664, %v2632
    %v2666 = vmul.f32 %v2665, %v2664
    %v2667 = vmul.f32 0.5, %v2666
    %v2668 = vsub.f32 1.5, %v2667
    %v2669 = vmul.f32 %v2664, %v2668
    %vm2670 = vweird.f32 %v2632
    %vm2671 = vweird.f32 %v2664
    %vm2672 = vmor %vm2670, %vm2671
    %v2673 = vsel %vm2672, %v2664, %v2669
    %v2674 = vrsqrt.pop %v2633
    %v2675 = vmul.f32 %v2674, %v2633
    %v2676 = vmul.f32 %v2675, %v2674
    %v2677 = vmul.f32 0.5, %v2676
    %v2678 = vsub.f32 1.5, %v2677
    %v2679 = vmul.f32 %v2674, %v2678
    %vm2680 = vweird.f32 %v2633
    %vm2681 = vweird.f32 %v2674
    %vm2682 = vmor %vm2680, %vm2681
    %v2683 = vsel %vm2682, %v2674, %v2679
    %v2684 = vmul.f32 %v2624, %v2643
    %v2685 = vmul.f32 %v2625, %v2653
    %v2686 = vmul.f32 %v2626, %v2663
    %v2687 = vmul.f32 %v2627, %v2673
    %v2688 = vmul.f32 %v2628, %v2683
    %v2690 = vperm.slane %v2561, 0
    %v2692 = vmul.f32 %v2684, %v2690
    %v2693 = vmul.f32 %v2685, %v2690
    %v2694 = vmul.f32 %v2686, %v2690
    %v2695 = vmul.f32 %v2687, %v2690
    %v2696 = vmul.f32 %v2688, %v2690
    %v2698 = vperm.slane %v2563, 0
    %v2700 = vadd.f32 %v2692, %v2698
    %v2701 = vadd.f32 %v2693, %v2698
    %v2702 = vadd.f32 %v2694, %v2698
    %v2703 = vadd.f32 %v2695, %v2698
    %v2704 = vadd.f32 %v2696, %v2698
    %v2705 = vpack.c.bf16 %v2701, %v2700
    %v2706 = vpack.c.bf16 %v2703, %v2702
    %v2707 = vpack.c.bf16 %v2704, %v2704
    %s2708 = scalar_lea.vmem %s15, 16
    %v2709 = vld [vmem:[%s2708] sm:$0xf]
    %v2710 = vld [vmem:[%s2708 + $0x4] sm:$0xf]
    %v2711 = vld [vmem:[%s2708 + $0x8] sm:$0xf]
    %v2712 = vld [vmem:[%s2708 + $0xc] sm:$0xf]
    %s2713 = scalar_lea.vmem %s16, 1
    %v2714 = vld [vmem:[%s2713] sm:$0x1]
    %v2716 = vperm.slane %v2714, 0
    %v2722 = vunpack.c.l.b16 %v2709
    %v2723 = vunpack.c.l.b16 %v2710
    %v2724 = vunpack.c.l.b16 %v2711
    %v2725 = vunpack.c.l.b16 %v2712
    %v2726 = vpack.c.b16 %v2723, %v2722
    %v2727 = vpack.c.b16 %v2725, %v2724
    %v2731 = vsel %vm127, %v2705, 0
    %v2734 = vsel %vm127, %v2706, 0
    %v2737 = vsel %vm127, %v2707, 0
    %2739 = vmatpush.bf16.msra.mxu0 0
    %2740 = vmatpush.bf16.msra.mxu0 0
    %2741 = vmatpush.bf16.msra.mxu0 0
    %2742 = vmatpush.bf16.msra.mxu0 0
    %2743 = vmatpush.bf16.msra.mxu0 0
    %2744 = vmatpush.bf16.msra.mxu0 0
    %2745 = vmatpush.bf16.msra.mxu0 %v2727
    %2746 = vmatpush.bf16.msra.mxu0 %v2726
    %2747 = vmatmul.bf16.gmra.mxu0 %v2731
    %v2748 = vpop.f32.mrf.mxu0
    %v2749 = vadd.f32 %v2716, %v2748
    %v2750 = vpop.f32.mrf.mxu0
    %v2751 = vadd.f32 %v2716, %v2750
    %2752 = vmatmul.bf16.gmra.mxu0 %v2734
    %v2753 = vpop.f32.mrf.mxu0
    %v2754 = vadd.f32 %v2716, %v2753
    %v2755 = vpop.f32.mrf.mxu0
    %v2756 = vadd.f32 %v2716, %v2755
    %2757 = vmatmul.bf16.gmra.mxu0 %v2737
    %v2758 = vpop.f32.mrf.mxu0
    %v2759 = vadd.f32 %v2716, %v2758
    %v2760 = vpop.f32.mrf.mxu0
    %2761 = vdwg.mxu0
    %v2762 = vmul.f32 %v2749, 1.702
    %v2763 = vmul.f32 %v2751, 1.702
    %v2764 = vmul.f32 %v2754, 1.702
    %v2765 = vmul.f32 %v2756, 1.702
    %v2766 = vmul.f32 %v2759, 1.702
    %v2767 = vxor.u32 %v2762, 2147483648
    %v2768 = vxor.u32 %v2763, 2147483648
    %v2769 = vxor.u32 %v2764, 2147483648
    %v2770 = vxor.u32 %v2765, 2147483648
    %v2771 = vxor.u32 %v2766, 2147483648
    %v2772 = vmul.f32 %v2767, 1.442695
    %v2773 = vpow.pop %v2772
    %v2774 = vmul.f32 %v2768, 1.442695
    %v2775 = vpow.pop %v2774
    %v2776 = vmul.f32 %v2769, 1.442695
    %v2777 = vpow.pop %v2776
    %v2778 = vmul.f32 %v2770, 1.442695
    %v2779 = vpow.pop %v2778
    %v2780 = vmul.f32 %v2771, 1.442695
    %v2781 = vpow.pop %v2780
    %v2782 = vadd.f32 %v2773, 1.0
    %v2783 = vadd.f32 %v2775, 1.0
    %v2784 = vadd.f32 %v2777, 1.0
    %v2785 = vadd.f32 %v2779, 1.0
    %v2786 = vadd.f32 %v2781, 1.0
    %v2787 = vrcp.pop %v2782
    %v2788 = vmul.f32 %v2782, %v2787
    %v2789 = vsub.f32 1.0, %v2788
    %v2790 = vmul.f32 %v2787, %v2789
    %v2791 = vadd.f32 %v2787, %v2790
    %vm2792 = vweird.f32 %v2782
    %vm2793 = vweird.f32 %v2787
    %vm2794 = vmor %vm2792, %vm2793
    %v2795 = vsel %vm2794, %v2787, %v2791
    %v2796 = vand.u32 2147483647, %v2782
    %vm2797 = vcmp.eq.f32.partialorder %v2796, 8.507059e+37
    %v2798 = vand.u32 %v2782, 2147483648
    %v2799 = vor.u32 1.1754944e-38, %v2798
    %v2800 = vsel %vm2797, %v2799, %v2795
    %v2801 = vmul.f32 1.0, %v2800
    %v2802 = vrcp.pop %v2783
    %v2803 = vmul.f32 %v2783, %v2802
    %v2804 = vsub.f32 1.0, %v2803
    %v2805 = vmul.f32 %v2802, %v2804
    %v2806 = vadd.f32 %v2802, %v2805
    %vm2807 = vweird.f32 %v2783
    %vm2808 = vweird.f32 %v2802
    %vm2809 = vmor %vm2807, %vm2808
    %v2810 = vsel %vm2809, %v2802, %v2806
    %v2811 = vand.u32 2147483647, %v2783
    %vm2812 = vcmp.eq.f32.partialorder %v2811, 8.507059e+37
    %v2813 = vand.u32 %v2783, 2147483648
    %v2814 = vor.u32 1.1754944e-38, %v2813
    %v2815 = vsel %vm2812, %v2814, %v2810
    %v2816 = vmul.f32 1.0, %v2815
    %v2817 = vrcp.pop %v2784
    %v2818 = vmul.f32 %v2784, %v2817
    %v2819 = vsub.f32 1.0, %v2818
    %v2820 = vmul.f32 %v2817, %v2819
    %v2821 = vadd.f32 %v2817, %v2820
    %vm2822 = vweird.f32 %v2784
    %vm2823 = vweird.f32 %v2817
    %vm2824 = vmor %vm2822, %vm2823
    %v2825 = vsel %vm2824, %v2817, %v2821
    %v2826 = vand.u32 2147483647, %v2784
    %vm2827 = vcmp.eq.f32.partialorder %v2826, 8.507059e+37
    %v2828 = vand.u32 %v2784, 2147483648
    %v2829 = vor.u32 1.1754944e-38, %v2828
    %v2830 = vsel %vm2827, %v2829, %v2825
    %v2831 = vmul.f32 1.0, %v2830
    %v2832 = vrcp.pop %v2785
    %v2833 = vmul.f32 %v2785, %v2832
    %v2834 = vsub.f32 1.0, %v2833
    %v2835 = vmul.f32 %v2832, %v2834
    %v2836 = vadd.f32 %v2832, %v2835
    %vm2837 = vweird.f32 %v2785
    %vm2838 = vweird.f32 %v2832
    %vm2839 = vmor %vm2837, %vm2838
    %v2840 = vsel %vm2839, %v2832, %v2836
    %v2841 = vand.u32 2147483647, %v2785
    %vm2842 = vcmp.eq.f32.partialorder %v2841, 8.507059e+37
    %v2843 = vand.u32 %v2785, 2147483648
    %v2844 = vor.u32 1.1754944e-38, %v2843
    %v2845 = vsel %vm2842, %v2844, %v2840
    %v2846 = vmul.f32 1.0, %v2845
    %v2847 = vrcp.pop %v2786
    %v2848 = vmul.f32 %v2786, %v2847
    %v2849 = vsub.f32 1.0, %v2848
    %v2850 = vmul.f32 %v2847, %v2849
    %v2851 = vadd.f32 %v2847, %v2850
    %vm2852 = vweird.f32 %v2786
    %vm2853 = vweird.f32 %v2847
    %vm2854 = vmor %vm2852, %vm2853
    %v2855 = vsel %vm2854, %v2847, %v2851
    %v2856 = vand.u32 2147483647, %v2786
    %vm2857 = vcmp.eq.f32.partialorder %v2856, 8.507059e+37
    %v2858 = vand.u32 %v2786, 2147483648
    %v2859 = vor.u32 1.1754944e-38, %v2858
    %v2860 = vsel %vm2857, %v2859, %v2855
    %v2861 = vmul.f32 1.0, %v2860
    %v2862 = vmul.f32 %v2749, %v2801
    %v2863 = vmul.f32 %v2751, %v2816
    %v2864 = vmul.f32 %v2754, %v2831
    %v2865 = vmul.f32 %v2756, %v2846
    %v2866 = vmul.f32 %v2759, %v2861
    %v2867 = vpack.c.bf16 %v2863, %v2862
    %v2868 = vpack.c.bf16 %v2865, %v2864
    %v2869 = vpack.c.bf16 %v2866, %v2866
    %s2870 = scalar_lea.vmem %s17, 64
    %v2871 = vld [vmem:[%s2870] sm:$0xf]
    %v2872 = vld [vmem:[%s2870 + $0x4] sm:$0xf]
    %v2873 = vld [vmem:[%s2870 + $0x8] sm:$0xf]
    %v2874 = vld [vmem:[%s2870 + $0xc] sm:$0xf]
    %v2875 = vld [vmem:[%s2870 + $0x10] sm:$0xf]
    %v2876 = vld [vmem:[%s2870 + $0x14] sm:$0xf]
    %v2877 = vld [vmem:[%s2870 + $0x18] sm:$0xf]
    %v2878 = vld [vmem:[%s2870 + $0x1c] sm:$0xf]
    %v2879 = vld [vmem:[%s2870 + $0x20] sm:$0xf]
    %v2880 = vld [vmem:[%s2870 + $0x24] sm:$0xf]
    %v2881 = vld [vmem:[%s2870 + $0x28] sm:$0xf]
    %v2882 = vld [vmem:[%s2870 + $0x2c] sm:$0xf]
    %v2883 = vld [vmem:[%s2870 + $0x30] sm:$0xf]
    %v2884 = vld [vmem:[%s2870 + $0x34] sm:$0xf]
    %v2885 = vld [vmem:[%s2870 + $0x38] sm:$0xf]
    %v2886 = vld [vmem:[%s2870 + $0x3c] sm:$0xf]
    %s2887 = scalar_lea.vmem %s18, 1
    %v2888 = vld [vmem:[%s2887] sm:$0x1]
    %v2890 = vperm.slane %v2888, 0
    %v2908 = vunpack.c.l.b16 %v2871
    %v2909 = vunpack.c.l.b16 %v2872
    %v2910 = vunpack.c.l.b16 %v2873
    %v2911 = vunpack.c.l.b16 %v2874
    %v2912 = vunpack.c.l.b16 %v2875
    %v2913 = vunpack.c.l.b16 %v2876
    %v2914 = vunpack.c.l.b16 %v2877
    %v2915 = vunpack.c.l.b16 %v2878
    %v2916 = vunpack.c.l.b16 %v2879
    %v2917 = vunpack.c.l.b16 %v2880
    %v2918 = vunpack.c.l.b16 %v2881
    %v2919 = vunpack.c.l.b16 %v2882
    %v2920 = vunpack.c.l.b16 %v2883
    %v2921 = vunpack.c.l.b16 %v2884
    %v2922 = vunpack.c.l.b16 %v2885
    %v2923 = vunpack.c.l.b16 %v2886
    %v2924 = vpack.c.b16 %v2909, %v2908
    %v2925 = vpack.c.b16 %v2911, %v2910
    %v2926 = vpack.c.b16 %v2913, %v2912
    %v2927 = vpack.c.b16 %v2915, %v2914
    %v2928 = vpack.c.b16 %v2917, %v2916
    %v2929 = vpack.c.b16 %v2919, %v2918
    %v2930 = vpack.c.b16 %v2921, %v2920
    %v2931 = vpack.c.b16 %v2923, %v2922
    %2940 = vmatpush.bf16.msra.mxu0 %v2931
    %2941 = vmatpush.bf16.msra.mxu0 %v2930
    %2942 = vmatpush.bf16.msra.mxu0 %v2929
    %2943 = vmatpush.bf16.msra.mxu0 %v2928
    %2944 = vmatpush.bf16.msra.mxu0 %v2927
    %2945 = vmatpush.bf16.msra.mxu0 %v2926
    %2946 = vmatpush.bf16.msra.mxu0 %v2925
    %2947 = vmatpush.bf16.msra.mxu0 %v2924
    %2948 = vmatmul.bf16.gmra.mxu0 %v2867
    %v2949 = vpop.f32.mrf.mxu0
    %v2950 = vpop.f32.mrf.mxu0
    %2951 = vmatmul.bf16.gmra.mxu0 %v2868
    %v2952 = vpop.f32.mrf.mxu0
    %v2953 = vpop.f32.mrf.mxu0
    %2954 = vmatmul.bf16.gmra.mxu0 %v2869
    %v2955 = vpop.f32.mrf.mxu0
    %v2956 = vadd.f32 %v2890, %v2955
    %v2957 = vpop.f32.mrf.mxu0
    %2958 = vdwg.mxu0
    %v2959 = vadd.f32 %v2559, %v2956
    %v2960 = vld [vmem:[%s19] sm:$0x1]
    %v2961 = vld [vmem:[%s20] sm:$0x1]
    %v2962 = vsel %vm147, %v2959, 0.0
    %2963 = vadd.xlane.f32.xlu0 %v2962
    %v2964 = vpop.xlane.xlu0 %2963
    %v2965 = vmul.f32 %v2959, %v2959
    %v2966 = vsel %vm147, %v2965, 0.0
    %2967 = vadd.xlane.f32.xlu0 %v2966
    %v2968 = vpop.xlane.xlu0 %2967
    %v2969 = vmul.f32 %v2964, 0.03125
    %v2970 = vmul.f32 %v2968, 0.03125
    %v2971 = vmul.f32 %v2969, %v2969
    %v2972 = vsub.f32 %v2970, %v2971
    %v2973 = vmax.f32 %v2972, 0.0
    %v2974 = vsub.f32 %v2959, %v2969
    %v2975 = vadd.f32 %v2973, 1e-05
    %v2976 = vrsqrt.pop %v2975
    %v2977 = vmul.f32 %v2976, %v2975
    %v2978 = vmul.f32 %v2977, %v2976
    %v2979 = vmul.f32 0.5, %v2978
    %v2980 = vsub.f32 1.5, %v2979
    %v2981 = vmul.f32 %v2976, %v2980
    %vm2982 = vweird.f32 %v2975
    %vm2983 = vweird.f32 %v2976
    %vm2984 = vmor %vm2982, %vm2983
    %v2985 = vsel %vm2984, %v2976, %v2981
    %v2986 = vmul.f32 %v2974, %v2985
    %v2988 = vperm.slane %v2960, 0
    %v2990 = vmul.f32 %v2986, %v2988
    %v2992 = vperm.slane %v2961, 0
    %v2994 = vadd.f32 %v2990, %v2992
    %v2995 = vld [vmem:[%s21] sm:$0xff]
    %v2996 = vld [vmem:[%s21 + $0x8] sm:$0xff]
    %v2997 = vld [vmem:[%s21 + $0x10] sm:$0xff]
    %v2998 = vld [vmem:[%s21 + $0x18] sm:$0xff]
    %v3000 = vsel %vm127, %v2994, 0
    %3002 = vmatpush.msra.mxu0 0.0
    %3003 = vmatpush.msra.mxu0 0.0
    %3004 = vmatpush.msra.mxu0 0.0
    %3005 = vmatpush.msra.mxu0 0.0
    %3006 = vmatpush.msra.mxu0 0.0
    %3007 = vmatpush.msra.mxu0 0.0
    %3008 = vmatpush.msra.mxu0 0.0
    %3009 = vmatpush.msra.mxu0 0.0
    %3010 = vmatpush.msra.mxu0 0.0
    %3011 = vmatpush.msra.mxu0 0.0
    %3012 = vmatpush.msra.mxu0 0.0
    %3013 = vmatpush.msra.mxu0 0.0
    %3014 = vmatpush.msra.mxu0 %v2998
    %3015 = vmatpush.msra.mxu0 %v2997
    %3016 = vmatpush.msra.mxu0 %v2996
    %3017 = vmatpush.msra.mxu0 %v2995
    %3018 = vmatmul.f32.gmra.mxu0 %v3000
    %v3019 = vpop.f32.mrf.mxu0
    %v3020 = vadd.f32 0.0, %v3019
    %3021 = vdwg.mxu0
    %vm3022 = vcmask 123904
    %3023 = vst.msk [vmem:[#allocation3] sm:$0x3] %vm3022, %v3020
    // Predicated region
    $region90: #{partial_vit_forward.1} parent=1 // pred_check
      _
    $region91: #{partial_vit_forward.1} parent=1 // pred_check_branch
      %3025 = sbr.rel (0) target = $region93
    $region92: #{partial_vit_forward.1} parent=1 // pred_region
      %3027 = vsyncadd [#allocation4], 0
      %s3029 = sshll.u32 [#allocation3], 4
      %s3030 = int_to_ptr.vmem [resolvable:$true] %s3029
      %s3031 = sshll.u32 %s22, 4
      %s3032 = int_to_ptr.hbm [resolvable:$true] %s3031
      %3034 = dma.vmem_to_hbm [thread:$0]  %s3030, 32, %s3032, [#allocation4]
    $region93: #{partial_vit_forward.1} parent=1 // pred_fallthru
      _
    // Predicated region
    $region94: #{partial_vit_forward.1} parent=1 // pred_check
      _
    $region95: #{partial_vit_forward.1} parent=1 // pred_check_branch
      %3036 = sbr.rel (0) target = $region97
    $region96: #{partial_vit_forward.1} parent=1 // pred_region
      %3038 = dma.done [#allocation4], 32
    $region97: #{partial_vit_forward.1} parent=1 // pred_fallthru
      _
    %3039 = vsyncpa [#allocation4], 1

</llo_original>
